<compile_context>
chip_gen: v7x
topology: tpu7x:2x2x1
jax: 0.10.0
libtpu: 0.0.40
codegen_flags: <defaults>
</compile_context>

<pallas_src>
import functools

import jax
import jax.numpy as jnp
from jax import lax
from jax.experimental import pallas as pl
from jax.experimental.pallas import tpu as pltpu


_NEG_INF = -1e30  # finite "minus infinity" for padded vocab logits


def _round_up(x, m):
    return (x + m - 1) // m * m


def _rnn_decoder_kernel(emb_ref, w_d2e_ref, b_d2e_ref,
                        w_i_ref, w_h_ref, b_gx_ref, b_hn_ref,
                        w_e2d_ref, b_e2d_ref,
                        out_ref,
                        state_ref, tok_ref, inv_ref,
                        *, tb, ep, unroll):
    t_blk = pl.program_id(1)          # time-block axis (innermost, sequential)

    # ---- init recurrent carry at the first time block of each batch block --
    @pl.when(t_blk == 0)
    def _():
        state_ref[...] = emb_ref[...]
        tok_ref[...] = jnp.zeros_like(tok_ref)   # unnormalized softmax numerator
        inv_ref[...] = jnp.ones_like(inv_ref)    # 1 / softmax denominator

    mm = w_i_ref.dtype                # matmul dtype (bf16 by default)

    # Hoist the (loop-invariant) bias reads out of the unrolled time loop.
    b_d2e = b_d2e_ref[...]
    b_gx = b_gx_ref[...]
    b_hn = b_hn_ref[...]
    b_e2d = b_e2d_ref[...]

    def step(s, carry):
        state, e_prev, inv_prev = carry   # [NB,Ep] f32, [NB,Vp] mm, [NB,1] f32

        # ---- emb = d2e(softmax(prev logits)), with deferred normalization --
        x = (jnp.dot(e_prev, w_d2e_ref[...],
                     preferred_element_type=jnp.float32) * inv_prev + b_d2e)

        # ---- GRUCell: two fused gate matmuls, gate order (r, z, n) ---------
        gx = jnp.dot(x.astype(mm), w_i_ref[...],
                     preferred_element_type=jnp.float32) + b_gx        # [NB, 3Ep]
        gh = jnp.dot(state.astype(mm), w_h_ref[...],
                     preferred_element_type=jnp.float32)               # [NB, 3Ep]
        r = jax.nn.sigmoid(gx[:, :ep] + gh[:, :ep])
        z = jax.nn.sigmoid(gx[:, ep:2 * ep] + gh[:, ep:2 * ep])
        n = jnp.tanh(gx[:, 2 * ep:] + r * (gh[:, 2 * ep:] + b_hn))
        h_new = (1.0 - z) * n + z * state

        # ---- logits = e2d(state); unnormalized softmax statistics ----------
        logits = jnp.dot(h_new.astype(mm), w_e2d_ref[...],
                         preferred_element_type=jnp.float32) + b_e2d
        out_ref[s] = logits.astype(out_ref.dtype)

        mx = jnp.max(logits, axis=-1, keepdims=True)
        e = jnp.exp(logits - mx)
        inv = pl.reciprocal(jnp.sum(e, axis=-1, keepdims=True), approx=True)
        return h_new, e.astype(tok_ref.dtype), inv

    state, e_last, inv_last = lax.fori_loop(
        0, tb, step, (state_ref[...], tok_ref[...], inv_ref[...]),
        unroll=unroll)
    state_ref[...] = state
    tok_ref[...] = e_last
    inv_ref[...] = inv_last


@functools.partial(jax.jit, static_argnames=("out_seq_len", "time_block",
                                             "matmul_dtype", "out_dtype"))
def rnn_decoder(embedding, params, out_seq_len, *,
                time_block=8,
                matmul_dtype=jnp.bfloat16,
                out_dtype=jnp.bfloat16):
    N, E = embedding.shape
    V = params["w_e2d"].shape[1]
    T = out_seq_len

    # lane/sublane-dense padded sizes
    Np = _round_up(N, 8)
    Ep = _round_up(E, 128)
    Vp = _round_up(V, 128)

    f32 = jnp.float32
    w_bytes = jnp.dtype(matmul_dtype).itemsize
    out_bytes = jnp.dtype(out_dtype).itemsize

    # --- batch blocking: split only when Np exceeds the MXU row count -------
    # (below 256 rows the step is weight-streaming bound; splitting just
    #  duplicates weight residency per core and adds grid overhead)
    MXU_ROWS = 256
    if Np > MXU_ROWS and Np % MXU_ROWS == 0:
        NB = MXU_ROWS
    else:
        NB = Np

    # --- time blocking: amortize grid overhead without blowing VMEM ---------
    out_blk_budget = 8 * 1024 * 1024          # double-buffered output block cap
    tb_cap = max(1, out_blk_budget // (2 * NB * Vp * out_bytes))
    TB = max(1, min(time_block, T, tb_cap))
    while T % TB:
        TB -= 1
    unroll = True if Vp <= 2048 else 2        # full unroll only for small vocab

    def pad2(a, rows, cols):
        r, c = a.shape
        return jnp.pad(a.astype(f32), ((0, rows - r), (0, cols - c)))

    emb_p = pad2(embedding, Np, Ep)

    # d2e : stored pre-transposed [Vp, Ep]; padded rows/cols are zero.
    w_d2e = pad2(params["w_d2e"], Vp, Ep)
    b_d2e = pad2(params["b_d2e"], 1, Ep)

    # GRU: fuse (r, z, n) gates along the output dim -> [Ep, 3*Ep].
    w_i = jnp.concatenate([pad2(params["w_i"][g], Ep, Ep) for g in range(3)], axis=1)
    w_h = jnp.concatenate([pad2(params["w_h"][g], Ep, Ep) for g in range(3)], axis=1)
    # Pre-fold b_i + b_h for the r and z gates; keep b_h_n separate (it is
    # multiplied by r inside the cell).
    b_gx = jnp.concatenate(
        [pad2(params["b_i"][0] + params["b_h"][0], 1, Ep),
         pad2(params["b_i"][1] + params["b_h"][1], 1, Ep),
         pad2(params["b_i"][2], 1, Ep)], axis=1)                      # [1, 3Ep]
    b_hn = pad2(params["b_h"][2], 1, Ep)                              # [1, Ep]

    # e2d : [Ep, Vp]; padded vocab columns get -inf bias so softmax ignores them.
    w_e2d = pad2(params["w_e2d"], Ep, Vp)
    b_e2d = jnp.pad(params["b_e2d"].astype(f32), ((0, 0), (0, Vp - V)),
                    constant_values=_NEG_INF)

    if matmul_dtype != jnp.float32:
        w_d2e, w_i, w_h, w_e2d = (w.astype(matmul_dtype)
                                  for w in (w_d2e, w_i, w_h, w_e2d))

    # --- VMEM budget: actual resident bytes, capped by physical capacity ----
    resident = (
        (w_d2e.size + w_i.size + w_h.size + w_e2d.size) * w_bytes
        + (b_d2e.size + b_gx.size + b_hn.size + b_e2d.size) * 4
        + 2 * NB * Ep * 4                 # double-buffered embedding block
        + 2 * TB * NB * Vp * out_bytes    # double-buffered output block
        + NB * Ep * 4                     # recurrent-state scratch
        + NB * Vp * w_bytes               # unnormalized-exp scratch
        + NB * 128 * 4                    # inv-sum scratch (lane-padded)
    )
    needed = int(resident * 1.25) + (4 << 20)
    try:
        phys = int(pltpu.get_tpu_info().vmem_capacity_bytes)
    except Exception:
        phys = 128 * 1024 * 1024
    cap = int(phys * 0.85)                # ~108 MiB on 128 MiB parts, ~54 MiB on v7x
    vmem_limit = int(min(cap, max(32 << 20, needed)))

    # Whole-array, single-buffered VMEM residency for constant operands.
    vmem_spec = pl.BlockSpec(memory_space=pltpu.MemorySpace.VMEM)

    kernel = functools.partial(_rnn_decoder_kernel, tb=TB, ep=Ep, unroll=unroll)

    out = pl.pallas_call(
        kernel,
        out_shape=jax.ShapeDtypeStruct((T, Np, Vp), out_dtype),
        grid=(Np // NB, T // TB),
        in_specs=[
            pl.BlockSpec((NB, Ep), lambda b, t: (b, 0)),   # embedding (batch-blocked)
            vmem_spec,   # w_d2e  [Vp, Ep]
            vmem_spec,   # b_d2e  [1, Ep]
            vmem_spec,   # w_i    [Ep, 3Ep]
            vmem_spec,   # w_h    [Ep, 3Ep]
            vmem_spec,   # b_gx   [1, 3Ep]
            vmem_spec,   # b_hn   [1, Ep]
            vmem_spec,   # w_e2d  [Ep, Vp]
            vmem_spec,   # b_e2d  [1, Vp]
        ],
        out_specs=pl.BlockSpec((TB, NB, Vp), lambda b, t: (t, b, 0)),
        scratch_shapes=[
            pltpu.VMEM((NB, Ep), jnp.float32),     # recurrent hidden state
            pltpu.VMEM((NB, Vp), matmul_dtype),    # unnormalized exp(logits - max)
            pltpu.VMEM((NB, 1), jnp.float32),      # 1 / sum(exp)
        ],
        # NOTE: the recurrence is only correct because the time axis is the
        # innermost, sequential ("arbitrary") grid axis and the carry is
        # re-initialized at t_blk == 0 for every batch block.
        compiler_params=pltpu.CompilerParams(
            dimension_semantics=("parallel", "arbitrary"),
            vmem_limit_bytes=vmem_limit),
    )(emb_p, w_d2e, b_d2e, w_i, w_h, b_gx, b_hn, w_e2d, b_e2d)

    return out[:, :N, :V]


# ---------------------------- pure-JAX reference -----------------------------
def rnn_decoder_ref(embedding, params, out_seq_len):
    N, E = embedding.shape
    V = params["w_e2d"].shape[1]
    state = embedding
    last = jnp.zeros((N, V), jnp.float32)
    outs = []
    for _ in range(out_seq_len):
        x = last @ params["w_d2e"] + params["b_d2e"][0]
        r = jax.nn.sigmoid(x @ params["w_i"][0] + params["b_i"][0, 0]
                           + state @ params["w_h"][0] + params["b_h"][0, 0])
        z = jax.nn.sigmoid(x @ params["w_i"][1] + params["b_i"][1, 0]
                           + state @ params["w_h"][1] + params["b_h"][1, 0])
        n = jnp.tanh(x @ params["w_i"][2] + params["b_i"][2, 0]
                     + r * (state @ params["w_h"][2] + params["b_h"][2, 0]))
        state = (1.0 - z) * n + z * state
        logits = state @ params["w_e2d"] + params["b_e2d"][0]
        outs.append(logits)
        last = jax.nn.softmax(logits, axis=-1)
    return jnp.stack(outs)


def make_params(key, embedding_size, vocab_size):
    """Deterministic synthetic parameters matching RNNDecoder.__init__ shapes."""
    E, V = embedding_size, vocab_size
    ks = jax.random.split(key, 9)
    u = lambda k, shape, scale: jax.random.uniform(
        k, shape, jnp.float32, -scale, scale)
    return {
        # nn.Linear(V, E): weight [E, V] -> stored transposed [V, E]
        "w_d2e": u(ks[0], (V, E), 1.0 / jnp.sqrt(V)),
        "b_d2e": u(ks[1], (1, E), 1.0 / jnp.sqrt(V)),
        # nn.GRUCell(E, E): weight_ih / weight_hh [3E, E] -> [3, E, E] transposed
        "w_i": u(ks[2], (3, E, E), 1.0 / jnp.sqrt(E)),
        "w_h": u(ks[3], (3, E, E), 1.0 / jnp.sqrt(E)),
        "b_i": u(ks[4], (3, 1, E), 1.0 / jnp.sqrt(E)),
        "b_h": u(ks[5], (3, 1, E), 1.0 / jnp.sqrt(E)),
        # nn.Linear(E, V): weight [V, E] -> stored transposed [E, V]
        "w_e2d": u(ks[6], (E, V), 1.0 / jnp.sqrt(E)),
        "b_e2d": u(ks[7], (1, V), 1.0 / jnp.sqrt(E)),
    }


if __name__ == "__main__":
    # small shapes: batch=2, embedding_size=32, vocab_size=16, out_seq_len=8
    N, E, V, T = 2, 32, 16, 8

    key = jax.random.PRNGKey(0)
    k_emb, k_par = jax.random.split(key)
    embedding = jax.random.normal(k_emb, (N, E), jnp.float32)
    params = make_params(k_par, E, V)

    ref = rnn_decoder_ref(embedding, params, T)
    scale = float(jnp.max(jnp.abs(ref)))

    # Default fast path: bf16 weights + bf16 logits, f32 accumulation/state.
    out = jax.block_until_ready(rnn_decoder(embedding, params, T))
    assert out.shape == (T, N, V), out.shape
    err = float(jnp.max(jnp.abs(out.astype(jnp.float32) - ref)))
    assert err < 0.1 * (1.0 + scale), (err, scale)

    # f32 validation path (tight tolerance).
    out_f32 = jax.block_until_ready(
        rnn_decoder(embedding, params, T,
                    matmul_dtype=jnp.float32, out_dtype=jnp.float32))
    err_f32 = float(jnp.max(jnp.abs(out_f32 - ref)))
    assert err_f32 < 1e-2 * (1.0 + scale), (err_f32, scale)

    print("KERNEL_OK")
</pallas_src>

<mosaic_0001>
module attributes {stable_mosaic.version = 11 : i64} {
  func.func @_rnn_decoder_kernel(%arg0: i32, %arg1: i32, %arg2: memref<8x128xf32, #tpu.memory_space<vmem>>, %arg3: memref<128x128xbf16, #tpu.memory_space<vmem>>, %arg4: memref<1x128xf32, #tpu.memory_space<vmem>>, %arg5: memref<128x384xbf16, #tpu.memory_space<vmem>>, %arg6: memref<128x384xbf16, #tpu.memory_space<vmem>>, %arg7: memref<1x384xf32, #tpu.memory_space<vmem>>, %arg8: memref<1x128xf32, #tpu.memory_space<vmem>>, %arg9: memref<128x128xbf16, #tpu.memory_space<vmem>>, %arg10: memref<1x128xf32, #tpu.memory_space<vmem>>, %arg11: memref<8x8x128xbf16, #tpu.memory_space<vmem>>, %arg12: memref<8x128xf32, #tpu.memory_space<vmem>>, %arg13: memref<8x128xbf16, #tpu.memory_space<vmem>>, %arg14: memref<8x1xf32, #tpu.memory_space<vmem>>) attributes {dimension_semantics = [#tpu.dimension_semantics<parallel>, #tpu.dimension_semantics<arbitrary>], iteration_bounds = array<i64: 1, 1>, scalar_prefetch = 0 : i64, scratch_operands = 3 : i64, tpu.core_type = #tpu.core_type<tc>, window_params = [{transform_indices = @transform_0, window_bounds = array<i64: 8, 128>}, {pipeline_mode = #tpu.pipeline_mode<synchronous>, transform_indices = @transform_1, window_bounds = array<i64: 128, 128>}, {pipeline_mode = #tpu.pipeline_mode<synchronous>, transform_indices = @transform_2, window_bounds = array<i64: 1, 128>}, {pipeline_mode = #tpu.pipeline_mode<synchronous>, transform_indices = @transform_3, window_bounds = array<i64: 128, 384>}, {pipeline_mode = #tpu.pipeline_mode<synchronous>, transform_indices = @transform_4, window_bounds = array<i64: 128, 384>}, {pipeline_mode = #tpu.pipeline_mode<synchronous>, transform_indices = @transform_5, window_bounds = array<i64: 1, 384>}, {pipeline_mode = #tpu.pipeline_mode<synchronous>, transform_indices = @transform_6, window_bounds = array<i64: 1, 128>}, {pipeline_mode = #tpu.pipeline_mode<synchronous>, transform_indices = @transform_7, window_bounds = array<i64: 128, 128>}, {pipeline_mode = #tpu.pipeline_mode<synchronous>, transform_indices = @transform_8, window_bounds = array<i64: 1, 128>}, {transform_indices = @transform_9, window_bounds = array<i64: 8, 8, 128>}]} {
    %c0_i32 = arith.constant 0 : i32
    %0 = arith.cmpi eq, %arg1, %c0_i32 : i32
    %1 = arith.extui %0 : i1 to i32
    %c0_i32_0 = arith.constant 0 : i32
    %2 = arith.cmpi ne, %1, %c0_i32_0 : i32
    scf.if %2 {
      %c0_172 = arith.constant 0 : index
      %c0_173 = arith.constant 0 : index
      %501 = vector.load %arg2[%c0_172, %c0_173] : memref<8x128xf32, #tpu.memory_space<vmem>>, vector<8x128xf32>
      %c0_174 = arith.constant 0 : index
      %c0_175 = arith.constant 0 : index
      %502 = vector.load %arg12[%c0_174, %c0_175] : memref<8x128xf32, #tpu.memory_space<vmem>>, vector<8x128xf32>
      tpu.vector_store %arg12[%c0_174, %c0_175], %501 {strides = array<i32>} : memref<8x128xf32, #tpu.memory_space<vmem>>, vector<8x128xf32>,
      %cst_176 = arith.constant 0.000000e+00 : bf16
      %503 = vector.broadcast %cst_176 : bf16 to vector<8x128xbf16>
      %c0_177 = arith.constant 0 : index
      %c0_178 = arith.constant 0 : index
      %504 = vector.load %arg13[%c0_177, %c0_178] : memref<8x128xbf16, #tpu.memory_space<vmem>>, vector<8x128xbf16>
      tpu.vector_store %arg13[%c0_177, %c0_178], %503 {strides = array<i32>} : memref<8x128xbf16, #tpu.memory_space<vmem>>, vector<8x128xbf16>,
      %cst_179 = arith.constant 1.000000e+00 : f32
      %505 = vector.broadcast %cst_179 : f32 to vector<8x1xf32>
      %c0_180 = arith.constant 0 : index
      %c0_181 = arith.constant 0 : index
      %506 = vector.load %arg14[%c0_180, %c0_181] : memref<8x1xf32, #tpu.memory_space<vmem>>, vector<8x1xf32>
      tpu.vector_store %arg14[%c0_180, %c0_181], %505 {strides = array<i32>} : memref<8x1xf32, #tpu.memory_space<vmem>>, vector<8x1xf32>,
    } else {
    }
    %c0 = arith.constant 0 : index
    %c0_1 = arith.constant 0 : index
    %3 = vector.load %arg4[%c0, %c0_1] : memref<1x128xf32, #tpu.memory_space<vmem>>, vector<1x128xf32>
    %c0_2 = arith.constant 0 : index
    %c0_3 = arith.constant 0 : index
    %4 = vector.load %arg7[%c0_2, %c0_3] : memref<1x384xf32, #tpu.memory_space<vmem>>, vector<1x384xf32>
    %c0_4 = arith.constant 0 : index
    %c0_5 = arith.constant 0 : index
    %5 = vector.load %arg8[%c0_4, %c0_5] : memref<1x128xf32, #tpu.memory_space<vmem>>, vector<1x128xf32>
    %c0_6 = arith.constant 0 : index
    %c0_7 = arith.constant 0 : index
    %6 = vector.load %arg10[%c0_6, %c0_7] : memref<1x128xf32, #tpu.memory_space<vmem>>, vector<1x128xf32>
    %c0_8 = arith.constant 0 : index
    %c0_9 = arith.constant 0 : index
    %7 = vector.load %arg12[%c0_8, %c0_9] : memref<8x128xf32, #tpu.memory_space<vmem>>, vector<8x128xf32>
    %c0_10 = arith.constant 0 : index
    %c0_11 = arith.constant 0 : index
    %8 = vector.load %arg13[%c0_10, %c0_11] : memref<8x128xbf16, #tpu.memory_space<vmem>>, vector<8x128xbf16>
    %c0_12 = arith.constant 0 : index
    %c0_13 = arith.constant 0 : index
    %9 = vector.load %arg14[%c0_12, %c0_13] : memref<8x1xf32, #tpu.memory_space<vmem>>, vector<8x1xf32>
    %c0_i32_14 = arith.constant 0 : i32
    %c0_15 = arith.constant 0 : index
    %c0_16 = arith.constant 0 : index
    %10 = vector.load %arg3[%c0_15, %c0_16] : memref<128x128xbf16, #tpu.memory_space<vmem>>, vector<128x128xbf16>
    %cst = arith.constant dense<0.000000e+00> : vector<8x128xf32>
    %11 = tpu.matmul %8, %10, %cst {dimension_numbers = #tpu.dot_dimension_numbers<[1], [0], [0], [1], [0, 0, 1, 1], [], []>} : vector<8x128xbf16>, vector<128x128xbf16>, vector<8x128xf32> -> vector<8x128xf32>
    %12 = vector.broadcast %9 : vector<8x1xf32> to vector<8x128xf32>
    %13 = arith.mulf %11, %12 : vector<8x128xf32>
    %14 = vector.broadcast %3 : vector<1x128xf32> to vector<8x128xf32>
    %15 = arith.addf %13, %14 : vector<8x128xf32>
    %16 = arith.truncf %15 : vector<8x128xf32> to vector<8x128xbf16>
    %c0_17 = arith.constant 0 : index
    %c0_18 = arith.constant 0 : index
    %17 = vector.load %arg5[%c0_17, %c0_18] : memref<128x384xbf16, #tpu.memory_space<vmem>>, vector<128x384xbf16>
    %cst_19 = arith.constant dense<0.000000e+00> : vector<8x384xf32>
    %18 = tpu.matmul %16, %17, %cst_19 {dimension_numbers = #tpu.dot_dimension_numbers<[1], [0], [0], [1], [0, 0, 1, 1], [], []>} : vector<8x128xbf16>, vector<128x384xbf16>, vector<8x384xf32> -> vector<8x384xf32>
    %19 = vector.broadcast %4 : vector<1x384xf32> to vector<8x384xf32>
    %20 = arith.addf %18, %19 : vector<8x384xf32>
    %21 = arith.truncf %7 : vector<8x128xf32> to vector<8x128xbf16>
    %c0_20 = arith.constant 0 : index
    %c0_21 = arith.constant 0 : index
    %22 = vector.load %arg6[%c0_20, %c0_21] : memref<128x384xbf16, #tpu.memory_space<vmem>>, vector<128x384xbf16>
    %cst_22 = arith.constant dense<0.000000e+00> : vector<8x384xf32>
    %23 = tpu.matmul %21, %22, %cst_22 {dimension_numbers = #tpu.dot_dimension_numbers<[1], [0], [0], [1], [0, 0, 1, 1], [], []>} : vector<8x128xbf16>, vector<128x384xbf16>, vector<8x384xf32> -> vector<8x384xf32>
    %24 = vector.extract_strided_slice %20 {offsets = [0, 0], sizes = [8, 128], strides = [1, 1]} : vector<8x384xf32> to vector<8x128xf32>
    %25 = vector.extract_strided_slice %23 {offsets = [0, 0], sizes = [8, 128], strides = [1, 1]} : vector<8x384xf32> to vector<8x128xf32>
    %26 = arith.addf %24, %25 : vector<8x128xf32>
    %27 = arith.negf %26 : vector<8x128xf32>
    %28 = math.exp %27 : vector<8x128xf32>
    %cst_23 = arith.constant 1.000000e+00 : f32
    %29 = vector.broadcast %cst_23 : f32 to vector<8x128xf32>
    %30 = arith.addf %29, %28 : vector<8x128xf32>
    %31 = arith.divf %29, %30 : vector<8x128xf32>
    %32 = vector.extract_strided_slice %20 {offsets = [0, 128], sizes = [8, 128], strides = [1, 1]} : vector<8x384xf32> to vector<8x128xf32>
    %33 = vector.extract_strided_slice %23 {offsets = [0, 128], sizes = [8, 128], strides = [1, 1]} : vector<8x384xf32> to vector<8x128xf32>
    %34 = arith.addf %32, %33 : vector<8x128xf32>
    %35 = arith.negf %34 : vector<8x128xf32>
    %36 = math.exp %35 : vector<8x128xf32>
    %cst_24 = arith.constant 1.000000e+00 : f32
    %37 = vector.broadcast %cst_24 : f32 to vector<8x128xf32>
    %38 = arith.addf %37, %36 : vector<8x128xf32>
    %39 = arith.divf %37, %38 : vector<8x128xf32>
    %40 = vector.extract_strided_slice %20 {offsets = [0, 256], sizes = [8, 128], strides = [1, 1]} : vector<8x384xf32> to vector<8x128xf32>
    %41 = vector.extract_strided_slice %23 {offsets = [0, 256], sizes = [8, 128], strides = [1, 1]} : vector<8x384xf32> to vector<8x128xf32>
    %42 = vector.broadcast %5 : vector<1x128xf32> to vector<8x128xf32>
    %43 = arith.addf %41, %42 : vector<8x128xf32>
    %44 = arith.mulf %31, %43 : vector<8x128xf32>
    %45 = arith.addf %40, %44 : vector<8x128xf32>
    %46 = math.tanh %45 : vector<8x128xf32>
    %cst_25 = arith.constant 1.000000e+00 : f32
    %47 = vector.broadcast %cst_25 : f32 to vector<8x128xf32>
    %48 = arith.subf %47, %39 : vector<8x128xf32>
    %49 = arith.mulf %48, %46 : vector<8x128xf32>
    %50 = arith.mulf %39, %7 : vector<8x128xf32>
    %51 = arith.addf %49, %50 : vector<8x128xf32>
    %52 = arith.truncf %51 : vector<8x128xf32> to vector<8x128xbf16>
    %c0_26 = arith.constant 0 : index
    %c0_27 = arith.constant 0 : index
    %53 = vector.load %arg9[%c0_26, %c0_27] : memref<128x128xbf16, #tpu.memory_space<vmem>>, vector<128x128xbf16>
    %cst_28 = arith.constant dense<0.000000e+00> : vector<8x128xf32>
    %54 = tpu.matmul %52, %53, %cst_28 {dimension_numbers = #tpu.dot_dimension_numbers<[1], [0], [0], [1], [0, 0, 1, 1], [], []>} : vector<8x128xbf16>, vector<128x128xbf16>, vector<8x128xf32> -> vector<8x128xf32>
    %55 = vector.broadcast %6 : vector<1x128xf32> to vector<8x128xf32>
    %56 = arith.addf %54, %55 : vector<8x128xf32>
    %57 = arith.truncf %56 : vector<8x128xf32> to vector<8x128xbf16>
    %58 = arith.index_cast %c0_i32_14 : i32 to index
    %c0_29 = arith.constant 0 : index
    %c0_30 = arith.constant 0 : index
    %59 = vector.load %arg11[%58, %c0_29, %c0_30] : memref<8x8x128xbf16, #tpu.memory_space<vmem>>, vector<1x8x128xbf16>
    %60 = vector.shape_cast %59 : vector<1x8x128xbf16> to vector<8x128xbf16>
    %61 = vector.shape_cast %57 : vector<8x128xbf16> to vector<1x8x128xbf16>
    tpu.vector_store %arg11[%58, %c0_29, %c0_30], %61 {strides = array<i32>} : memref<8x8x128xbf16, #tpu.memory_space<vmem>>, vector<1x8x128xbf16>,
    %cst_31 = arith.constant dense<0xFF800000> : vector<8xf32>
    %62 = vector.multi_reduction <maximumf>, %56, %cst_31 [1] : vector<8x128xf32> to vector<8xf32>
    %63 = vector.shape_cast %62 : vector<8xf32> to vector<8x1xf32>
    %64 = vector.broadcast %63 : vector<8x1xf32> to vector<8x128xf32>
    %65 = arith.subf %56, %64 : vector<8x128xf32>
    %66 = math.exp %65 : vector<8x128xf32>
    %cst_32 = arith.constant dense<0.000000e+00> : vector<8xf32>
    %67 = vector.multi_reduction <add>, %66, %cst_32 [1] : vector<8x128xf32> to vector<8xf32>
    %68 = vector.shape_cast %67 : vector<8xf32> to vector<8x1xf32>
    %69 = tpu.reciprocal %68 {approx = true} : vector<8x1xf32> -> vector<8x1xf32>
    %70 = arith.truncf %66 : vector<8x128xf32> to vector<8x128xbf16>
    %c1_i32 = arith.constant 1 : i32
    %c0_33 = arith.constant 0 : index
    %c0_34 = arith.constant 0 : index
    %71 = vector.load %arg3[%c0_33, %c0_34] : memref<128x128xbf16, #tpu.memory_space<vmem>>, vector<128x128xbf16>
    %cst_35 = arith.constant dense<0.000000e+00> : vector<8x128xf32>
    %72 = tpu.matmul %70, %71, %cst_35 {dimension_numbers = #tpu.dot_dimension_numbers<[1], [0], [0], [1], [0, 0, 1, 1], [], []>} : vector<8x128xbf16>, vector<128x128xbf16>, vector<8x128xf32> -> vector<8x128xf32>
    %73 = vector.broadcast %69 : vector<8x1xf32> to vector<8x128xf32>
    %74 = arith.mulf %72, %73 : vector<8x128xf32>
    %75 = vector.broadcast %3 : vector<1x128xf32> to vector<8x128xf32>
    %76 = arith.addf %74, %75 : vector<8x128xf32>
    %77 = arith.truncf %76 : vector<8x128xf32> to vector<8x128xbf16>
    %c0_36 = arith.constant 0 : index
    %c0_37 = arith.constant 0 : index
    %78 = vector.load %arg5[%c0_36, %c0_37] : memref<128x384xbf16, #tpu.memory_space<vmem>>, vector<128x384xbf16>
    %cst_38 = arith.constant dense<0.000000e+00> : vector<8x384xf32>
    %79 = tpu.matmul %77, %78, %cst_38 {dimension_numbers = #tpu.dot_dimension_numbers<[1], [0], [0], [1], [0, 0, 1, 1], [], []>} : vector<8x128xbf16>, vector<128x384xbf16>, vector<8x384xf32> -> vector<8x384xf32>
    %80 = vector.broadcast %4 : vector<1x384xf32> to vector<8x384xf32>
    %81 = arith.addf %79, %80 : vector<8x384xf32>
    %82 = arith.truncf %51 : vector<8x128xf32> to vector<8x128xbf16>
    %c0_39 = arith.constant 0 : index
    %c0_40 = arith.constant 0 : index
    %83 = vector.load %arg6[%c0_39, %c0_40] : memref<128x384xbf16, #tpu.memory_space<vmem>>, vector<128x384xbf16>
    %cst_41 = arith.constant dense<0.000000e+00> : vector<8x384xf32>
    %84 = tpu.matmul %82, %83, %cst_41 {dimension_numbers = #tpu.dot_dimension_numbers<[1], [0], [0], [1], [0, 0, 1, 1], [], []>} : vector<8x128xbf16>, vector<128x384xbf16>, vector<8x384xf32> -> vector<8x384xf32>
    %85 = vector.extract_strided_slice %81 {offsets = [0, 0], sizes = [8, 128], strides = [1, 1]} : vector<8x384xf32> to vector<8x128xf32>
    %86 = vector.extract_strided_slice %84 {offsets = [0, 0], sizes = [8, 128], strides = [1, 1]} : vector<8x384xf32> to vector<8x128xf32>
    %87 = arith.addf %85, %86 : vector<8x128xf32>
    %88 = arith.negf %87 : vector<8x128xf32>
    %89 = math.exp %88 : vector<8x128xf32>
    %cst_42 = arith.constant 1.000000e+00 : f32
    %90 = vector.broadcast %cst_42 : f32 to vector<8x128xf32>
    %91 = arith.addf %90, %89 : vector<8x128xf32>
    %92 = arith.divf %90, %91 : vector<8x128xf32>
    %93 = vector.extract_strided_slice %81 {offsets = [0, 128], sizes = [8, 128], strides = [1, 1]} : vector<8x384xf32> to vector<8x128xf32>
    %94 = vector.extract_strided_slice %84 {offsets = [0, 128], sizes = [8, 128], strides = [1, 1]} : vector<8x384xf32> to vector<8x128xf32>
    %95 = arith.addf %93, %94 : vector<8x128xf32>
    %96 = arith.negf %95 : vector<8x128xf32>
    %97 = math.exp %96 : vector<8x128xf32>
    %cst_43 = arith.constant 1.000000e+00 : f32
    %98 = vector.broadcast %cst_43 : f32 to vector<8x128xf32>
    %99 = arith.addf %98, %97 : vector<8x128xf32>
    %100 = arith.divf %98, %99 : vector<8x128xf32>
    %101 = vector.extract_strided_slice %81 {offsets = [0, 256], sizes = [8, 128], strides = [1, 1]} : vector<8x384xf32> to vector<8x128xf32>
    %102 = vector.extract_strided_slice %84 {offsets = [0, 256], sizes = [8, 128], strides = [1, 1]} : vector<8x384xf32> to vector<8x128xf32>
    %103 = vector.broadcast %5 : vector<1x128xf32> to vector<8x128xf32>
    %104 = arith.addf %102, %103 : vector<8x128xf32>
    %105 = arith.mulf %92, %104 : vector<8x128xf32>
    %106 = arith.addf %101, %105 : vector<8x128xf32>
    %107 = math.tanh %106 : vector<8x128xf32>
    %cst_44 = arith.constant 1.000000e+00 : f32
    %108 = vector.broadcast %cst_44 : f32 to vector<8x128xf32>
    %109 = arith.subf %108, %100 : vector<8x128xf32>
    %110 = arith.mulf %109, %107 : vector<8x128xf32>
    %111 = arith.mulf %100, %51 : vector<8x128xf32>
    %112 = arith.addf %110, %111 : vector<8x128xf32>
    %113 = arith.truncf %112 : vector<8x128xf32> to vector<8x128xbf16>
    %c0_45 = arith.constant 0 : index
    %c0_46 = arith.constant 0 : index
    %114 = vector.load %arg9[%c0_45, %c0_46] : memref<128x128xbf16, #tpu.memory_space<vmem>>, vector<128x128xbf16>
    %cst_47 = arith.constant dense<0.000000e+00> : vector<8x128xf32>
    %115 = tpu.matmul %113, %114, %cst_47 {dimension_numbers = #tpu.dot_dimension_numbers<[1], [0], [0], [1], [0, 0, 1, 1], [], []>} : vector<8x128xbf16>, vector<128x128xbf16>, vector<8x128xf32> -> vector<8x128xf32>
    %116 = vector.broadcast %6 : vector<1x128xf32> to vector<8x128xf32>
    %117 = arith.addf %115, %116 : vector<8x128xf32>
    %118 = arith.truncf %117 : vector<8x128xf32> to vector<8x128xbf16>
    %119 = arith.index_cast %c1_i32 : i32 to index
    %c0_48 = arith.constant 0 : index
    %c0_49 = arith.constant 0 : index
    %120 = vector.load %arg11[%119, %c0_48, %c0_49] : memref<8x8x128xbf16, #tpu.memory_space<vmem>>, vector<1x8x128xbf16>
    %121 = vector.shape_cast %120 : vector<1x8x128xbf16> to vector<8x128xbf16>
    %122 = vector.shape_cast %118 : vector<8x128xbf16> to vector<1x8x128xbf16>
    tpu.vector_store %arg11[%119, %c0_48, %c0_49], %122 {strides = array<i32>} : memref<8x8x128xbf16, #tpu.memory_space<vmem>>, vector<1x8x128xbf16>,
    %cst_50 = arith.constant dense<0xFF800000> : vector<8xf32>
    %123 = vector.multi_reduction <maximumf>, %117, %cst_50 [1] : vector<8x128xf32> to vector<8xf32>
    %124 = vector.shape_cast %123 : vector<8xf32> to vector<8x1xf32>
    %125 = vector.broadcast %124 : vector<8x1xf32> to vector<8x128xf32>
    %126 = arith.subf %117, %125 : vector<8x128xf32>
    %127 = math.exp %126 : vector<8x128xf32>
    %cst_51 = arith.constant dense<0.000000e+00> : vector<8xf32>
    %128 = vector.multi_reduction <add>, %127, %cst_51 [1] : vector<8x128xf32> to vector<8xf32>
    %129 = vector.shape_cast %128 : vector<8xf32> to vector<8x1xf32>
    %130 = tpu.reciprocal %129 {approx = true} : vector<8x1xf32> -> vector<8x1xf32>
    %131 = arith.truncf %127 : vector<8x128xf32> to vector<8x128xbf16>
    %c2_i32 = arith.constant 2 : i32
    %c0_52 = arith.constant 0 : index
    %c0_53 = arith.constant 0 : index
    %132 = vector.load %arg3[%c0_52, %c0_53] : memref<128x128xbf16, #tpu.memory_space<vmem>>, vector<128x128xbf16>
    %cst_54 = arith.constant dense<0.000000e+00> : vector<8x128xf32>
    %133 = tpu.matmul %131, %132, %cst_54 {dimension_numbers = #tpu.dot_dimension_numbers<[1], [0], [0], [1], [0, 0, 1, 1], [], []>} : vector<8x128xbf16>, vector<128x128xbf16>, vector<8x128xf32> -> vector<8x128xf32>
    %134 = vector.broadcast %130 : vector<8x1xf32> to vector<8x128xf32>
    %135 = arith.mulf %133, %134 : vector<8x128xf32>
    %136 = vector.broadcast %3 : vector<1x128xf32> to vector<8x128xf32>
    %137 = arith.addf %135, %136 : vector<8x128xf32>
    %138 = arith.truncf %137 : vector<8x128xf32> to vector<8x128xbf16>
    %c0_55 = arith.constant 0 : index
    %c0_56 = arith.constant 0 : index
    %139 = vector.load %arg5[%c0_55, %c0_56] : memref<128x384xbf16, #tpu.memory_space<vmem>>, vector<128x384xbf16>
    %cst_57 = arith.constant dense<0.000000e+00> : vector<8x384xf32>
    %140 = tpu.matmul %138, %139, %cst_57 {dimension_numbers = #tpu.dot_dimension_numbers<[1], [0], [0], [1], [0, 0, 1, 1], [], []>} : vector<8x128xbf16>, vector<128x384xbf16>, vector<8x384xf32> -> vector<8x384xf32>
    %141 = vector.broadcast %4 : vector<1x384xf32> to vector<8x384xf32>
    %142 = arith.addf %140, %141 : vector<8x384xf32>
    %143 = arith.truncf %112 : vector<8x128xf32> to vector<8x128xbf16>
    %c0_58 = arith.constant 0 : index
    %c0_59 = arith.constant 0 : index
    %144 = vector.load %arg6[%c0_58, %c0_59] : memref<128x384xbf16, #tpu.memory_space<vmem>>, vector<128x384xbf16>
    %cst_60 = arith.constant dense<0.000000e+00> : vector<8x384xf32>
    %145 = tpu.matmul %143, %144, %cst_60 {dimension_numbers = #tpu.dot_dimension_numbers<[1], [0], [0], [1], [0, 0, 1, 1], [], []>} : vector<8x128xbf16>, vector<128x384xbf16>, vector<8x384xf32> -> vector<8x384xf32>
    %146 = vector.extract_strided_slice %142 {offsets = [0, 0], sizes = [8, 128], strides = [1, 1]} : vector<8x384xf32> to vector<8x128xf32>
    %147 = vector.extract_strided_slice %145 {offsets = [0, 0], sizes = [8, 128], strides = [1, 1]} : vector<8x384xf32> to vector<8x128xf32>
    %148 = arith.addf %146, %147 : vector<8x128xf32>
    %149 = arith.negf %148 : vector<8x128xf32>
    %150 = math.exp %149 : vector<8x128xf32>
    %cst_61 = arith.constant 1.000000e+00 : f32
    %151 = vector.broadcast %cst_61 : f32 to vector<8x128xf32>
    %152 = arith.addf %151, %150 : vector<8x128xf32>
    %153 = arith.divf %151, %152 : vector<8x128xf32>
    %154 = vector.extract_strided_slice %142 {offsets = [0, 128], sizes = [8, 128], strides = [1, 1]} : vector<8x384xf32> to vector<8x128xf32>
    %155 = vector.extract_strided_slice %145 {offsets = [0, 128], sizes = [8, 128], strides = [1, 1]} : vector<8x384xf32> to vector<8x128xf32>
    %156 = arith.addf %154, %155 : vector<8x128xf32>
    %157 = arith.negf %156 : vector<8x128xf32>
    %158 = math.exp %157 : vector<8x128xf32>
    %cst_62 = arith.constant 1.000000e+00 : f32
    %159 = vector.broadcast %cst_62 : f32 to vector<8x128xf32>
    %160 = arith.addf %159, %158 : vector<8x128xf32>
    %161 = arith.divf %159, %160 : vector<8x128xf32>
    %162 = vector.extract_strided_slice %142 {offsets = [0, 256], sizes = [8, 128], strides = [1, 1]} : vector<8x384xf32> to vector<8x128xf32>
    %163 = vector.extract_strided_slice %145 {offsets = [0, 256], sizes = [8, 128], strides = [1, 1]} : vector<8x384xf32> to vector<8x128xf32>
    %164 = vector.broadcast %5 : vector<1x128xf32> to vector<8x128xf32>
    %165 = arith.addf %163, %164 : vector<8x128xf32>
    %166 = arith.mulf %153, %165 : vector<8x128xf32>
    %167 = arith.addf %162, %166 : vector<8x128xf32>
    %168 = math.tanh %167 : vector<8x128xf32>
    %cst_63 = arith.constant 1.000000e+00 : f32
    %169 = vector.broadcast %cst_63 : f32 to vector<8x128xf32>
    %170 = arith.subf %169, %161 : vector<8x128xf32>
    %171 = arith.mulf %170, %168 : vector<8x128xf32>
    %172 = arith.mulf %161, %112 : vector<8x128xf32>
    %173 = arith.addf %171, %172 : vector<8x128xf32>
    %174 = arith.truncf %173 : vector<8x128xf32> to vector<8x128xbf16>
    %c0_64 = arith.constant 0 : index
    %c0_65 = arith.constant 0 : index
    %175 = vector.load %arg9[%c0_64, %c0_65] : memref<128x128xbf16, #tpu.memory_space<vmem>>, vector<128x128xbf16>
    %cst_66 = arith.constant dense<0.000000e+00> : vector<8x128xf32>
    %176 = tpu.matmul %174, %175, %cst_66 {dimension_numbers = #tpu.dot_dimension_numbers<[1], [0], [0], [1], [0, 0, 1, 1], [], []>} : vector<8x128xbf16>, vector<128x128xbf16>, vector<8x128xf32> -> vector<8x128xf32>
    %177 = vector.broadcast %6 : vector<1x128xf32> to vector<8x128xf32>
    %178 = arith.addf %176, %177 : vector<8x128xf32>
    %179 = arith.truncf %178 : vector<8x128xf32> to vector<8x128xbf16>
    %180 = arith.index_cast %c2_i32 : i32 to index
    %c0_67 = arith.constant 0 : index
    %c0_68 = arith.constant 0 : index
    %181 = vector.load %arg11[%180, %c0_67, %c0_68] : memref<8x8x128xbf16, #tpu.memory_space<vmem>>, vector<1x8x128xbf16>
    %182 = vector.shape_cast %181 : vector<1x8x128xbf16> to vector<8x128xbf16>
    %183 = vector.shape_cast %179 : vector<8x128xbf16> to vector<1x8x128xbf16>
    tpu.vector_store %arg11[%180, %c0_67, %c0_68], %183 {strides = array<i32>} : memref<8x8x128xbf16, #tpu.memory_space<vmem>>, vector<1x8x128xbf16>,
    %cst_69 = arith.constant dense<0xFF800000> : vector<8xf32>
    %184 = vector.multi_reduction <maximumf>, %178, %cst_69 [1] : vector<8x128xf32> to vector<8xf32>
    %185 = vector.shape_cast %184 : vector<8xf32> to vector<8x1xf32>
    %186 = vector.broadcast %185 : vector<8x1xf32> to vector<8x128xf32>
    %187 = arith.subf %178, %186 : vector<8x128xf32>
    %188 = math.exp %187 : vector<8x128xf32>
    %cst_70 = arith.constant dense<0.000000e+00> : vector<8xf32>
    %189 = vector.multi_reduction <add>, %188, %cst_70 [1] : vector<8x128xf32> to vector<8xf32>
    %190 = vector.shape_cast %189 : vector<8xf32> to vector<8x1xf32>
    %191 = tpu.reciprocal %190 {approx = true} : vector<8x1xf32> -> vector<8x1xf32>
    %192 = arith.truncf %188 : vector<8x128xf32> to vector<8x128xbf16>
    %c3_i32 = arith.constant 3 : i32
    %c0_71 = arith.constant 0 : index
    %c0_72 = arith.constant 0 : index
    %193 = vector.load %arg3[%c0_71, %c0_72] : memref<128x128xbf16, #tpu.memory_space<vmem>>, vector<128x128xbf16>
    %cst_73 = arith.constant dense<0.000000e+00> : vector<8x128xf32>
    %194 = tpu.matmul %192, %193, %cst_73 {dimension_numbers = #tpu.dot_dimension_numbers<[1], [0], [0], [1], [0, 0, 1, 1], [], []>} : vector<8x128xbf16>, vector<128x128xbf16>, vector<8x128xf32> -> vector<8x128xf32>
    %195 = vector.broadcast %191 : vector<8x1xf32> to vector<8x128xf32>
    %196 = arith.mulf %194, %195 : vector<8x128xf32>
    %197 = vector.broadcast %3 : vector<1x128xf32> to vector<8x128xf32>
    %198 = arith.addf %196, %197 : vector<8x128xf32>
    %199 = arith.truncf %198 : vector<8x128xf32> to vector<8x128xbf16>
    %c0_74 = arith.constant 0 : index
    %c0_75 = arith.constant 0 : index
    %200 = vector.load %arg5[%c0_74, %c0_75] : memref<128x384xbf16, #tpu.memory_space<vmem>>, vector<128x384xbf16>
    %cst_76 = arith.constant dense<0.000000e+00> : vector<8x384xf32>
    %201 = tpu.matmul %199, %200, %cst_76 {dimension_numbers = #tpu.dot_dimension_numbers<[1], [0], [0], [1], [0, 0, 1, 1], [], []>} : vector<8x128xbf16>, vector<128x384xbf16>, vector<8x384xf32> -> vector<8x384xf32>
    %202 = vector.broadcast %4 : vector<1x384xf32> to vector<8x384xf32>
    %203 = arith.addf %201, %202 : vector<8x384xf32>
    %204 = arith.truncf %173 : vector<8x128xf32> to vector<8x128xbf16>
    %c0_77 = arith.constant 0 : index
    %c0_78 = arith.constant 0 : index
    %205 = vector.load %arg6[%c0_77, %c0_78] : memref<128x384xbf16, #tpu.memory_space<vmem>>, vector<128x384xbf16>
    %cst_79 = arith.constant dense<0.000000e+00> : vector<8x384xf32>
    %206 = tpu.matmul %204, %205, %cst_79 {dimension_numbers = #tpu.dot_dimension_numbers<[1], [0], [0], [1], [0, 0, 1, 1], [], []>} : vector<8x128xbf16>, vector<128x384xbf16>, vector<8x384xf32> -> vector<8x384xf32>
    %207 = vector.extract_strided_slice %203 {offsets = [0, 0], sizes = [8, 128], strides = [1, 1]} : vector<8x384xf32> to vector<8x128xf32>
    %208 = vector.extract_strided_slice %206 {offsets = [0, 0], sizes = [8, 128], strides = [1, 1]} : vector<8x384xf32> to vector<8x128xf32>
    %209 = arith.addf %207, %208 : vector<8x128xf32>
    %210 = arith.negf %209 : vector<8x128xf32>
    %211 = math.exp %210 : vector<8x128xf32>
    %cst_80 = arith.constant 1.000000e+00 : f32
    %212 = vector.broadcast %cst_80 : f32 to vector<8x128xf32>
    %213 = arith.addf %212, %211 : vector<8x128xf32>
    %214 = arith.divf %212, %213 : vector<8x128xf32>
    %215 = vector.extract_strided_slice %203 {offsets = [0, 128], sizes = [8, 128], strides = [1, 1]} : vector<8x384xf32> to vector<8x128xf32>
    %216 = vector.extract_strided_slice %206 {offsets = [0, 128], sizes = [8, 128], strides = [1, 1]} : vector<8x384xf32> to vector<8x128xf32>
    %217 = arith.addf %215, %216 : vector<8x128xf32>
    %218 = arith.negf %217 : vector<8x128xf32>
    %219 = math.exp %218 : vector<8x128xf32>
    %cst_81 = arith.constant 1.000000e+00 : f32
    %220 = vector.broadcast %cst_81 : f32 to vector<8x128xf32>
    %221 = arith.addf %220, %219 : vector<8x128xf32>
    %222 = arith.divf %220, %221 : vector<8x128xf32>
    %223 = vector.extract_strided_slice %203 {offsets = [0, 256], sizes = [8, 128], strides = [1, 1]} : vector<8x384xf32> to vector<8x128xf32>
    %224 = vector.extract_strided_slice %206 {offsets = [0, 256], sizes = [8, 128], strides = [1, 1]} : vector<8x384xf32> to vector<8x128xf32>
    %225 = vector.broadcast %5 : vector<1x128xf32> to vector<8x128xf32>
    %226 = arith.addf %224, %225 : vector<8x128xf32>
    %227 = arith.mulf %214, %226 : vector<8x128xf32>
    %228 = arith.addf %223, %227 : vector<8x128xf32>
    %229 = math.tanh %228 : vector<8x128xf32>
    %cst_82 = arith.constant 1.000000e+00 : f32
    %230 = vector.broadcast %cst_82 : f32 to vector<8x128xf32>
    %231 = arith.subf %230, %222 : vector<8x128xf32>
    %232 = arith.mulf %231, %229 : vector<8x128xf32>
    %233 = arith.mulf %222, %173 : vector<8x128xf32>
    %234 = arith.addf %232, %233 : vector<8x128xf32>
    %235 = arith.truncf %234 : vector<8x128xf32> to vector<8x128xbf16>
    %c0_83 = arith.constant 0 : index
    %c0_84 = arith.constant 0 : index
    %236 = vector.load %arg9[%c0_83, %c0_84] : memref<128x128xbf16, #tpu.memory_space<vmem>>, vector<128x128xbf16>
    %cst_85 = arith.constant dense<0.000000e+00> : vector<8x128xf32>
    %237 = tpu.matmul %235, %236, %cst_85 {dimension_numbers = #tpu.dot_dimension_numbers<[1], [0], [0], [1], [0, 0, 1, 1], [], []>} : vector<8x128xbf16>, vector<128x128xbf16>, vector<8x128xf32> -> vector<8x128xf32>
    %238 = vector.broadcast %6 : vector<1x128xf32> to vector<8x128xf32>
    %239 = arith.addf %237, %238 : vector<8x128xf32>
    %240 = arith.truncf %239 : vector<8x128xf32> to vector<8x128xbf16>
    %241 = arith.index_cast %c3_i32 : i32 to index
    %c0_86 = arith.constant 0 : index
    %c0_87 = arith.constant 0 : index
    %242 = vector.load %arg11[%241, %c0_86, %c0_87] : memref<8x8x128xbf16, #tpu.memory_space<vmem>>, vector<1x8x128xbf16>
    %243 = vector.shape_cast %242 : vector<1x8x128xbf16> to vector<8x128xbf16>
    %244 = vector.shape_cast %240 : vector<8x128xbf16> to vector<1x8x128xbf16>
    tpu.vector_store %arg11[%241, %c0_86, %c0_87], %244 {strides = array<i32>} : memref<8x8x128xbf16, #tpu.memory_space<vmem>>, vector<1x8x128xbf16>,
    %cst_88 = arith.constant dense<0xFF800000> : vector<8xf32>
    %245 = vector.multi_reduction <maximumf>, %239, %cst_88 [1] : vector<8x128xf32> to vector<8xf32>
    %246 = vector.shape_cast %245 : vector<8xf32> to vector<8x1xf32>
    %247 = vector.broadcast %246 : vector<8x1xf32> to vector<8x128xf32>
    %248 = arith.subf %239, %247 : vector<8x128xf32>
    %249 = math.exp %248 : vector<8x128xf32>
    %cst_89 = arith.constant dense<0.000000e+00> : vector<8xf32>
    %250 = vector.multi_reduction <add>, %249, %cst_89 [1] : vector<8x128xf32> to vector<8xf32>
    %251 = vector.shape_cast %250 : vector<8xf32> to vector<8x1xf32>
    %252 = tpu.reciprocal %251 {approx = true} : vector<8x1xf32> -> vector<8x1xf32>
    %253 = arith.truncf %249 : vector<8x128xf32> to vector<8x128xbf16>
    %c4_i32 = arith.constant 4 : i32
    %c0_90 = arith.constant 0 : index
    %c0_91 = arith.constant 0 : index
    %254 = vector.load %arg3[%c0_90, %c0_91] : memref<128x128xbf16, #tpu.memory_space<vmem>>, vector<128x128xbf16>
    %cst_92 = arith.constant dense<0.000000e+00> : vector<8x128xf32>
    %255 = tpu.matmul %253, %254, %cst_92 {dimension_numbers = #tpu.dot_dimension_numbers<[1], [0], [0], [1], [0, 0, 1, 1], [], []>} : vector<8x128xbf16>, vector<128x128xbf16>, vector<8x128xf32> -> vector<8x128xf32>
    %256 = vector.broadcast %252 : vector<8x1xf32> to vector<8x128xf32>
    %257 = arith.mulf %255, %256 : vector<8x128xf32>
    %258 = vector.broadcast %3 : vector<1x128xf32> to vector<8x128xf32>
    %259 = arith.addf %257, %258 : vector<8x128xf32>
    %260 = arith.truncf %259 : vector<8x128xf32> to vector<8x128xbf16>
    %c0_93 = arith.constant 0 : index
    %c0_94 = arith.constant 0 : index
    %261 = vector.load %arg5[%c0_93, %c0_94] : memref<128x384xbf16, #tpu.memory_space<vmem>>, vector<128x384xbf16>
    %cst_95 = arith.constant dense<0.000000e+00> : vector<8x384xf32>
    %262 = tpu.matmul %260, %261, %cst_95 {dimension_numbers = #tpu.dot_dimension_numbers<[1], [0], [0], [1], [0, 0, 1, 1], [], []>} : vector<8x128xbf16>, vector<128x384xbf16>, vector<8x384xf32> -> vector<8x384xf32>
    %263 = vector.broadcast %4 : vector<1x384xf32> to vector<8x384xf32>
    %264 = arith.addf %262, %263 : vector<8x384xf32>
    %265 = arith.truncf %234 : vector<8x128xf32> to vector<8x128xbf16>
    %c0_96 = arith.constant 0 : index
    %c0_97 = arith.constant 0 : index
    %266 = vector.load %arg6[%c0_96, %c0_97] : memref<128x384xbf16, #tpu.memory_space<vmem>>, vector<128x384xbf16>
    %cst_98 = arith.constant dense<0.000000e+00> : vector<8x384xf32>
    %267 = tpu.matmul %265, %266, %cst_98 {dimension_numbers = #tpu.dot_dimension_numbers<[1], [0], [0], [1], [0, 0, 1, 1], [], []>} : vector<8x128xbf16>, vector<128x384xbf16>, vector<8x384xf32> -> vector<8x384xf32>
    %268 = vector.extract_strided_slice %264 {offsets = [0, 0], sizes = [8, 128], strides = [1, 1]} : vector<8x384xf32> to vector<8x128xf32>
    %269 = vector.extract_strided_slice %267 {offsets = [0, 0], sizes = [8, 128], strides = [1, 1]} : vector<8x384xf32> to vector<8x128xf32>
    %270 = arith.addf %268, %269 : vector<8x128xf32>
    %271 = arith.negf %270 : vector<8x128xf32>
    %272 = math.exp %271 : vector<8x128xf32>
    %cst_99 = arith.constant 1.000000e+00 : f32
    %273 = vector.broadcast %cst_99 : f32 to vector<8x128xf32>
    %274 = arith.addf %273, %272 : vector<8x128xf32>
    %275 = arith.divf %273, %274 : vector<8x128xf32>
    %276 = vector.extract_strided_slice %264 {offsets = [0, 128], sizes = [8, 128], strides = [1, 1]} : vector<8x384xf32> to vector<8x128xf32>
    %277 = vector.extract_strided_slice %267 {offsets = [0, 128], sizes = [8, 128], strides = [1, 1]} : vector<8x384xf32> to vector<8x128xf32>
    %278 = arith.addf %276, %277 : vector<8x128xf32>
    %279 = arith.negf %278 : vector<8x128xf32>
    %280 = math.exp %279 : vector<8x128xf32>
    %cst_100 = arith.constant 1.000000e+00 : f32
    %281 = vector.broadcast %cst_100 : f32 to vector<8x128xf32>
    %282 = arith.addf %281, %280 : vector<8x128xf32>
    %283 = arith.divf %281, %282 : vector<8x128xf32>
    %284 = vector.extract_strided_slice %264 {offsets = [0, 256], sizes = [8, 128], strides = [1, 1]} : vector<8x384xf32> to vector<8x128xf32>
    %285 = vector.extract_strided_slice %267 {offsets = [0, 256], sizes = [8, 128], strides = [1, 1]} : vector<8x384xf32> to vector<8x128xf32>
    %286 = vector.broadcast %5 : vector<1x128xf32> to vector<8x128xf32>
    %287 = arith.addf %285, %286 : vector<8x128xf32>
    %288 = arith.mulf %275, %287 : vector<8x128xf32>
    %289 = arith.addf %284, %288 : vector<8x128xf32>
    %290 = math.tanh %289 : vector<8x128xf32>
    %cst_101 = arith.constant 1.000000e+00 : f32
    %291 = vector.broadcast %cst_101 : f32 to vector<8x128xf32>
    %292 = arith.subf %291, %283 : vector<8x128xf32>
    %293 = arith.mulf %292, %290 : vector<8x128xf32>
    %294 = arith.mulf %283, %234 : vector<8x128xf32>
    %295 = arith.addf %293, %294 : vector<8x128xf32>
    %296 = arith.truncf %295 : vector<8x128xf32> to vector<8x128xbf16>
    %c0_102 = arith.constant 0 : index
    %c0_103 = arith.constant 0 : index
    %297 = vector.load %arg9[%c0_102, %c0_103] : memref<128x128xbf16, #tpu.memory_space<vmem>>, vector<128x128xbf16>
    %cst_104 = arith.constant dense<0.000000e+00> : vector<8x128xf32>
    %298 = tpu.matmul %296, %297, %cst_104 {dimension_numbers = #tpu.dot_dimension_numbers<[1], [0], [0], [1], [0, 0, 1, 1], [], []>} : vector<8x128xbf16>, vector<128x128xbf16>, vector<8x128xf32> -> vector<8x128xf32>
    %299 = vector.broadcast %6 : vector<1x128xf32> to vector<8x128xf32>
    %300 = arith.addf %298, %299 : vector<8x128xf32>
    %301 = arith.truncf %300 : vector<8x128xf32> to vector<8x128xbf16>
    %302 = arith.index_cast %c4_i32 : i32 to index
    %c0_105 = arith.constant 0 : index
    %c0_106 = arith.constant 0 : index
    %303 = vector.load %arg11[%302, %c0_105, %c0_106] : memref<8x8x128xbf16, #tpu.memory_space<vmem>>, vector<1x8x128xbf16>
    %304 = vector.shape_cast %303 : vector<1x8x128xbf16> to vector<8x128xbf16>
    %305 = vector.shape_cast %301 : vector<8x128xbf16> to vector<1x8x128xbf16>
    tpu.vector_store %arg11[%302, %c0_105, %c0_106], %305 {strides = array<i32>} : memref<8x8x128xbf16, #tpu.memory_space<vmem>>, vector<1x8x128xbf16>,
    %cst_107 = arith.constant dense<0xFF800000> : vector<8xf32>
    %306 = vector.multi_reduction <maximumf>, %300, %cst_107 [1] : vector<8x128xf32> to vector<8xf32>
    %307 = vector.shape_cast %306 : vector<8xf32> to vector<8x1xf32>
    %308 = vector.broadcast %307 : vector<8x1xf32> to vector<8x128xf32>
    %309 = arith.subf %300, %308 : vector<8x128xf32>
    %310 = math.exp %309 : vector<8x128xf32>
    %cst_108 = arith.constant dense<0.000000e+00> : vector<8xf32>
    %311 = vector.multi_reduction <add>, %310, %cst_108 [1] : vector<8x128xf32> to vector<8xf32>
    %312 = vector.shape_cast %311 : vector<8xf32> to vector<8x1xf32>
    %313 = tpu.reciprocal %312 {approx = true} : vector<8x1xf32> -> vector<8x1xf32>
    %314 = arith.truncf %310 : vector<8x128xf32> to vector<8x128xbf16>
    %c5_i32 = arith.constant 5 : i32
    %c0_109 = arith.constant 0 : index
    %c0_110 = arith.constant 0 : index
    %315 = vector.load %arg3[%c0_109, %c0_110] : memref<128x128xbf16, #tpu.memory_space<vmem>>, vector<128x128xbf16>
    %cst_111 = arith.constant dense<0.000000e+00> : vector<8x128xf32>
    %316 = tpu.matmul %314, %315, %cst_111 {dimension_numbers = #tpu.dot_dimension_numbers<[1], [0], [0], [1], [0, 0, 1, 1], [], []>} : vector<8x128xbf16>, vector<128x128xbf16>, vector<8x128xf32> -> vector<8x128xf32>
    %317 = vector.broadcast %313 : vector<8x1xf32> to vector<8x128xf32>
    %318 = arith.mulf %316, %317 : vector<8x128xf32>
    %319 = vector.broadcast %3 : vector<1x128xf32> to vector<8x128xf32>
    %320 = arith.addf %318, %319 : vector<8x128xf32>
    %321 = arith.truncf %320 : vector<8x128xf32> to vector<8x128xbf16>
    %c0_112 = arith.constant 0 : index
    %c0_113 = arith.constant 0 : index
    %322 = vector.load %arg5[%c0_112, %c0_113] : memref<128x384xbf16, #tpu.memory_space<vmem>>, vector<128x384xbf16>
    %cst_114 = arith.constant dense<0.000000e+00> : vector<8x384xf32>
    %323 = tpu.matmul %321, %322, %cst_114 {dimension_numbers = #tpu.dot_dimension_numbers<[1], [0], [0], [1], [0, 0, 1, 1], [], []>} : vector<8x128xbf16>, vector<128x384xbf16>, vector<8x384xf32> -> vector<8x384xf32>
    %324 = vector.broadcast %4 : vector<1x384xf32> to vector<8x384xf32>
    %325 = arith.addf %323, %324 : vector<8x384xf32>
    %326 = arith.truncf %295 : vector<8x128xf32> to vector<8x128xbf16>
    %c0_115 = arith.constant 0 : index
    %c0_116 = arith.constant 0 : index
    %327 = vector.load %arg6[%c0_115, %c0_116] : memref<128x384xbf16, #tpu.memory_space<vmem>>, vector<128x384xbf16>
    %cst_117 = arith.constant dense<0.000000e+00> : vector<8x384xf32>
    %328 = tpu.matmul %326, %327, %cst_117 {dimension_numbers = #tpu.dot_dimension_numbers<[1], [0], [0], [1], [0, 0, 1, 1], [], []>} : vector<8x128xbf16>, vector<128x384xbf16>, vector<8x384xf32> -> vector<8x384xf32>
    %329 = vector.extract_strided_slice %325 {offsets = [0, 0], sizes = [8, 128], strides = [1, 1]} : vector<8x384xf32> to vector<8x128xf32>
    %330 = vector.extract_strided_slice %328 {offsets = [0, 0], sizes = [8, 128], strides = [1, 1]} : vector<8x384xf32> to vector<8x128xf32>
    %331 = arith.addf %329, %330 : vector<8x128xf32>
    %332 = arith.negf %331 : vector<8x128xf32>
    %333 = math.exp %332 : vector<8x128xf32>
    %cst_118 = arith.constant 1.000000e+00 : f32
    %334 = vector.broadcast %cst_118 : f32 to vector<8x128xf32>
    %335 = arith.addf %334, %333 : vector<8x128xf32>
    %336 = arith.divf %334, %335 : vector<8x128xf32>
    %337 = vector.extract_strided_slice %325 {offsets = [0, 128], sizes = [8, 128], strides = [1, 1]} : vector<8x384xf32> to vector<8x128xf32>
    %338 = vector.extract_strided_slice %328 {offsets = [0, 128], sizes = [8, 128], strides = [1, 1]} : vector<8x384xf32> to vector<8x128xf32>
    %339 = arith.addf %337, %338 : vector<8x128xf32>
    %340 = arith.negf %339 : vector<8x128xf32>
    %341 = math.exp %340 : vector<8x128xf32>
    %cst_119 = arith.constant 1.000000e+00 : f32
    %342 = vector.broadcast %cst_119 : f32 to vector<8x128xf32>
    %343 = arith.addf %342, %341 : vector<8x128xf32>
    %344 = arith.divf %342, %343 : vector<8x128xf32>
    %345 = vector.extract_strided_slice %325 {offsets = [0, 256], sizes = [8, 128], strides = [1, 1]} : vector<8x384xf32> to vector<8x128xf32>
    %346 = vector.extract_strided_slice %328 {offsets = [0, 256], sizes = [8, 128], strides = [1, 1]} : vector<8x384xf32> to vector<8x128xf32>
    %347 = vector.broadcast %5 : vector<1x128xf32> to vector<8x128xf32>
    %348 = arith.addf %346, %347 : vector<8x128xf32>
    %349 = arith.mulf %336, %348 : vector<8x128xf32>
    %350 = arith.addf %345, %349 : vector<8x128xf32>
    %351 = math.tanh %350 : vector<8x128xf32>
    %cst_120 = arith.constant 1.000000e+00 : f32
    %352 = vector.broadcast %cst_120 : f32 to vector<8x128xf32>
    %353 = arith.subf %352, %344 : vector<8x128xf32>
    %354 = arith.mulf %353, %351 : vector<8x128xf32>
    %355 = arith.mulf %344, %295 : vector<8x128xf32>
    %356 = arith.addf %354, %355 : vector<8x128xf32>
    %357 = arith.truncf %356 : vector<8x128xf32> to vector<8x128xbf16>
    %c0_121 = arith.constant 0 : index
    %c0_122 = arith.constant 0 : index
    %358 = vector.load %arg9[%c0_121, %c0_122] : memref<128x128xbf16, #tpu.memory_space<vmem>>, vector<128x128xbf16>
    %cst_123 = arith.constant dense<0.000000e+00> : vector<8x128xf32>
    %359 = tpu.matmul %357, %358, %cst_123 {dimension_numbers = #tpu.dot_dimension_numbers<[1], [0], [0], [1], [0, 0, 1, 1], [], []>} : vector<8x128xbf16>, vector<128x128xbf16>, vector<8x128xf32> -> vector<8x128xf32>
    %360 = vector.broadcast %6 : vector<1x128xf32> to vector<8x128xf32>
    %361 = arith.addf %359, %360 : vector<8x128xf32>
    %362 = arith.truncf %361 : vector<8x128xf32> to vector<8x128xbf16>
    %363 = arith.index_cast %c5_i32 : i32 to index
    %c0_124 = arith.constant 0 : index
    %c0_125 = arith.constant 0 : index
    %364 = vector.load %arg11[%363, %c0_124, %c0_125] : memref<8x8x128xbf16, #tpu.memory_space<vmem>>, vector<1x8x128xbf16>
    %365 = vector.shape_cast %364 : vector<1x8x128xbf16> to vector<8x128xbf16>
    %366 = vector.shape_cast %362 : vector<8x128xbf16> to vector<1x8x128xbf16>
    tpu.vector_store %arg11[%363, %c0_124, %c0_125], %366 {strides = array<i32>} : memref<8x8x128xbf16, #tpu.memory_space<vmem>>, vector<1x8x128xbf16>,
    %cst_126 = arith.constant dense<0xFF800000> : vector<8xf32>
    %367 = vector.multi_reduction <maximumf>, %361, %cst_126 [1] : vector<8x128xf32> to vector<8xf32>
    %368 = vector.shape_cast %367 : vector<8xf32> to vector<8x1xf32>
    %369 = vector.broadcast %368 : vector<8x1xf32> to vector<8x128xf32>
    %370 = arith.subf %361, %369 : vector<8x128xf32>
    %371 = math.exp %370 : vector<8x128xf32>
    %cst_127 = arith.constant dense<0.000000e+00> : vector<8xf32>
    %372 = vector.multi_reduction <add>, %371, %cst_127 [1] : vector<8x128xf32> to vector<8xf32>
    %373 = vector.shape_cast %372 : vector<8xf32> to vector<8x1xf32>
    %374 = tpu.reciprocal %373 {approx = true} : vector<8x1xf32> -> vector<8x1xf32>
    %375 = arith.truncf %371 : vector<8x128xf32> to vector<8x128xbf16>
    %c6_i32 = arith.constant 6 : i32
    %c0_128 = arith.constant 0 : index
    %c0_129 = arith.constant 0 : index
    %376 = vector.load %arg3[%c0_128, %c0_129] : memref<128x128xbf16, #tpu.memory_space<vmem>>, vector<128x128xbf16>
    %cst_130 = arith.constant dense<0.000000e+00> : vector<8x128xf32>
    %377 = tpu.matmul %375, %376, %cst_130 {dimension_numbers = #tpu.dot_dimension_numbers<[1], [0], [0], [1], [0, 0, 1, 1], [], []>} : vector<8x128xbf16>, vector<128x128xbf16>, vector<8x128xf32> -> vector<8x128xf32>
    %378 = vector.broadcast %374 : vector<8x1xf32> to vector<8x128xf32>
    %379 = arith.mulf %377, %378 : vector<8x128xf32>
    %380 = vector.broadcast %3 : vector<1x128xf32> to vector<8x128xf32>
    %381 = arith.addf %379, %380 : vector<8x128xf32>
    %382 = arith.truncf %381 : vector<8x128xf32> to vector<8x128xbf16>
    %c0_131 = arith.constant 0 : index
    %c0_132 = arith.constant 0 : index
    %383 = vector.load %arg5[%c0_131, %c0_132] : memref<128x384xbf16, #tpu.memory_space<vmem>>, vector<128x384xbf16>
    %cst_133 = arith.constant dense<0.000000e+00> : vector<8x384xf32>
    %384 = tpu.matmul %382, %383, %cst_133 {dimension_numbers = #tpu.dot_dimension_numbers<[1], [0], [0], [1], [0, 0, 1, 1], [], []>} : vector<8x128xbf16>, vector<128x384xbf16>, vector<8x384xf32> -> vector<8x384xf32>
    %385 = vector.broadcast %4 : vector<1x384xf32> to vector<8x384xf32>
    %386 = arith.addf %384, %385 : vector<8x384xf32>
    %387 = arith.truncf %356 : vector<8x128xf32> to vector<8x128xbf16>
    %c0_134 = arith.constant 0 : index
    %c0_135 = arith.constant 0 : index
    %388 = vector.load %arg6[%c0_134, %c0_135] : memref<128x384xbf16, #tpu.memory_space<vmem>>, vector<128x384xbf16>
    %cst_136 = arith.constant dense<0.000000e+00> : vector<8x384xf32>
    %389 = tpu.matmul %387, %388, %cst_136 {dimension_numbers = #tpu.dot_dimension_numbers<[1], [0], [0], [1], [0, 0, 1, 1], [], []>} : vector<8x128xbf16>, vector<128x384xbf16>, vector<8x384xf32> -> vector<8x384xf32>
    %390 = vector.extract_strided_slice %386 {offsets = [0, 0], sizes = [8, 128], strides = [1, 1]} : vector<8x384xf32> to vector<8x128xf32>
    %391 = vector.extract_strided_slice %389 {offsets = [0, 0], sizes = [8, 128], strides = [1, 1]} : vector<8x384xf32> to vector<8x128xf32>
    %392 = arith.addf %390, %391 : vector<8x128xf32>
    %393 = arith.negf %392 : vector<8x128xf32>
    %394 = math.exp %393 : vector<8x128xf32>
    %cst_137 = arith.constant 1.000000e+00 : f32
    %395 = vector.broadcast %cst_137 : f32 to vector<8x128xf32>
    %396 = arith.addf %395, %394 : vector<8x128xf32>
    %397 = arith.divf %395, %396 : vector<8x128xf32>
    %398 = vector.extract_strided_slice %386 {offsets = [0, 128], sizes = [8, 128], strides = [1, 1]} : vector<8x384xf32> to vector<8x128xf32>
    %399 = vector.extract_strided_slice %389 {offsets = [0, 128], sizes = [8, 128], strides = [1, 1]} : vector<8x384xf32> to vector<8x128xf32>
    %400 = arith.addf %398, %399 : vector<8x128xf32>
    %401 = arith.negf %400 : vector<8x128xf32>
    %402 = math.exp %401 : vector<8x128xf32>
    %cst_138 = arith.constant 1.000000e+00 : f32
    %403 = vector.broadcast %cst_138 : f32 to vector<8x128xf32>
    %404 = arith.addf %403, %402 : vector<8x128xf32>
    %405 = arith.divf %403, %404 : vector<8x128xf32>
    %406 = vector.extract_strided_slice %386 {offsets = [0, 256], sizes = [8, 128], strides = [1, 1]} : vector<8x384xf32> to vector<8x128xf32>
    %407 = vector.extract_strided_slice %389 {offsets = [0, 256], sizes = [8, 128], strides = [1, 1]} : vector<8x384xf32> to vector<8x128xf32>
    %408 = vector.broadcast %5 : vector<1x128xf32> to vector<8x128xf32>
    %409 = arith.addf %407, %408 : vector<8x128xf32>
    %410 = arith.mulf %397, %409 : vector<8x128xf32>
    %411 = arith.addf %406, %410 : vector<8x128xf32>
    %412 = math.tanh %411 : vector<8x128xf32>
    %cst_139 = arith.constant 1.000000e+00 : f32
    %413 = vector.broadcast %cst_139 : f32 to vector<8x128xf32>
    %414 = arith.subf %413, %405 : vector<8x128xf32>
    %415 = arith.mulf %414, %412 : vector<8x128xf32>
    %416 = arith.mulf %405, %356 : vector<8x128xf32>
    %417 = arith.addf %415, %416 : vector<8x128xf32>
    %418 = arith.truncf %417 : vector<8x128xf32> to vector<8x128xbf16>
    %c0_140 = arith.constant 0 : index
    %c0_141 = arith.constant 0 : index
    %419 = vector.load %arg9[%c0_140, %c0_141] : memref<128x128xbf16, #tpu.memory_space<vmem>>, vector<128x128xbf16>
    %cst_142 = arith.constant dense<0.000000e+00> : vector<8x128xf32>
    %420 = tpu.matmul %418, %419, %cst_142 {dimension_numbers = #tpu.dot_dimension_numbers<[1], [0], [0], [1], [0, 0, 1, 1], [], []>} : vector<8x128xbf16>, vector<128x128xbf16>, vector<8x128xf32> -> vector<8x128xf32>
    %421 = vector.broadcast %6 : vector<1x128xf32> to vector<8x128xf32>
    %422 = arith.addf %420, %421 : vector<8x128xf32>
    %423 = arith.truncf %422 : vector<8x128xf32> to vector<8x128xbf16>
    %424 = arith.index_cast %c6_i32 : i32 to index
    %c0_143 = arith.constant 0 : index
    %c0_144 = arith.constant 0 : index
    %425 = vector.load %arg11[%424, %c0_143, %c0_144] : memref<8x8x128xbf16, #tpu.memory_space<vmem>>, vector<1x8x128xbf16>
    %426 = vector.shape_cast %425 : vector<1x8x128xbf16> to vector<8x128xbf16>
    %427 = vector.shape_cast %423 : vector<8x128xbf16> to vector<1x8x128xbf16>
    tpu.vector_store %arg11[%424, %c0_143, %c0_144], %427 {strides = array<i32>} : memref<8x8x128xbf16, #tpu.memory_space<vmem>>, vector<1x8x128xbf16>,
    %cst_145 = arith.constant dense<0xFF800000> : vector<8xf32>
    %428 = vector.multi_reduction <maximumf>, %422, %cst_145 [1] : vector<8x128xf32> to vector<8xf32>
    %429 = vector.shape_cast %428 : vector<8xf32> to vector<8x1xf32>
    %430 = vector.broadcast %429 : vector<8x1xf32> to vector<8x128xf32>
    %431 = arith.subf %422, %430 : vector<8x128xf32>
    %432 = math.exp %431 : vector<8x128xf32>
    %cst_146 = arith.constant dense<0.000000e+00> : vector<8xf32>
    %433 = vector.multi_reduction <add>, %432, %cst_146 [1] : vector<8x128xf32> to vector<8xf32>
    %434 = vector.shape_cast %433 : vector<8xf32> to vector<8x1xf32>
    %435 = tpu.reciprocal %434 {approx = true} : vector<8x1xf32> -> vector<8x1xf32>
    %436 = arith.truncf %432 : vector<8x128xf32> to vector<8x128xbf16>
    %c7_i32 = arith.constant 7 : i32
    %c0_147 = arith.constant 0 : index
    %c0_148 = arith.constant 0 : index
    %437 = vector.load %arg3[%c0_147, %c0_148] : memref<128x128xbf16, #tpu.memory_space<vmem>>, vector<128x128xbf16>
    %cst_149 = arith.constant dense<0.000000e+00> : vector<8x128xf32>
    %438 = tpu.matmul %436, %437, %cst_149 {dimension_numbers = #tpu.dot_dimension_numbers<[1], [0], [0], [1], [0, 0, 1, 1], [], []>} : vector<8x128xbf16>, vector<128x128xbf16>, vector<8x128xf32> -> vector<8x128xf32>
    %439 = vector.broadcast %435 : vector<8x1xf32> to vector<8x128xf32>
    %440 = arith.mulf %438, %439 : vector<8x128xf32>
    %441 = vector.broadcast %3 : vector<1x128xf32> to vector<8x128xf32>
    %442 = arith.addf %440, %441 : vector<8x128xf32>
    %443 = arith.truncf %442 : vector<8x128xf32> to vector<8x128xbf16>
    %c0_150 = arith.constant 0 : index
    %c0_151 = arith.constant 0 : index
    %444 = vector.load %arg5[%c0_150, %c0_151] : memref<128x384xbf16, #tpu.memory_space<vmem>>, vector<128x384xbf16>
    %cst_152 = arith.constant dense<0.000000e+00> : vector<8x384xf32>
    %445 = tpu.matmul %443, %444, %cst_152 {dimension_numbers = #tpu.dot_dimension_numbers<[1], [0], [0], [1], [0, 0, 1, 1], [], []>} : vector<8x128xbf16>, vector<128x384xbf16>, vector<8x384xf32> -> vector<8x384xf32>
    %446 = vector.broadcast %4 : vector<1x384xf32> to vector<8x384xf32>
    %447 = arith.addf %445, %446 : vector<8x384xf32>
    %448 = arith.truncf %417 : vector<8x128xf32> to vector<8x128xbf16>
    %c0_153 = arith.constant 0 : index
    %c0_154 = arith.constant 0 : index
    %449 = vector.load %arg6[%c0_153, %c0_154] : memref<128x384xbf16, #tpu.memory_space<vmem>>, vector<128x384xbf16>
    %cst_155 = arith.constant dense<0.000000e+00> : vector<8x384xf32>
    %450 = tpu.matmul %448, %449, %cst_155 {dimension_numbers = #tpu.dot_dimension_numbers<[1], [0], [0], [1], [0, 0, 1, 1], [], []>} : vector<8x128xbf16>, vector<128x384xbf16>, vector<8x384xf32> -> vector<8x384xf32>
    %451 = vector.extract_strided_slice %447 {offsets = [0, 0], sizes = [8, 128], strides = [1, 1]} : vector<8x384xf32> to vector<8x128xf32>
    %452 = vector.extract_strided_slice %450 {offsets = [0, 0], sizes = [8, 128], strides = [1, 1]} : vector<8x384xf32> to vector<8x128xf32>
    %453 = arith.addf %451, %452 : vector<8x128xf32>
    %454 = arith.negf %453 : vector<8x128xf32>
    %455 = math.exp %454 : vector<8x128xf32>
    %cst_156 = arith.constant 1.000000e+00 : f32
    %456 = vector.broadcast %cst_156 : f32 to vector<8x128xf32>
    %457 = arith.addf %456, %455 : vector<8x128xf32>
    %458 = arith.divf %456, %457 : vector<8x128xf32>
    %459 = vector.extract_strided_slice %447 {offsets = [0, 128], sizes = [8, 128], strides = [1, 1]} : vector<8x384xf32> to vector<8x128xf32>
    %460 = vector.extract_strided_slice %450 {offsets = [0, 128], sizes = [8, 128], strides = [1, 1]} : vector<8x384xf32> to vector<8x128xf32>
    %461 = arith.addf %459, %460 : vector<8x128xf32>
    %462 = arith.negf %461 : vector<8x128xf32>
    %463 = math.exp %462 : vector<8x128xf32>
    %cst_157 = arith.constant 1.000000e+00 : f32
    %464 = vector.broadcast %cst_157 : f32 to vector<8x128xf32>
    %465 = arith.addf %464, %463 : vector<8x128xf32>
    %466 = arith.divf %464, %465 : vector<8x128xf32>
    %467 = vector.extract_strided_slice %447 {offsets = [0, 256], sizes = [8, 128], strides = [1, 1]} : vector<8x384xf32> to vector<8x128xf32>
    %468 = vector.extract_strided_slice %450 {offsets = [0, 256], sizes = [8, 128], strides = [1, 1]} : vector<8x384xf32> to vector<8x128xf32>
    %469 = vector.broadcast %5 : vector<1x128xf32> to vector<8x128xf32>
    %470 = arith.addf %468, %469 : vector<8x128xf32>
    %471 = arith.mulf %458, %470 : vector<8x128xf32>
    %472 = arith.addf %467, %471 : vector<8x128xf32>
    %473 = math.tanh %472 : vector<8x128xf32>
    %cst_158 = arith.constant 1.000000e+00 : f32
    %474 = vector.broadcast %cst_158 : f32 to vector<8x128xf32>
    %475 = arith.subf %474, %466 : vector<8x128xf32>
    %476 = arith.mulf %475, %473 : vector<8x128xf32>
    %477 = arith.mulf %466, %417 : vector<8x128xf32>
    %478 = arith.addf %476, %477 : vector<8x128xf32>
    %479 = arith.truncf %478 : vector<8x128xf32> to vector<8x128xbf16>
    %c0_159 = arith.constant 0 : index
    %c0_160 = arith.constant 0 : index
    %480 = vector.load %arg9[%c0_159, %c0_160] : memref<128x128xbf16, #tpu.memory_space<vmem>>, vector<128x128xbf16>
    %cst_161 = arith.constant dense<0.000000e+00> : vector<8x128xf32>
    %481 = tpu.matmul %479, %480, %cst_161 {dimension_numbers = #tpu.dot_dimension_numbers<[1], [0], [0], [1], [0, 0, 1, 1], [], []>} : vector<8x128xbf16>, vector<128x128xbf16>, vector<8x128xf32> -> vector<8x128xf32>
    %482 = vector.broadcast %6 : vector<1x128xf32> to vector<8x128xf32>
    %483 = arith.addf %481, %482 : vector<8x128xf32>
    %484 = arith.truncf %483 : vector<8x128xf32> to vector<8x128xbf16>
    %485 = arith.index_cast %c7_i32 : i32 to index
    %c0_162 = arith.constant 0 : index
    %c0_163 = arith.constant 0 : index
    %486 = vector.load %arg11[%485, %c0_162, %c0_163] : memref<8x8x128xbf16, #tpu.memory_space<vmem>>, vector<1x8x128xbf16>
    %487 = vector.shape_cast %486 : vector<1x8x128xbf16> to vector<8x128xbf16>
    %488 = vector.shape_cast %484 : vector<8x128xbf16> to vector<1x8x128xbf16>
    tpu.vector_store %arg11[%485, %c0_162, %c0_163], %488 {strides = array<i32>} : memref<8x8x128xbf16, #tpu.memory_space<vmem>>, vector<1x8x128xbf16>,
    %cst_164 = arith.constant dense<0xFF800000> : vector<8xf32>
    %489 = vector.multi_reduction <maximumf>, %483, %cst_164 [1] : vector<8x128xf32> to vector<8xf32>
    %490 = vector.shape_cast %489 : vector<8xf32> to vector<8x1xf32>
    %491 = vector.broadcast %490 : vector<8x1xf32> to vector<8x128xf32>
    %492 = arith.subf %483, %491 : vector<8x128xf32>
    %493 = math.exp %492 : vector<8x128xf32>
    %cst_165 = arith.constant dense<0.000000e+00> : vector<8xf32>
    %494 = vector.multi_reduction <add>, %493, %cst_165 [1] : vector<8x128xf32> to vector<8xf32>
    %495 = vector.shape_cast %494 : vector<8xf32> to vector<8x1xf32>
    %496 = tpu.reciprocal %495 {approx = true} : vector<8x1xf32> -> vector<8x1xf32>
    %497 = arith.truncf %493 : vector<8x128xf32> to vector<8x128xbf16>
    %c8_i32 = arith.constant 8 : i32
    %c0_166 = arith.constant 0 : index
    %c0_167 = arith.constant 0 : index
    %498 = vector.load %arg12[%c0_166, %c0_167] : memref<8x128xf32, #tpu.memory_space<vmem>>, vector<8x128xf32>
    tpu.vector_store %arg12[%c0_166, %c0_167], %478 {strides = array<i32>} : memref<8x128xf32, #tpu.memory_space<vmem>>, vector<8x128xf32>,
    %c0_168 = arith.constant 0 : index
    %c0_169 = arith.constant 0 : index
    %499 = vector.load %arg13[%c0_168, %c0_169] : memref<8x128xbf16, #tpu.memory_space<vmem>>, vector<8x128xbf16>
    tpu.vector_store %arg13[%c0_168, %c0_169], %497 {strides = array<i32>} : memref<8x128xbf16, #tpu.memory_space<vmem>>, vector<8x128xbf16>,
    %c0_170 = arith.constant 0 : index
    %c0_171 = arith.constant 0 : index
    %500 = vector.load %arg14[%c0_170, %c0_171] : memref<8x1xf32, #tpu.memory_space<vmem>>, vector<8x1xf32>
    tpu.vector_store %arg14[%c0_170, %c0_171], %496 {strides = array<i32>} : memref<8x1xf32, #tpu.memory_space<vmem>>, vector<8x1xf32>,
    return
  }
  func.func @transform_0(%arg0: i32, %arg1: i32) -> (i32, i32) {
    %c0_i32 = arith.constant 0 : i32
    %c0_i32_0 = arith.constant 0 : i32
    return %arg0, %c0_i32 : i32, i32
  }
  func.func @transform_1(%arg0: i32, %arg1: i32) -> (i32, i32) {
    %c0_i32 = arith.constant 0 : i32
    %c0_i32_0 = arith.constant 0 : i32
    %c0_i32_1 = arith.constant 0 : i32
    return %c0_i32, %c0_i32_0 : i32, i32
  }
  func.func @transform_2(%arg0: i32, %arg1: i32) -> (i32, i32) {
    %c0_i32 = arith.constant 0 : i32
    %c0_i32_0 = arith.constant 0 : i32
    %c0_i32_1 = arith.constant 0 : i32
    return %c0_i32, %c0_i32_0 : i32, i32
  }
  func.func @transform_3(%arg0: i32, %arg1: i32) -> (i32, i32) {
    %c0_i32 = arith.constant 0 : i32
    %c0_i32_0 = arith.constant 0 : i32
    %c0_i32_1 = arith.constant 0 : i32
    return %c0_i32, %c0_i32_0 : i32, i32
  }
  func.func @transform_4(%arg0: i32, %arg1: i32) -> (i32, i32) {
    %c0_i32 = arith.constant 0 : i32
    %c0_i32_0 = arith.constant 0 : i32
    %c0_i32_1 = arith.constant 0 : i32
    return %c0_i32, %c0_i32_0 : i32, i32
  }
  func.func @transform_5(%arg0: i32, %arg1: i32) -> (i32, i32) {
    %c0_i32 = arith.constant 0 : i32
    %c0_i32_0 = arith.constant 0 : i32
    %c0_i32_1 = arith.constant 0 : i32
    return %c0_i32, %c0_i32_0 : i32, i32
  }
  func.func @transform_6(%arg0: i32, %arg1: i32) -> (i32, i32) {
    %c0_i32 = arith.constant 0 : i32
    %c0_i32_0 = arith.constant 0 : i32
    %c0_i32_1 = arith.constant 0 : i32
    return %c0_i32, %c0_i32_0 : i32, i32
  }
  func.func @transform_7(%arg0: i32, %arg1: i32) -> (i32, i32) {
    %c0_i32 = arith.constant 0 : i32
    %c0_i32_0 = arith.constant 0 : i32
    %c0_i32_1 = arith.constant 0 : i32
    return %c0_i32, %c0_i32_0 : i32, i32
  }
  func.func @transform_8(%arg0: i32, %arg1: i32) -> (i32, i32) {
    %c0_i32 = arith.constant 0 : i32
    %c0_i32_0 = arith.constant 0 : i32
    %c0_i32_1 = arith.constant 0 : i32
    return %c0_i32, %c0_i32_0 : i32, i32
  }
  func.func @transform_9(%arg0: i32, %arg1: i32) -> (i32, i32, i32) {
    %c0_i32 = arith.constant 0 : i32
    %c0_i32_0 = arith.constant 0 : i32
    return %arg1, %arg0, %c0_i32 : i32, i32, i32
  }
}

</mosaic_0001>

<llo_original>
// kernel: rnn_decoder.1
$region0: #{rnn_decoder.1}
  #allocation0 [shape = 'u32[]', space=smem, size = 0x4, offset = 0x4, fixed_abs, tag = 'smem constant byte address 0x4 - core index']
  #allocation1 [shape = 'u32[144,128]{1,0:T(1,128)}', space=vmem, size = 0x12000, scoped, tag = 'internal scratch']
  #allocation2 [shape = 'f32[8,128]{1,0:T(8,128)}', space=vmem, size = 0x1000, scoped, tag = 'scratch operand']
  #allocation3 [shape = 'bf16[8,128]{1,0:T(8,128)(2,1)}', space=vmem, size = 0x800, scoped, tag = 'scratch operand']
  #allocation4 [shape = 'f32[8,1]{1,0:T(8,128)}', space=vmem, size = 0x1000, scoped, tag = 'scratch operand']
  %s0 = inlined_call_operand.vmem [shape: f32[8,128], index: 0, kind: input, shape index: {}]
  %s1 = inlined_call_operand.vmem [shape: bf16[128,128], index: 1, kind: input, shape index: {}]
  %s2 = inlined_call_operand.vmem [shape: f32[1,128], index: 2, kind: input, shape index: {}]
  %s3 = inlined_call_operand.vmem [shape: bf16[128,384], index: 3, kind: input, shape index: {}]
  %s4 = inlined_call_operand.vmem [shape: bf16[128,384], index: 4, kind: input, shape index: {}]
  %s5 = inlined_call_operand.vmem [shape: f32[1,384], index: 5, kind: input, shape index: {}]
  %s6 = inlined_call_operand.vmem [shape: f32[1,128], index: 6, kind: input, shape index: {}]
  %s7 = inlined_call_operand.vmem [shape: bf16[128,128], index: 7, kind: input, shape index: {}]
  %s8 = inlined_call_operand.vmem [shape: f32[1,128], index: 8, kind: input, shape index: {}]
  %s9 = inlined_call_operand.vmem [shape: bf16[8,8,128], index: 9, kind: output, shape index: {}]
  %s10 = sld [smem:[#allocation0]]
  $region50: #{rnn_decoder.1} parent=0
    _
  %s12 = ssub.s32 1, %s10
  %s13 = scalar_select 0, %s12, %s10
  // Predicated region
  $region2: #{rnn_decoder.1} parent=0 // pred_check
    _
  $region3: #{rnn_decoder.1} parent=0 // pred_check_branch
    %15 = sbr.rel (0) target = $region5
  $region4: #{rnn_decoder.1} parent=0 // pred_region
    _
  $region5: #{rnn_decoder.1} parent=0 // pred_fallthru
    _
  // Predicated region
  $region6: #{rnn_decoder.1} parent=0 // pred_check
    _
  $region7: #{rnn_decoder.1} parent=0 // pred_check_branch
    %17 = sbr.rel (0) target = $region9
  $region8: #{rnn_decoder.1} parent=0 // pred_region
    _
  $region9: #{rnn_decoder.1} parent=0 // pred_fallthru
    _
  // Predicated region
  $region10: #{rnn_decoder.1} parent=0 // pred_check
    _
  $region11: #{rnn_decoder.1} parent=0 // pred_check_branch
    %19 = sbr.rel (0) target = $region13
  $region12: #{rnn_decoder.1} parent=0 // pred_region
    _
  $region13: #{rnn_decoder.1} parent=0 // pred_fallthru
    _
  // Predicated region
  $region14: #{rnn_decoder.1} parent=0 // pred_check
    _
  $region15: #{rnn_decoder.1} parent=0 // pred_check_branch
    %21 = sbr.rel (0) target = $region17
  $region16: #{rnn_decoder.1} parent=0 // pred_region
    _
  $region17: #{rnn_decoder.1} parent=0 // pred_fallthru
    _
  // Predicated region
  $region18: #{rnn_decoder.1} parent=0 // pred_check
    _
  $region19: #{rnn_decoder.1} parent=0 // pred_check_branch
    %23 = sbr.rel (0) target = $region21
  $region20: #{rnn_decoder.1} parent=0 // pred_region
    _
  $region21: #{rnn_decoder.1} parent=0 // pred_fallthru
    _
  // Predicated region
  $region22: #{rnn_decoder.1} parent=0 // pred_check
    _
  $region23: #{rnn_decoder.1} parent=0 // pred_check_branch
    %25 = sbr.rel (0) target = $region25
  $region24: #{rnn_decoder.1} parent=0 // pred_region
    _
  $region25: #{rnn_decoder.1} parent=0 // pred_fallthru
    _
  // Predicated region
  $region26: #{rnn_decoder.1} parent=0 // pred_check
    _
  $region27: #{rnn_decoder.1} parent=0 // pred_check_branch
    %27 = sbr.rel (0) target = $region29
  $region28: #{rnn_decoder.1} parent=0 // pred_region
    _
  $region29: #{rnn_decoder.1} parent=0 // pred_fallthru
    _
  // Predicated region
  $region30: #{rnn_decoder.1} parent=0 // pred_check
    _
  $region31: #{rnn_decoder.1} parent=0 // pred_check_branch
    %29 = sbr.rel (0) target = $region33
  $region32: #{rnn_decoder.1} parent=0 // pred_region
    _
  $region33: #{rnn_decoder.1} parent=0 // pred_fallthru
    _
  // Predicated region
  $region34: #{rnn_decoder.1} parent=0 // pred_check
    _
  $region35: #{rnn_decoder.1} parent=0 // pred_check_branch
    %31 = sbr.rel (0) target = $region37
  $region36: #{rnn_decoder.1} parent=0 // pred_region
    _
  $region37: #{rnn_decoder.1} parent=0 // pred_fallthru
    _
  %p33 = scmp.eq.s32.totalorder 0, 0
  // Predicated region
  $region38: #{rnn_decoder.1} parent=0 // pred_check
    %p34 = pneg %p33
  $region39: #{rnn_decoder.1} parent=0 // pred_check_branch
    %36 = sbr.rel (%p34) target = $region41
  $region40: #{rnn_decoder.1} parent=0 // pred_region
    %v37 = vld [vmem:[%s0] sm:$0xff]
    %38 = vst [vmem:[#allocation2] sm:$0xff] %v37
    %39 = vst [vmem:[#allocation3] sm:$0xf] 0
    %vm40 = vcmask 7168
    %41 = vst.msk [vmem:[#allocation4] sm:$0xff] %vm40, 1.0
  $region41: #{rnn_decoder.1} parent=0 // pred_fallthru
    _
  %v42 = vld [vmem:[%s2] sm:$0x1]
  %v43 = vld [vmem:[%s5] sm:$0x7]
  %v44 = vld [vmem:[%s6] sm:$0x1]
  %v45 = vld [vmem:[%s8] sm:$0x1]
  %v46 = vld [vmem:[#allocation2] sm:$0xff]
  %v47 = vld [vmem:[#allocation3] sm:$0xf]
  %v48 = vld [vmem:[#allocation4] sm:$0xff]
  %v49 = vld [vmem:[%s1] sm:$0xf]
  %v50 = vld [vmem:[%s1 + $0x4] sm:$0xf]
  %v51 = vld [vmem:[%s1 + $0x8] sm:$0xf]
  %v52 = vld [vmem:[%s1 + $0xc] sm:$0xf]
  %v53 = vld [vmem:[%s1 + $0x10] sm:$0xf]
  %v54 = vld [vmem:[%s1 + $0x14] sm:$0xf]
  %v55 = vld [vmem:[%s1 + $0x18] sm:$0xf]
  %v56 = vld [vmem:[%s1 + $0x1c] sm:$0xf]
  %v57 = vld [vmem:[%s1 + $0x20] sm:$0xf]
  %v58 = vld [vmem:[%s1 + $0x24] sm:$0xf]
  %v59 = vld [vmem:[%s1 + $0x28] sm:$0xf]
  %v60 = vld [vmem:[%s1 + $0x2c] sm:$0xf]
  %v61 = vld [vmem:[%s1 + $0x30] sm:$0xf]
  %v62 = vld [vmem:[%s1 + $0x34] sm:$0xf]
  %v63 = vld [vmem:[%s1 + $0x38] sm:$0xf]
  %v64 = vld [vmem:[%s1 + $0x3c] sm:$0xf]
  %v81 = vunpack.c.l.b16 %v49
  %v82 = vunpack.c.l.b16 %v50
  %v83 = vunpack.c.l.b16 %v51
  %v84 = vunpack.c.l.b16 %v52
  %v85 = vunpack.c.l.b16 %v53
  %v86 = vunpack.c.l.b16 %v54
  %v87 = vunpack.c.l.b16 %v55
  %v88 = vunpack.c.l.b16 %v56
  %v89 = vunpack.c.l.b16 %v57
  %v90 = vunpack.c.l.b16 %v58
  %v91 = vunpack.c.l.b16 %v59
  %v92 = vunpack.c.l.b16 %v60
  %v93 = vunpack.c.l.b16 %v61
  %v94 = vunpack.c.l.b16 %v62
  %v95 = vunpack.c.l.b16 %v63
  %v96 = vunpack.c.l.b16 %v64
  %v97 = vpack.c.b16 %v82, %v81
  %v98 = vpack.c.b16 %v84, %v83
  %v99 = vpack.c.b16 %v86, %v85
  %v100 = vpack.c.b16 %v88, %v87
  %v101 = vpack.c.b16 %v90, %v89
  %v102 = vpack.c.b16 %v92, %v91
  %v103 = vpack.c.b16 %v94, %v93
  %v104 = vpack.c.b16 %v96, %v95
  %113 = vmatprep.subr.bf16.mxu0 0
  %114 = vmatpush1.bf16.msra.mxu0 %v97
  %115 = vmatprep.subr.bf16.mxu0 0
  %116 = vmatpush1.bf16.msra.mxu0 %v98
  %117 = vmatprep.subr.bf16.mxu0 0
  %118 = vmatpush1.bf16.msra.mxu0 %v99
  %119 = vmatprep.subr.bf16.mxu0 0
  %120 = vmatpush1.bf16.msra.mxu0 %v100
  %121 = vmatprep.subr.bf16.mxu0 0
  %122 = vmatpush1.bf16.msra.mxu0 %v101
  %123 = vmatprep.subr.bf16.mxu0 0
  %124 = vmatpush1.bf16.msra.mxu0 %v102
  %125 = vmatprep.subr.bf16.mxu0 0
  %126 = vmatpush1.bf16.msra.mxu0 %v103
  %127 = vmatprep.subr.bf16.mxu0 0
  %128 = vmatpush1.bf16.msra.mxu0 %v104
  %129 = vmatprep.subr.bf16.mxu0 0
  %130 = vmatpush1.bf16.msra.mxu0 0
  %131 = vmatprep.subr.bf16.mxu0 0
  %132 = vmatpush1.bf16.msra.mxu0 0
  %133 = vmatprep.subr.bf16.mxu0 0
  %134 = vmatpush1.bf16.msra.mxu0 0
  %135 = vmatprep.subr.bf16.mxu0 0
  %136 = vmatpush1.bf16.msra.mxu0 0
  %137 = vmatprep.subr.bf16.mxu0 0
  %138 = vmatpush1.bf16.msra.mxu0 0
  %139 = vmatprep.subr.bf16.mxu0 0
  %140 = vmatpush1.bf16.msra.mxu0 0
  %141 = vmatprep.subr.bf16.mxu0 0
  %142 = vmatpush1.bf16.msra.mxu0 0
  %143 = vmatprep.subr.bf16.mxu0 0
  %144 = vmatpush1.bf16.msra.mxu0 0
  %145 = vmatprep.mubr.bf16.mxu0 0
  %146 = vmatmul.mubr.bf16.gmra.mrb[0].mxu0 %v47
  %v147 = vpop.f32.mrb[0].mxu0
  %v148 = vadd.f32 0.0, %v147
  %v149 = vpop.f32.mrb[0].mxu0
  %v150 = vpop.f32.mrb[0].mxu0
  %v151 = vpop.f32.mrb[0].mxu0
  %152 = vdwg.mxu0
  %154 = vset.pattern.permute.xlu0 0
  %155 = vperm.xlu0 %154, %v48
  %v156 = vpop.permute.xlu0 %155
  %v158 = vmul.f32 %v148, %v156
  %v160 = vlaneseq
  %v161 = vshrl.u32 %v160, 7
  %v162 = vsub.s32 0, %v161
  %v163 = vrot.slane %v42, %v162
  %v165 = vadd.f32 %v158, %v163
  %v166 = vpack.c.bf16 %v165, %v165
  %v167 = vld [vmem:[%s3] sm:$0xff]
  %v168 = vld [vmem:[%s3 + $0x8] sm:$0xf]
  %v169 = vld [vmem:[%s3 + $0xc] sm:$0xff]
  %v170 = vld [vmem:[%s3 + $0x14] sm:$0xf]
  %v171 = vld [vmem:[%s3 + $0x18] sm:$0xff]
  %v172 = vld [vmem:[%s3 + $0x20] sm:$0xf]
  %v173 = vld [vmem:[%s3 + $0x24] sm:$0xff]
  %v174 = vld [vmem:[%s3 + $0x2c] sm:$0xf]
  %v175 = vld [vmem:[%s3 + $0x30] sm:$0xff]
  %v176 = vld [vmem:[%s3 + $0x38] sm:$0xf]
  %v177 = vld [vmem:[%s3 + $0x3c] sm:$0xff]
  %v178 = vld [vmem:[%s3 + $0x44] sm:$0xf]
  %v179 = vld [vmem:[%s3 + $0x48] sm:$0xff]
  %v180 = vld [vmem:[%s3 + $0x50] sm:$0xf]
  %v181 = vld [vmem:[%s3 + $0x54] sm:$0xff]
  %v182 = vld [vmem:[%s3 + $0x5c] sm:$0xf]
  %v183 = vld [vmem:[%s3 + $0x60] sm:$0xff]
  %v184 = vld [vmem:[%s3 + $0x68] sm:$0xf]
  %v185 = vld [vmem:[%s3 + $0x6c] sm:$0xff]
  %v186 = vld [vmem:[%s3 + $0x74] sm:$0xf]
  %v187 = vld [vmem:[%s3 + $0x78] sm:$0xff]
  %v188 = vld [vmem:[%s3 + $0x80] sm:$0xf]
  %v189 = vld [vmem:[%s3 + $0x84] sm:$0xff]
  %v190 = vld [vmem:[%s3 + $0x8c] sm:$0xf]
  %v191 = vld [vmem:[%s3 + $0x90] sm:$0xff]
  %v192 = vld [vmem:[%s3 + $0x98] sm:$0xf]
  %v193 = vld [vmem:[%s3 + $0x9c] sm:$0xff]
  %v194 = vld [vmem:[%s3 + $0xa4] sm:$0xf]
  %v195 = vld [vmem:[%s3 + $0xa8] sm:$0xff]
  %v196 = vld [vmem:[%s3 + $0xb0] sm:$0xf]
  %v197 = vld [vmem:[%s3 + $0xb4] sm:$0xff]
  %v198 = vld [vmem:[%s3 + $0xbc] sm:$0xf]
  %v200 = vlaneseq
  %v201 = vshrl.u32 %v200, 7
  %v202 = vsub.s32 0, %v201
  %v203 = vrot.slane %v43, %v202
  %v204 = vlaneseq
  %v205 = vshrl.u32 %v204, 7
  %v206 = vsub.s32 1, %v205
  %v207 = vrot.slane %v43, %v206
  %v208 = vlaneseq
  %v209 = vshrl.u32 %v208, 7
  %v210 = vsub.s32 2, %v209
  %v211 = vrot.slane %v43, %v210
  %v247 = vunpack.c.l.b16 %v167
  %v248 = vunpack.c.h.b16 %v167
  %v249 = vunpack.c.l.b16 %v168
  %v250 = vunpack.c.l.b16 %v169
  %v251 = vunpack.c.h.b16 %v169
  %v252 = vunpack.c.l.b16 %v170
  %v253 = vunpack.c.l.b16 %v171
  %v254 = vunpack.c.h.b16 %v171
  %v255 = vunpack.c.l.b16 %v172
  %v256 = vunpack.c.l.b16 %v173
  %v257 = vunpack.c.h.b16 %v173
  %v258 = vunpack.c.l.b16 %v174
  %v259 = vunpack.c.l.b16 %v175
  %v260 = vunpack.c.h.b16 %v175
  %v261 = vunpack.c.l.b16 %v176
  %v262 = vunpack.c.l.b16 %v177
  %v263 = vunpack.c.h.b16 %v177
  %v264 = vunpack.c.l.b16 %v178
  %v265 = vunpack.c.l.b16 %v179
  %v266 = vunpack.c.h.b16 %v179
  %v267 = vunpack.c.l.b16 %v180
  %v268 = vunpack.c.l.b16 %v181
  %v269 = vunpack.c.h.b16 %v181
  %v270 = vunpack.c.l.b16 %v182
  %v271 = vunpack.c.l.b16 %v183
  %v272 = vunpack.c.h.b16 %v183
  %v273 = vunpack.c.l.b16 %v184
  %v274 = vunpack.c.l.b16 %v185
  %v275 = vunpack.c.h.b16 %v185
  %v276 = vunpack.c.l.b16 %v186
  %v277 = vunpack.c.l.b16 %v187
  %v278 = vunpack.c.h.b16 %v187
  %v279 = vunpack.c.l.b16 %v188
  %v280 = vunpack.c.l.b16 %v189
  %v281 = vunpack.c.h.b16 %v189
  %v282 = vunpack.c.l.b16 %v190
  %v283 = vunpack.c.l.b16 %v191
  %v284 = vunpack.c.h.b16 %v191
  %v285 = vunpack.c.l.b16 %v192
  %v286 = vunpack.c.l.b16 %v193
  %v287 = vunpack.c.h.b16 %v193
  %v288 = vunpack.c.l.b16 %v194
  %v289 = vunpack.c.l.b16 %v195
  %v290 = vunpack.c.h.b16 %v195
  %v291 = vunpack.c.l.b16 %v196
  %v292 = vunpack.c.l.b16 %v197
  %v293 = vunpack.c.h.b16 %v197
  %v294 = vunpack.c.l.b16 %v198
  %v295 = vpack.c.b16 %v250, %v247
  %v296 = vpack.c.b16 %v251, %v248
  %v297 = vpack.c.b16 %v252, %v249
  %v298 = vpack.c.b16 %v256, %v253
  %v299 = vpack.c.b16 %v257, %v254
  %v300 = vpack.c.b16 %v258, %v255
  %v301 = vpack.c.b16 %v262, %v259
  %v302 = vpack.c.b16 %v263, %v260
  %v303 = vpack.c.b16 %v264, %v261
  %v304 = vpack.c.b16 %v268, %v265
  %v305 = vpack.c.b16 %v269, %v266
  %v306 = vpack.c.b16 %v270, %v267
  %v307 = vpack.c.b16 %v274, %v271
  %v308 = vpack.c.b16 %v275, %v272
  %v309 = vpack.c.b16 %v276, %v273
  %v310 = vpack.c.b16 %v280, %v277
  %v311 = vpack.c.b16 %v281, %v278
  %v312 = vpack.c.b16 %v282, %v279
  %v313 = vpack.c.b16 %v286, %v283
  %v314 = vpack.c.b16 %v287, %v284
  %v315 = vpack.c.b16 %v288, %v285
  %v316 = vpack.c.b16 %v292, %v289
  %v317 = vpack.c.b16 %v293, %v290
  %v318 = vpack.c.b16 %v294, %v291
  %343 = vmatprep.subr.bf16.mxu0 %v296
  %344 = vmatpush1.bf16.msra.mxu0 %v295
  %345 = vmatprep.subr.bf16.mxu0 %v299
  %346 = vmatpush1.bf16.msra.mxu0 %v298
  %347 = vmatprep.subr.bf16.mxu0 %v302
  %348 = vmatpush1.bf16.msra.mxu0 %v301
  %349 = vmatprep.subr.bf16.mxu0 %v305
  %350 = vmatpush1.bf16.msra.mxu0 %v304
  %351 = vmatprep.subr.bf16.mxu0 %v308
  %352 = vmatpush1.bf16.msra.mxu0 %v307
  %353 = vmatprep.subr.bf16.mxu0 %v311
  %354 = vmatpush1.bf16.msra.mxu0 %v310
  %355 = vmatprep.subr.bf16.mxu0 %v314
  %356 = vmatpush1.bf16.msra.mxu0 %v313
  %357 = vmatprep.subr.bf16.mxu0 %v317
  %358 = vmatpush1.bf16.msra.mxu0 %v316
  %359 = vmatprep.subr.bf16.mxu0 0
  %360 = vmatpush1.bf16.msra.mxu0 0
  %361 = vmatprep.subr.bf16.mxu0 0
  %362 = vmatpush1.bf16.msra.mxu0 0
  %363 = vmatprep.subr.bf16.mxu0 0
  %364 = vmatpush1.bf16.msra.mxu0 0
  %365 = vmatprep.subr.bf16.mxu0 0
  %366 = vmatpush1.bf16.msra.mxu0 0
  %367 = vmatprep.subr.bf16.mxu0 0
  %368 = vmatpush1.bf16.msra.mxu0 0
  %369 = vmatprep.subr.bf16.mxu0 0
  %370 = vmatpush1.bf16.msra.mxu0 0
  %371 = vmatprep.subr.bf16.mxu0 0
  %372 = vmatpush1.bf16.msra.mxu0 0
  %373 = vmatprep.subr.bf16.mxu0 0
  %374 = vmatpush1.bf16.msra.mxu0 0
  %375 = vmatprep.mubr.bf16.mxu0 0
  %376 = vmatmul.mubr.bf16.gmra.mrb[0].mxu0 %v166
  %v377 = vpop.f32.mrb[0].mxu0
  %v378 = vadd.f32 %v203, %v377
  %v379 = vpop.f32.mrb[0].mxu0
  %v380 = vadd.f32 %v207, %v379
  %v381 = vpop.f32.mrb[0].mxu0
  %v382 = vpop.f32.mrb[0].mxu0
  %383 = vdwg.mxu0
  %384 = vmatprep.subr.bf16.mxu0 0
  %385 = vmatpush1.bf16.msra.mxu0 %v297
  %386 = vmatprep.subr.bf16.mxu0 0
  %387 = vmatpush1.bf16.msra.mxu0 %v300
  %388 = vmatprep.subr.bf16.mxu0 0
  %389 = vmatpush1.bf16.msra.mxu0 %v303
  %390 = vmatprep.subr.bf16.mxu0 0
  %391 = vmatpush1.bf16.msra.mxu0 %v306
  %392 = vmatprep.subr.bf16.mxu0 0
  %393 = vmatpush1.bf16.msra.mxu0 %v309
  %394 = vmatprep.subr.bf16.mxu0 0
  %395 = vmatpush1.bf16.msra.mxu0 %v312
  %396 = vmatprep.subr.bf16.mxu0 0
  %397 = vmatpush1.bf16.msra.mxu0 %v315
  %398 = vmatprep.subr.bf16.mxu0 0
  %399 = vmatpush1.bf16.msra.mxu0 %v318
  %400 = vmatprep.subr.bf16.mxu0 0
  %401 = vmatpush1.bf16.msra.mxu0 0
  %402 = vmatprep.subr.bf16.mxu0 0
  %403 = vmatpush1.bf16.msra.mxu0 0
  %404 = vmatprep.subr.bf16.mxu0 0
  %405 = vmatpush1.bf16.msra.mxu0 0
  %406 = vmatprep.subr.bf16.mxu0 0
  %407 = vmatpush1.bf16.msra.mxu0 0
  %408 = vmatprep.subr.bf16.mxu0 0
  %409 = vmatpush1.bf16.msra.mxu0 0
  %410 = vmatprep.subr.bf16.mxu0 0
  %411 = vmatpush1.bf16.msra.mxu0 0
  %412 = vmatprep.subr.bf16.mxu0 0
  %413 = vmatpush1.bf16.msra.mxu0 0
  %414 = vmatprep.subr.bf16.mxu0 0
  %415 = vmatpush1.bf16.msra.mxu0 0
  %416 = vmatprep.mubr.bf16.mxu0 0
  %417 = vmatmul.mubr.bf16.gmra.mrb[0].mxu0 %v166
  %v418 = vpop.f32.mrb[0].mxu0
  %v419 = vadd.f32 %v211, %v418
  %v420 = vpop.f32.mrb[0].mxu0
  %v421 = vpop.f32.mrb[0].mxu0
  %v422 = vpop.f32.mrb[0].mxu0
  %423 = vdwg.mxu0
  %v424 = vpack.c.bf16 %v46, %v46
  %v425 = vld [vmem:[%s4] sm:$0xff]
  %v426 = vld [vmem:[%s4 + $0x8] sm:$0xf]
  %v427 = vld [vmem:[%s4 + $0xc] sm:$0xff]
  %v428 = vld [vmem:[%s4 + $0x14] sm:$0xf]
  %v429 = vld [vmem:[%s4 + $0x18] sm:$0xff]
  %v430 = vld [vmem:[%s4 + $0x20] sm:$0xf]
  %v431 = vld [vmem:[%s4 + $0x24] sm:$0xff]
  %v432 = vld [vmem:[%s4 + $0x2c] sm:$0xf]
  %v433 = vld [vmem:[%s4 + $0x30] sm:$0xff]
  %v434 = vld [vmem:[%s4 + $0x38] sm:$0xf]
  %v435 = vld [vmem:[%s4 + $0x3c] sm:$0xff]
  %v436 = vld [vmem:[%s4 + $0x44] sm:$0xf]
  %v437 = vld [vmem:[%s4 + $0x48] sm:$0xff]
  %v438 = vld [vmem:[%s4 + $0x50] sm:$0xf]
  %v439 = vld [vmem:[%s4 + $0x54] sm:$0xff]
  %v440 = vld [vmem:[%s4 + $0x5c] sm:$0xf]
  %v441 = vld [vmem:[%s4 + $0x60] sm:$0xff]
  %v442 = vld [vmem:[%s4 + $0x68] sm:$0xf]
  %v443 = vld [vmem:[%s4 + $0x6c] sm:$0xff]
  %v444 = vld [vmem:[%s4 + $0x74] sm:$0xf]
  %v445 = vld [vmem:[%s4 + $0x78] sm:$0xff]
  %v446 = vld [vmem:[%s4 + $0x80] sm:$0xf]
  %v447 = vld [vmem:[%s4 + $0x84] sm:$0xff]
  %v448 = vld [vmem:[%s4 + $0x8c] sm:$0xf]
  %v449 = vld [vmem:[%s4 + $0x90] sm:$0xff]
  %v450 = vld [vmem:[%s4 + $0x98] sm:$0xf]
  %v451 = vld [vmem:[%s4 + $0x9c] sm:$0xff]
  %v452 = vld [vmem:[%s4 + $0xa4] sm:$0xf]
  %v453 = vld [vmem:[%s4 + $0xa8] sm:$0xff]
  %v454 = vld [vmem:[%s4 + $0xb0] sm:$0xf]
  %v455 = vld [vmem:[%s4 + $0xb4] sm:$0xff]
  %v456 = vld [vmem:[%s4 + $0xbc] sm:$0xf]
  %v489 = vunpack.c.l.b16 %v425
  %v490 = vunpack.c.h.b16 %v425
  %v491 = vunpack.c.l.b16 %v426
  %v492 = vunpack.c.l.b16 %v427
  %v493 = vunpack.c.h.b16 %v427
  %v494 = vunpack.c.l.b16 %v428
  %v495 = vunpack.c.l.b16 %v429
  %v496 = vunpack.c.h.b16 %v429
  %v497 = vunpack.c.l.b16 %v430
  %v498 = vunpack.c.l.b16 %v431
  %v499 = vunpack.c.h.b16 %v431
  %v500 = vunpack.c.l.b16 %v432
  %v501 = vunpack.c.l.b16 %v433
  %v502 = vunpack.c.h.b16 %v433
  %v503 = vunpack.c.l.b16 %v434
  %v504 = vunpack.c.l.b16 %v435
  %v505 = vunpack.c.h.b16 %v435
  %v506 = vunpack.c.l.b16 %v436
  %v507 = vunpack.c.l.b16 %v437
  %v508 = vunpack.c.h.b16 %v437
  %v509 = vunpack.c.l.b16 %v438
  %v510 = vunpack.c.l.b16 %v439
  %v511 = vunpack.c.h.b16 %v439
  %v512 = vunpack.c.l.b16 %v440
  %v513 = vunpack.c.l.b16 %v441
  %v514 = vunpack.c.h.b16 %v441
  %v515 = vunpack.c.l.b16 %v442
  %v516 = vunpack.c.l.b16 %v443
  %v517 = vunpack.c.h.b16 %v443
  %v518 = vunpack.c.l.b16 %v444
  %v519 = vunpack.c.l.b16 %v445
  %v520 = vunpack.c.h.b16 %v445
  %v521 = vunpack.c.l.b16 %v446
  %v522 = vunpack.c.l.b16 %v447
  %v523 = vunpack.c.h.b16 %v447
  %v524 = vunpack.c.l.b16 %v448
  %v525 = vunpack.c.l.b16 %v449
  %v526 = vunpack.c.h.b16 %v449
  %v527 = vunpack.c.l.b16 %v450
  %v528 = vunpack.c.l.b16 %v451
  %v529 = vunpack.c.h.b16 %v451
  %v530 = vunpack.c.l.b16 %v452
  %v531 = vunpack.c.l.b16 %v453
  %v532 = vunpack.c.h.b16 %v453
  %v533 = vunpack.c.l.b16 %v454
  %v534 = vunpack.c.l.b16 %v455
  %v535 = vunpack.c.h.b16 %v455
  %v536 = vunpack.c.l.b16 %v456
  %v537 = vpack.c.b16 %v492, %v489
  %v538 = vpack.c.b16 %v493, %v490
  %v539 = vpack.c.b16 %v494, %v491
  %v540 = vpack.c.b16 %v498, %v495
  %v541 = vpack.c.b16 %v499, %v496
  %v542 = vpack.c.b16 %v500, %v497
  %v543 = vpack.c.b16 %v504, %v501
  %v544 = vpack.c.b16 %v505, %v502
  %v545 = vpack.c.b16 %v506, %v503
  %v546 = vpack.c.b16 %v510, %v507
  %v547 = vpack.c.b16 %v511, %v508
  %v548 = vpack.c.b16 %v512, %v509
  %v549 = vpack.c.b16 %v516, %v513
  %v550 = vpack.c.b16 %v517, %v514
  %v551 = vpack.c.b16 %v518, %v515
  %v552 = vpack.c.b16 %v522, %v519
  %v553 = vpack.c.b16 %v523, %v520
  %v554 = vpack.c.b16 %v524, %v521
  %v555 = vpack.c.b16 %v528, %v525
  %v556 = vpack.c.b16 %v529, %v526
  %v557 = vpack.c.b16 %v530, %v527
  %v558 = vpack.c.b16 %v534, %v531
  %v559 = vpack.c.b16 %v535, %v532
  %v560 = vpack.c.b16 %v536, %v533
  %585 = vmatprep.subr.bf16.mxu0 %v538
  %586 = vmatpush1.bf16.msra.mxu0 %v537
  %587 = vmatprep.subr.bf16.mxu0 %v541
  %588 = vmatpush1.bf16.msra.mxu0 %v540
  %589 = vmatprep.subr.bf16.mxu0 %v544
  %590 = vmatpush1.bf16.msra.mxu0 %v543
  %591 = vmatprep.subr.bf16.mxu0 %v547
  %592 = vmatpush1.bf16.msra.mxu0 %v546
  %593 = vmatprep.subr.bf16.mxu0 %v550
  %594 = vmatpush1.bf16.msra.mxu0 %v549
  %595 = vmatprep.subr.bf16.mxu0 %v553
  %596 = vmatpush1.bf16.msra.mxu0 %v552
  %597 = vmatprep.subr.bf16.mxu0 %v556
  %598 = vmatpush1.bf16.msra.mxu0 %v555
  %599 = vmatprep.subr.bf16.mxu0 %v559
  %600 = vmatpush1.bf16.msra.mxu0 %v558
  %601 = vmatprep.subr.bf16.mxu0 0
  %602 = vmatpush1.bf16.msra.mxu0 0
  %603 = vmatprep.subr.bf16.mxu0 0
  %604 = vmatpush1.bf16.msra.mxu0 0
  %605 = vmatprep.subr.bf16.mxu0 0
  %606 = vmatpush1.bf16.msra.mxu0 0
  %607 = vmatprep.subr.bf16.mxu0 0
  %608 = vmatpush1.bf16.msra.mxu0 0
  %609 = vmatprep.subr.bf16.mxu0 0
  %610 = vmatpush1.bf16.msra.mxu0 0
  %611 = vmatprep.subr.bf16.mxu0 0
  %612 = vmatpush1.bf16.msra.mxu0 0
  %613 = vmatprep.subr.bf16.mxu0 0
  %614 = vmatpush1.bf16.msra.mxu0 0
  %615 = vmatprep.subr.bf16.mxu0 0
  %616 = vmatpush1.bf16.msra.mxu0 0
  %617 = vmatprep.mubr.bf16.mxu0 0
  %618 = vmatmul.mubr.bf16.gmra.mrb[0].mxu0 %v424
  %v619 = vpop.f32.mrb[0].mxu0
  %v620 = vadd.f32 0.0, %v619
  %v621 = vpop.f32.mrb[0].mxu0
  %v622 = vadd.f32 0.0, %v621
  %v623 = vpop.f32.mrb[0].mxu0
  %v624 = vpop.f32.mrb[0].mxu0
  %625 = vdwg.mxu0
  %626 = vmatprep.subr.bf16.mxu0 0
  %627 = vmatpush1.bf16.msra.mxu0 %v539
  %628 = vmatprep.subr.bf16.mxu0 0
  %629 = vmatpush1.bf16.msra.mxu0 %v542
  %630 = vmatprep.subr.bf16.mxu0 0
  %631 = vmatpush1.bf16.msra.mxu0 %v545
  %632 = vmatprep.subr.bf16.mxu0 0
  %633 = vmatpush1.bf16.msra.mxu0 %v548
  %634 = vmatprep.subr.bf16.mxu0 0
  %635 = vmatpush1.bf16.msra.mxu0 %v551
  %636 = vmatprep.subr.bf16.mxu0 0
  %637 = vmatpush1.bf16.msra.mxu0 %v554
  %638 = vmatprep.subr.bf16.mxu0 0
  %639 = vmatpush1.bf16.msra.mxu0 %v557
  %640 = vmatprep.subr.bf16.mxu0 0
  %641 = vmatpush1.bf16.msra.mxu0 %v560
  %642 = vmatprep.subr.bf16.mxu0 0
  %643 = vmatpush1.bf16.msra.mxu0 0
  %644 = vmatprep.subr.bf16.mxu0 0
  %645 = vmatpush1.bf16.msra.mxu0 0
  %646 = vmatprep.subr.bf16.mxu0 0
  %647 = vmatpush1.bf16.msra.mxu0 0
  %648 = vmatprep.subr.bf16.mxu0 0
  %649 = vmatpush1.bf16.msra.mxu0 0
  %650 = vmatprep.subr.bf16.mxu0 0
  %651 = vmatpush1.bf16.msra.mxu0 0
  %652 = vmatprep.subr.bf16.mxu0 0
  %653 = vmatpush1.bf16.msra.mxu0 0
  %654 = vmatprep.subr.bf16.mxu0 0
  %655 = vmatpush1.bf16.msra.mxu0 0
  %656 = vmatprep.subr.bf16.mxu0 0
  %657 = vmatpush1.bf16.msra.mxu0 0
  %658 = vmatprep.mubr.bf16.mxu0 0
  %659 = vmatmul.mubr.bf16.gmra.mrb[0].mxu0 %v424
  %v660 = vpop.f32.mrb[0].mxu0
  %v661 = vadd.f32 0.0, %v660
  %v662 = vpop.f32.mrb[0].mxu0
  %v663 = vpop.f32.mrb[0].mxu0
  %v664 = vpop.f32.mrb[0].mxu0
  %665 = vdwg.mxu0
  %v666 = vadd.f32 %v378, %v620
  %v667 = vxor.u32 %v666, 2147483648
  %v668 = vmul.f32 %v667, 1.442695
  %v669 = vpow.pop %v668
  %v670 = vadd.f32 %v669, 1.0
  %v671 = vrcp.pop %v670
  %v672 = vmul.f32 1.0, %v671
  %v673 = vadd.f32 %v380, %v622
  %v674 = vxor.u32 %v673, 2147483648
  %v675 = vmul.f32 %v674, 1.442695
  %v676 = vpow.pop %v675
  %v677 = vadd.f32 %v676, 1.0
  %v678 = vrcp.pop %v677
  %v679 = vmul.f32 1.0, %v678
  %v681 = vlaneseq
  %v682 = vshrl.u32 %v681, 7
  %v683 = vsub.s32 0, %v682
  %v684 = vrot.slane %v44, %v683
  %v686 = vadd.f32 %v661, %v684
  %v687 = vmul.f32 %v672, %v686
  %v688 = vadd.f32 %v419, %v687
  %v689 = vtanh.pop %v688
  %v690 = vsub.f32 1.0, %v679
  %v691 = vmul.f32 %v690, %v689
  %v692 = vmul.f32 %v679, %v46
  %v693 = vadd.f32 %v691, %v692
  %v694 = vpack.c.bf16 %v693, %v693
  %v695 = vld [vmem:[%s7] sm:$0xf]
  %v696 = vld [vmem:[%s7 + $0x4] sm:$0xf]
  %v697 = vld [vmem:[%s7 + $0x8] sm:$0xf]
  %v698 = vld [vmem:[%s7 + $0xc] sm:$0xf]
  %v699 = vld [vmem:[%s7 + $0x10] sm:$0xf]
  %v700 = vld [vmem:[%s7 + $0x14] sm:$0xf]
  %v701 = vld [vmem:[%s7 + $0x18] sm:$0xf]
  %v702 = vld [vmem:[%s7 + $0x1c] sm:$0xf]
  %v703 = vld [vmem:[%s7 + $0x20] sm:$0xf]
  %v704 = vld [vmem:[%s7 + $0x24] sm:$0xf]
  %v705 = vld [vmem:[%s7 + $0x28] sm:$0xf]
  %v706 = vld [vmem:[%s7 + $0x2c] sm:$0xf]
  %v707 = vld [vmem:[%s7 + $0x30] sm:$0xf]
  %v708 = vld [vmem:[%s7 + $0x34] sm:$0xf]
  %v709 = vld [vmem:[%s7 + $0x38] sm:$0xf]
  %v710 = vld [vmem:[%s7 + $0x3c] sm:$0xf]
  %v712 = vlaneseq
  %v713 = vshrl.u32 %v712, 7
  %v714 = vsub.s32 0, %v713
  %v715 = vrot.slane %v45, %v714
  %v733 = vunpack.c.l.b16 %v695
  %v734 = vunpack.c.l.b16 %v696
  %v735 = vunpack.c.l.b16 %v697
  %v736 = vunpack.c.l.b16 %v698
  %v737 = vunpack.c.l.b16 %v699
  %v738 = vunpack.c.l.b16 %v700
  %v739 = vunpack.c.l.b16 %v701
  %v740 = vunpack.c.l.b16 %v702
  %v741 = vunpack.c.l.b16 %v703
  %v742 = vunpack.c.l.b16 %v704
  %v743 = vunpack.c.l.b16 %v705
  %v744 = vunpack.c.l.b16 %v706
  %v745 = vunpack.c.l.b16 %v707
  %v746 = vunpack.c.l.b16 %v708
  %v747 = vunpack.c.l.b16 %v709
  %v748 = vunpack.c.l.b16 %v710
  %v749 = vpack.c.b16 %v734, %v733
  %v750 = vpack.c.b16 %v736, %v735
  %v751 = vpack.c.b16 %v738, %v737
  %v752 = vpack.c.b16 %v740, %v739
  %v753 = vpack.c.b16 %v742, %v741
  %v754 = vpack.c.b16 %v744, %v743
  %v755 = vpack.c.b16 %v746, %v745
  %v756 = vpack.c.b16 %v748, %v747
  %765 = vmatprep.subr.bf16.mxu0 0
  %766 = vmatpush1.bf16.msra.mxu0 %v749
  %767 = vmatprep.subr.bf16.mxu0 0
  %768 = vmatpush1.bf16.msra.mxu0 %v750
  %769 = vmatprep.subr.bf16.mxu0 0
  %770 = vmatpush1.bf16.msra.mxu0 %v751
  %771 = vmatprep.subr.bf16.mxu0 0
  %772 = vmatpush1.bf16.msra.mxu0 %v752
  %773 = vmatprep.subr.bf16.mxu0 0
  %774 = vmatpush1.bf16.msra.mxu0 %v753
  %775 = vmatprep.subr.bf16.mxu0 0
  %776 = vmatpush1.bf16.msra.mxu0 %v754
  %777 = vmatprep.subr.bf16.mxu0 0
  %778 = vmatpush1.bf16.msra.mxu0 %v755
  %779 = vmatprep.subr.bf16.mxu0 0
  %780 = vmatpush1.bf16.msra.mxu0 %v756
  %781 = vmatprep.subr.bf16.mxu0 0
  %782 = vmatpush1.bf16.msra.mxu0 0
  %783 = vmatprep.subr.bf16.mxu0 0
  %784 = vmatpush1.bf16.msra.mxu0 0
  %785 = vmatprep.subr.bf16.mxu0 0
  %786 = vmatpush1.bf16.msra.mxu0 0
  %787 = vmatprep.subr.bf16.mxu0 0
  %788 = vmatpush1.bf16.msra.mxu0 0
  %789 = vmatprep.subr.bf16.mxu0 0
  %790 = vmatpush1.bf16.msra.mxu0 0
  %791 = vmatprep.subr.bf16.mxu0 0
  %792 = vmatpush1.bf16.msra.mxu0 0
  %793 = vmatprep.subr.bf16.mxu0 0
  %794 = vmatpush1.bf16.msra.mxu0 0
  %795 = vmatprep.subr.bf16.mxu0 0
  %796 = vmatpush1.bf16.msra.mxu0 0
  %797 = vmatprep.mubr.bf16.mxu0 0
  %798 = vmatmul.mubr.bf16.gmra.mrb[0].mxu0 %v694
  %v799 = vpop.f32.mrb[0].mxu0
  %v800 = vadd.f32 %v715, %v799
  %v801 = vpop.f32.mrb[0].mxu0
  %v802 = vpop.f32.mrb[0].mxu0
  %v803 = vpop.f32.mrb[0].mxu0
  %804 = vdwg.mxu0
  %v805 = vpack.c.bf16 %v800, %v800
  %806 = vst [vmem:[%s9] sm:$0xf] %v805
  %807 = vmax.xlane.f32.xlu0 %v800
  %v808 = vpop.xlane.xlu0 %807
  %v809 = vsub.f32 %v800, %v808
  %v810 = vmul.f32 %v809, 1.442695
  %v811 = vpow.pop %v810
  %812 = vadd.xlane.f32.xlu0 %v811
  %v813 = vpop.xlane.xlu0 %812
  %v814 = vrcp.pop %v813
  %v815 = vpack.c.bf16 %v811, %v811
  %v816 = vld [vmem:[%s1] sm:$0xf]
  %v817 = vld [vmem:[%s1 + $0x4] sm:$0xf]
  %v818 = vld [vmem:[%s1 + $0x8] sm:$0xf]
  %v819 = vld [vmem:[%s1 + $0xc] sm:$0xf]
  %v820 = vld [vmem:[%s1 + $0x10] sm:$0xf]
  %v821 = vld [vmem:[%s1 + $0x14] sm:$0xf]
  %v822 = vld [vmem:[%s1 + $0x18] sm:$0xf]
  %v823 = vld [vmem:[%s1 + $0x1c] sm:$0xf]
  %v824 = vld [vmem:[%s1 + $0x20] sm:$0xf]
  %v825 = vld [vmem:[%s1 + $0x24] sm:$0xf]
  %v826 = vld [vmem:[%s1 + $0x28] sm:$0xf]
  %v827 = vld [vmem:[%s1 + $0x2c] sm:$0xf]
  %v828 = vld [vmem:[%s1 + $0x30] sm:$0xf]
  %v829 = vld [vmem:[%s1 + $0x34] sm:$0xf]
  %v830 = vld [vmem:[%s1 + $0x38] sm:$0xf]
  %v831 = vld [vmem:[%s1 + $0x3c] sm:$0xf]
  %v848 = vunpack.c.l.b16 %v816
  %v849 = vunpack.c.l.b16 %v817
  %v850 = vunpack.c.l.b16 %v818
  %v851 = vunpack.c.l.b16 %v819
  %v852 = vunpack.c.l.b16 %v820
  %v853 = vunpack.c.l.b16 %v821
  %v854 = vunpack.c.l.b16 %v822
  %v855 = vunpack.c.l.b16 %v823
  %v856 = vunpack.c.l.b16 %v824
  %v857 = vunpack.c.l.b16 %v825
  %v858 = vunpack.c.l.b16 %v826
  %v859 = vunpack.c.l.b16 %v827
  %v860 = vunpack.c.l.b16 %v828
  %v861 = vunpack.c.l.b16 %v829
  %v862 = vunpack.c.l.b16 %v830
  %v863 = vunpack.c.l.b16 %v831
  %v864 = vpack.c.b16 %v849, %v848
  %v865 = vpack.c.b16 %v851, %v850
  %v866 = vpack.c.b16 %v853, %v852
  %v867 = vpack.c.b16 %v855, %v854
  %v868 = vpack.c.b16 %v857, %v856
  %v869 = vpack.c.b16 %v859, %v858
  %v870 = vpack.c.b16 %v861, %v860
  %v871 = vpack.c.b16 %v863, %v862
  %880 = vmatprep.subr.bf16.mxu0 0
  %881 = vmatpush1.bf16.msra.mxu0 %v864
  %882 = vmatprep.subr.bf16.mxu0 0
  %883 = vmatpush1.bf16.msra.mxu0 %v865
  %884 = vmatprep.subr.bf16.mxu0 0
  %885 = vmatpush1.bf16.msra.mxu0 %v866
  %886 = vmatprep.subr.bf16.mxu0 0
  %887 = vmatpush1.bf16.msra.mxu0 %v867
  %888 = vmatprep.subr.bf16.mxu0 0
  %889 = vmatpush1.bf16.msra.mxu0 %v868
  %890 = vmatprep.subr.bf16.mxu0 0
  %891 = vmatpush1.bf16.msra.mxu0 %v869
  %892 = vmatprep.subr.bf16.mxu0 0
  %893 = vmatpush1.bf16.msra.mxu0 %v870
  %894 = vmatprep.subr.bf16.mxu0 0
  %895 = vmatpush1.bf16.msra.mxu0 %v871
  %896 = vmatprep.subr.bf16.mxu0 0
  %897 = vmatpush1.bf16.msra.mxu0 0
  %898 = vmatprep.subr.bf16.mxu0 0
  %899 = vmatpush1.bf16.msra.mxu0 0
  %900 = vmatprep.subr.bf16.mxu0 0
  %901 = vmatpush1.bf16.msra.mxu0 0
  %902 = vmatprep.subr.bf16.mxu0 0
  %903 = vmatpush1.bf16.msra.mxu0 0
  %904 = vmatprep.subr.bf16.mxu0 0
  %905 = vmatpush1.bf16.msra.mxu0 0
  %906 = vmatprep.subr.bf16.mxu0 0
  %907 = vmatpush1.bf16.msra.mxu0 0
  %908 = vmatprep.subr.bf16.mxu0 0
  %909 = vmatpush1.bf16.msra.mxu0 0
  %910 = vmatprep.subr.bf16.mxu0 0
  %911 = vmatpush1.bf16.msra.mxu0 0
  %912 = vmatprep.mubr.bf16.mxu0 0
  %913 = vmatmul.mubr.bf16.gmra.mrb[0].mxu0 %v815
  %v914 = vpop.f32.mrb[0].mxu0
  %v915 = vadd.f32 0.0, %v914
  %v916 = vpop.f32.mrb[0].mxu0
  %v917 = vpop.f32.mrb[0].mxu0
  %v918 = vpop.f32.mrb[0].mxu0
  %919 = vdwg.mxu0
  %v920 = vmul.f32 %v915, %v814
  %v921 = vadd.f32 %v920, %v163
  %v922 = vpack.c.bf16 %v921, %v921
  %v923 = vld [vmem:[%s3] sm:$0xff]
  %v924 = vld [vmem:[%s3 + $0x8] sm:$0xf]
  %v925 = vld [vmem:[%s3 + $0xc] sm:$0xff]
  %v926 = vld [vmem:[%s3 + $0x14] sm:$0xf]
  %v927 = vld [vmem:[%s3 + $0x18] sm:$0xff]
  %v928 = vld [vmem:[%s3 + $0x20] sm:$0xf]
  %v929 = vld [vmem:[%s3 + $0x24] sm:$0xff]
  %v930 = vld [vmem:[%s3 + $0x2c] sm:$0xf]
  %v931 = vld [vmem:[%s3 + $0x30] sm:$0xff]
  %v932 = vld [vmem:[%s3 + $0x38] sm:$0xf]
  %v933 = vld [vmem:[%s3 + $0x3c] sm:$0xff]
  %v934 = vld [vmem:[%s3 + $0x44] sm:$0xf]
  %v935 = vld [vmem:[%s3 + $0x48] sm:$0xff]
  %v936 = vld [vmem:[%s3 + $0x50] sm:$0xf]
  %v937 = vld [vmem:[%s3 + $0x54] sm:$0xff]
  %v938 = vld [vmem:[%s3 + $0x5c] sm:$0xf]
  %v939 = vld [vmem:[%s3 + $0x60] sm:$0xff]
  %v940 = vld [vmem:[%s3 + $0x68] sm:$0xf]
  %v941 = vld [vmem:[%s3 + $0x6c] sm:$0xff]
  %v942 = vld [vmem:[%s3 + $0x74] sm:$0xf]
  %v943 = vld [vmem:[%s3 + $0x78] sm:$0xff]
  %v944 = vld [vmem:[%s3 + $0x80] sm:$0xf]
  %v945 = vld [vmem:[%s3 + $0x84] sm:$0xff]
  %v946 = vld [vmem:[%s3 + $0x8c] sm:$0xf]
  %v947 = vld [vmem:[%s3 + $0x90] sm:$0xff]
  %v948 = vld [vmem:[%s3 + $0x98] sm:$0xf]
  %v949 = vld [vmem:[%s3 + $0x9c] sm:$0xff]
  %v950 = vld [vmem:[%s3 + $0xa4] sm:$0xf]
  %v951 = vld [vmem:[%s3 + $0xa8] sm:$0xff]
  %v952 = vld [vmem:[%s3 + $0xb0] sm:$0xf]
  %v953 = vld [vmem:[%s3 + $0xb4] sm:$0xff]
  %v954 = vld [vmem:[%s3 + $0xbc] sm:$0xf]
  %v987 = vunpack.c.l.b16 %v923
  %v988 = vunpack.c.h.b16 %v923
  %v989 = vunpack.c.l.b16 %v924
  %v990 = vunpack.c.l.b16 %v925
  %v991 = vunpack.c.h.b16 %v925
  %v992 = vunpack.c.l.b16 %v926
  %v993 = vunpack.c.l.b16 %v927
  %v994 = vunpack.c.h.b16 %v927
  %v995 = vunpack.c.l.b16 %v928
  %v996 = vunpack.c.l.b16 %v929
  %v997 = vunpack.c.h.b16 %v929
  %v998 = vunpack.c.l.b16 %v930
  %v999 = vunpack.c.l.b16 %v931
  %v1000 = vunpack.c.h.b16 %v931
  %v1001 = vunpack.c.l.b16 %v932
  %v1002 = vunpack.c.l.b16 %v933
  %v1003 = vunpack.c.h.b16 %v933
  %v1004 = vunpack.c.l.b16 %v934
  %v1005 = vunpack.c.l.b16 %v935
  %v1006 = vunpack.c.h.b16 %v935
  %v1007 = vunpack.c.l.b16 %v936
  %v1008 = vunpack.c.l.b16 %v937
  %v1009 = vunpack.c.h.b16 %v937
  %v1010 = vunpack.c.l.b16 %v938
  %v1011 = vunpack.c.l.b16 %v939
  %v1012 = vunpack.c.h.b16 %v939
  %v1013 = vunpack.c.l.b16 %v940
  %v1014 = vunpack.c.l.b16 %v941
  %v1015 = vunpack.c.h.b16 %v941
  %v1016 = vunpack.c.l.b16 %v942
  %v1017 = vunpack.c.l.b16 %v943
  %v1018 = vunpack.c.h.b16 %v943
  %v1019 = vunpack.c.l.b16 %v944
  %v1020 = vunpack.c.l.b16 %v945
  %v1021 = vunpack.c.h.b16 %v945
  %v1022 = vunpack.c.l.b16 %v946
  %v1023 = vunpack.c.l.b16 %v947
  %v1024 = vunpack.c.h.b16 %v947
  %v1025 = vunpack.c.l.b16 %v948
  %v1026 = vunpack.c.l.b16 %v949
  %v1027 = vunpack.c.h.b16 %v949
  %v1028 = vunpack.c.l.b16 %v950
  %v1029 = vunpack.c.l.b16 %v951
  %v1030 = vunpack.c.h.b16 %v951
  %v1031 = vunpack.c.l.b16 %v952
  %v1032 = vunpack.c.l.b16 %v953
  %v1033 = vunpack.c.h.b16 %v953
  %v1034 = vunpack.c.l.b16 %v954
  %v1035 = vpack.c.b16 %v990, %v987
  %v1036 = vpack.c.b16 %v991, %v988
  %v1037 = vpack.c.b16 %v992, %v989
  %v1038 = vpack.c.b16 %v996, %v993
  %v1039 = vpack.c.b16 %v997, %v994
  %v1040 = vpack.c.b16 %v998, %v995
  %v1041 = vpack.c.b16 %v1002, %v999
  %v1042 = vpack.c.b16 %v1003, %v1000
  %v1043 = vpack.c.b16 %v1004, %v1001
  %v1044 = vpack.c.b16 %v1008, %v1005
  %v1045 = vpack.c.b16 %v1009, %v1006
  %v1046 = vpack.c.b16 %v1010, %v1007
  %v1047 = vpack.c.b16 %v1014, %v1011
  %v1048 = vpack.c.b16 %v1015, %v1012
  %v1049 = vpack.c.b16 %v1016, %v1013
  %v1050 = vpack.c.b16 %v1020, %v1017
  %v1051 = vpack.c.b16 %v1021, %v1018
  %v1052 = vpack.c.b16 %v1022, %v1019
  %v1053 = vpack.c.b16 %v1026, %v1023
  %v1054 = vpack.c.b16 %v1027, %v1024
  %v1055 = vpack.c.b16 %v1028, %v1025
  %v1056 = vpack.c.b16 %v1032, %v1029
  %v1057 = vpack.c.b16 %v1033, %v1030
  %v1058 = vpack.c.b16 %v1034, %v1031
  %1083 = vmatprep.subr.bf16.mxu0 %v1036
  %1084 = vmatpush1.bf16.msra.mxu0 %v1035
  %1085 = vmatprep.subr.bf16.mxu0 %v1039
  %1086 = vmatpush1.bf16.msra.mxu0 %v1038
  %1087 = vmatprep.subr.bf16.mxu0 %v1042
  %1088 = vmatpush1.bf16.msra.mxu0 %v1041
  %1089 = vmatprep.subr.bf16.mxu0 %v1045
  %1090 = vmatpush1.bf16.msra.mxu0 %v1044
  %1091 = vmatprep.subr.bf16.mxu0 %v1048
  %1092 = vmatpush1.bf16.msra.mxu0 %v1047
  %1093 = vmatprep.subr.bf16.mxu0 %v1051
  %1094 = vmatpush1.bf16.msra.mxu0 %v1050
  %1095 = vmatprep.subr.bf16.mxu0 %v1054
  %1096 = vmatpush1.bf16.msra.mxu0 %v1053
  %1097 = vmatprep.subr.bf16.mxu0 %v1057
  %1098 = vmatpush1.bf16.msra.mxu0 %v1056
  %1099 = vmatprep.subr.bf16.mxu0 0
  %1100 = vmatpush1.bf16.msra.mxu0 0
  %1101 = vmatprep.subr.bf16.mxu0 0
  %1102 = vmatpush1.bf16.msra.mxu0 0
  %1103 = vmatprep.subr.bf16.mxu0 0
  %1104 = vmatpush1.bf16.msra.mxu0 0
  %1105 = vmatprep.subr.bf16.mxu0 0
  %1106 = vmatpush1.bf16.msra.mxu0 0
  %1107 = vmatprep.subr.bf16.mxu0 0
  %1108 = vmatpush1.bf16.msra.mxu0 0
  %1109 = vmatprep.subr.bf16.mxu0 0
  %1110 = vmatpush1.bf16.msra.mxu0 0
  %1111 = vmatprep.subr.bf16.mxu0 0
  %1112 = vmatpush1.bf16.msra.mxu0 0
  %1113 = vmatprep.subr.bf16.mxu0 0
  %1114 = vmatpush1.bf16.msra.mxu0 0
  %1115 = vmatprep.mubr.bf16.mxu0 0
  %1116 = vmatmul.mubr.bf16.gmra.mrb[0].mxu0 %v922
  %v1117 = vpop.f32.mrb[0].mxu0
  %v1118 = vadd.f32 %v203, %v1117
  %v1119 = vpop.f32.mrb[0].mxu0
  %v1120 = vadd.f32 %v207, %v1119
  %v1121 = vpop.f32.mrb[0].mxu0
  %v1122 = vpop.f32.mrb[0].mxu0
  %1123 = vdwg.mxu0
  %1124 = vmatprep.subr.bf16.mxu0 0
  %1125 = vmatpush1.bf16.msra.mxu0 %v1037
  %1126 = vmatprep.subr.bf16.mxu0 0
  %1127 = vmatpush1.bf16.msra.mxu0 %v1040
  %1128 = vmatprep.subr.bf16.mxu0 0
  %1129 = vmatpush1.bf16.msra.mxu0 %v1043
  %1130 = vmatprep.subr.bf16.mxu0 0
  %1131 = vmatpush1.bf16.msra.mxu0 %v1046
  %1132 = vmatprep.subr.bf16.mxu0 0
  %1133 = vmatpush1.bf16.msra.mxu0 %v1049
  %1134 = vmatprep.subr.bf16.mxu0 0
  %1135 = vmatpush1.bf16.msra.mxu0 %v1052
  %1136 = vmatprep.subr.bf16.mxu0 0
  %1137 = vmatpush1.bf16.msra.mxu0 %v1055
  %1138 = vmatprep.subr.bf16.mxu0 0
  %1139 = vmatpush1.bf16.msra.mxu0 %v1058
  %1140 = vmatprep.subr.bf16.mxu0 0
  %1141 = vmatpush1.bf16.msra.mxu0 0
  %1142 = vmatprep.subr.bf16.mxu0 0
  %1143 = vmatpush1.bf16.msra.mxu0 0
  %1144 = vmatprep.subr.bf16.mxu0 0
  %1145 = vmatpush1.bf16.msra.mxu0 0
  %1146 = vmatprep.subr.bf16.mxu0 0
  %1147 = vmatpush1.bf16.msra.mxu0 0
  %1148 = vmatprep.subr.bf16.mxu0 0
  %1149 = vmatpush1.bf16.msra.mxu0 0
  %1150 = vmatprep.subr.bf16.mxu0 0
  %1151 = vmatpush1.bf16.msra.mxu0 0
  %1152 = vmatprep.subr.bf16.mxu0 0
  %1153 = vmatpush1.bf16.msra.mxu0 0
  %1154 = vmatprep.subr.bf16.mxu0 0
  %1155 = vmatpush1.bf16.msra.mxu0 0
  %1156 = vmatprep.mubr.bf16.mxu0 0
  %1157 = vmatmul.mubr.bf16.gmra.mrb[0].mxu0 %v922
  %v1158 = vpop.f32.mrb[0].mxu0
  %v1159 = vadd.f32 %v211, %v1158
  %v1160 = vpop.f32.mrb[0].mxu0
  %v1161 = vpop.f32.mrb[0].mxu0
  %v1162 = vpop.f32.mrb[0].mxu0
  %1163 = vdwg.mxu0
  %v1164 = vld [vmem:[%s4] sm:$0xff]
  %v1165 = vld [vmem:[%s4 + $0x8] sm:$0xf]
  %v1166 = vld [vmem:[%s4 + $0xc] sm:$0xff]
  %v1167 = vld [vmem:[%s4 + $0x14] sm:$0xf]
  %v1168 = vld [vmem:[%s4 + $0x18] sm:$0xff]
  %v1169 = vld [vmem:[%s4 + $0x20] sm:$0xf]
  %v1170 = vld [vmem:[%s4 + $0x24] sm:$0xff]
  %v1171 = vld [vmem:[%s4 + $0x2c] sm:$0xf]
  %v1172 = vld [vmem:[%s4 + $0x30] sm:$0xff]
  %v1173 = vld [vmem:[%s4 + $0x38] sm:$0xf]
  %v1174 = vld [vmem:[%s4 + $0x3c] sm:$0xff]
  %v1175 = vld [vmem:[%s4 + $0x44] sm:$0xf]
  %v1176 = vld [vmem:[%s4 + $0x48] sm:$0xff]
  %v1177 = vld [vmem:[%s4 + $0x50] sm:$0xf]
  %v1178 = vld [vmem:[%s4 + $0x54] sm:$0xff]
  %v1179 = vld [vmem:[%s4 + $0x5c] sm:$0xf]
  %v1180 = vld [vmem:[%s4 + $0x60] sm:$0xff]
  %v1181 = vld [vmem:[%s4 + $0x68] sm:$0xf]
  %v1182 = vld [vmem:[%s4 + $0x6c] sm:$0xff]
  %v1183 = vld [vmem:[%s4 + $0x74] sm:$0xf]
  %v1184 = vld [vmem:[%s4 + $0x78] sm:$0xff]
  %v1185 = vld [vmem:[%s4 + $0x80] sm:$0xf]
  %v1186 = vld [vmem:[%s4 + $0x84] sm:$0xff]
  %v1187 = vld [vmem:[%s4 + $0x8c] sm:$0xf]
  %v1188 = vld [vmem:[%s4 + $0x90] sm:$0xff]
  %v1189 = vld [vmem:[%s4 + $0x98] sm:$0xf]
  %v1190 = vld [vmem:[%s4 + $0x9c] sm:$0xff]
  %v1191 = vld [vmem:[%s4 + $0xa4] sm:$0xf]
  %v1192 = vld [vmem:[%s4 + $0xa8] sm:$0xff]
  %v1193 = vld [vmem:[%s4 + $0xb0] sm:$0xf]
  %v1194 = vld [vmem:[%s4 + $0xb4] sm:$0xff]
  %v1195 = vld [vmem:[%s4 + $0xbc] sm:$0xf]
  %v1228 = vunpack.c.l.b16 %v1164
  %v1229 = vunpack.c.h.b16 %v1164
  %v1230 = vunpack.c.l.b16 %v1165
  %v1231 = vunpack.c.l.b16 %v1166
  %v1232 = vunpack.c.h.b16 %v1166
  %v1233 = vunpack.c.l.b16 %v1167
  %v1234 = vunpack.c.l.b16 %v1168
  %v1235 = vunpack.c.h.b16 %v1168
  %v1236 = vunpack.c.l.b16 %v1169
  %v1237 = vunpack.c.l.b16 %v1170
  %v1238 = vunpack.c.h.b16 %v1170
  %v1239 = vunpack.c.l.b16 %v1171
  %v1240 = vunpack.c.l.b16 %v1172
  %v1241 = vunpack.c.h.b16 %v1172
  %v1242 = vunpack.c.l.b16 %v1173
  %v1243 = vunpack.c.l.b16 %v1174
  %v1244 = vunpack.c.h.b16 %v1174
  %v1245 = vunpack.c.l.b16 %v1175
  %v1246 = vunpack.c.l.b16 %v1176
  %v1247 = vunpack.c.h.b16 %v1176
  %v1248 = vunpack.c.l.b16 %v1177
  %v1249 = vunpack.c.l.b16 %v1178
  %v1250 = vunpack.c.h.b16 %v1178
  %v1251 = vunpack.c.l.b16 %v1179
  %v1252 = vunpack.c.l.b16 %v1180
  %v1253 = vunpack.c.h.b16 %v1180
  %v1254 = vunpack.c.l.b16 %v1181
  %v1255 = vunpack.c.l.b16 %v1182
  %v1256 = vunpack.c.h.b16 %v1182
  %v1257 = vunpack.c.l.b16 %v1183
  %v1258 = vunpack.c.l.b16 %v1184
  %v1259 = vunpack.c.h.b16 %v1184
  %v1260 = vunpack.c.l.b16 %v1185
  %v1261 = vunpack.c.l.b16 %v1186
  %v1262 = vunpack.c.h.b16 %v1186
  %v1263 = vunpack.c.l.b16 %v1187
  %v1264 = vunpack.c.l.b16 %v1188
  %v1265 = vunpack.c.h.b16 %v1188
  %v1266 = vunpack.c.l.b16 %v1189
  %v1267 = vunpack.c.l.b16 %v1190
  %v1268 = vunpack.c.h.b16 %v1190
  %v1269 = vunpack.c.l.b16 %v1191
  %v1270 = vunpack.c.l.b16 %v1192
  %v1271 = vunpack.c.h.b16 %v1192
  %v1272 = vunpack.c.l.b16 %v1193
  %v1273 = vunpack.c.l.b16 %v1194
  %v1274 = vunpack.c.h.b16 %v1194
  %v1275 = vunpack.c.l.b16 %v1195
  %v1276 = vpack.c.b16 %v1231, %v1228
  %v1277 = vpack.c.b16 %v1232, %v1229
  %v1278 = vpack.c.b16 %v1233, %v1230
  %v1279 = vpack.c.b16 %v1237, %v1234
  %v1280 = vpack.c.b16 %v1238, %v1235
  %v1281 = vpack.c.b16 %v1239, %v1236
  %v1282 = vpack.c.b16 %v1243, %v1240
  %v1283 = vpack.c.b16 %v1244, %v1241
  %v1284 = vpack.c.b16 %v1245, %v1242
  %v1285 = vpack.c.b16 %v1249, %v1246
  %v1286 = vpack.c.b16 %v1250, %v1247
  %v1287 = vpack.c.b16 %v1251, %v1248
  %v1288 = vpack.c.b16 %v1255, %v1252
  %v1289 = vpack.c.b16 %v1256, %v1253
  %v1290 = vpack.c.b16 %v1257, %v1254
  %v1291 = vpack.c.b16 %v1261, %v1258
  %v1292 = vpack.c.b16 %v1262, %v1259
  %v1293 = vpack.c.b16 %v1263, %v1260
  %v1294 = vpack.c.b16 %v1267, %v1264
  %v1295 = vpack.c.b16 %v1268, %v1265
  %v1296 = vpack.c.b16 %v1269, %v1266
  %v1297 = vpack.c.b16 %v1273, %v1270
  %v1298 = vpack.c.b16 %v1274, %v1271
  %v1299 = vpack.c.b16 %v1275, %v1272
  %1324 = vmatprep.subr.bf16.mxu0 %v1277
  %1325 = vmatpush1.bf16.msra.mxu0 %v1276
  %1326 = vmatprep.subr.bf16.mxu0 %v1280
  %1327 = vmatpush1.bf16.msra.mxu0 %v1279
  %1328 = vmatprep.subr.bf16.mxu0 %v1283
  %1329 = vmatpush1.bf16.msra.mxu0 %v1282
  %1330 = vmatprep.subr.bf16.mxu0 %v1286
  %1331 = vmatpush1.bf16.msra.mxu0 %v1285
  %1332 = vmatprep.subr.bf16.mxu0 %v1289
  %1333 = vmatpush1.bf16.msra.mxu0 %v1288
  %1334 = vmatprep.subr.bf16.mxu0 %v1292
  %1335 = vmatpush1.bf16.msra.mxu0 %v1291
  %1336 = vmatprep.subr.bf16.mxu0 %v1295
  %1337 = vmatpush1.bf16.msra.mxu0 %v1294
  %1338 = vmatprep.subr.bf16.mxu0 %v1298
  %1339 = vmatpush1.bf16.msra.mxu0 %v1297
  %1340 = vmatprep.subr.bf16.mxu0 0
  %1341 = vmatpush1.bf16.msra.mxu0 0
  %1342 = vmatprep.subr.bf16.mxu0 0
  %1343 = vmatpush1.bf16.msra.mxu0 0
  %1344 = vmatprep.subr.bf16.mxu0 0
  %1345 = vmatpush1.bf16.msra.mxu0 0
  %1346 = vmatprep.subr.bf16.mxu0 0
  %1347 = vmatpush1.bf16.msra.mxu0 0
  %1348 = vmatprep.subr.bf16.mxu0 0
  %1349 = vmatpush1.bf16.msra.mxu0 0
  %1350 = vmatprep.subr.bf16.mxu0 0
  %1351 = vmatpush1.bf16.msra.mxu0 0
  %1352 = vmatprep.subr.bf16.mxu0 0
  %1353 = vmatpush1.bf16.msra.mxu0 0
  %1354 = vmatprep.subr.bf16.mxu0 0
  %1355 = vmatpush1.bf16.msra.mxu0 0
  %1356 = vmatprep.mubr.bf16.mxu0 0
  %1357 = vmatmul.mubr.bf16.gmra.mrb[0].mxu0 %v694
  %v1358 = vpop.f32.mrb[0].mxu0
  %v1359 = vadd.f32 0.0, %v1358
  %v1360 = vpop.f32.mrb[0].mxu0
  %v1361 = vadd.f32 0.0, %v1360
  %v1362 = vpop.f32.mrb[0].mxu0
  %v1363 = vpop.f32.mrb[0].mxu0
  %1364 = vdwg.mxu0
  %1365 = vmatprep.subr.bf16.mxu0 0
  %1366 = vmatpush1.bf16.msra.mxu0 %v1278
  %1367 = vmatprep.subr.bf16.mxu0 0
  %1368 = vmatpush1.bf16.msra.mxu0 %v1281
  %1369 = vmatprep.subr.bf16.mxu0 0
  %1370 = vmatpush1.bf16.msra.mxu0 %v1284
  %1371 = vmatprep.subr.bf16.mxu0 0
  %1372 = vmatpush1.bf16.msra.mxu0 %v1287
  %1373 = vmatprep.subr.bf16.mxu0 0
  %1374 = vmatpush1.bf16.msra.mxu0 %v1290
  %1375 = vmatprep.subr.bf16.mxu0 0
  %1376 = vmatpush1.bf16.msra.mxu0 %v1293
  %1377 = vmatprep.subr.bf16.mxu0 0
  %1378 = vmatpush1.bf16.msra.mxu0 %v1296
  %1379 = vmatprep.subr.bf16.mxu0 0
  %1380 = vmatpush1.bf16.msra.mxu0 %v1299
  %1381 = vmatprep.subr.bf16.mxu0 0
  %1382 = vmatpush1.bf16.msra.mxu0 0
  %1383 = vmatprep.subr.bf16.mxu0 0
  %1384 = vmatpush1.bf16.msra.mxu0 0
  %1385 = vmatprep.subr.bf16.mxu0 0
  %1386 = vmatpush1.bf16.msra.mxu0 0
  %1387 = vmatprep.subr.bf16.mxu0 0
  %1388 = vmatpush1.bf16.msra.mxu0 0
  %1389 = vmatprep.subr.bf16.mxu0 0
  %1390 = vmatpush1.bf16.msra.mxu0 0
  %1391 = vmatprep.subr.bf16.mxu0 0
  %1392 = vmatpush1.bf16.msra.mxu0 0
  %1393 = vmatprep.subr.bf16.mxu0 0
  %1394 = vmatpush1.bf16.msra.mxu0 0
  %1395 = vmatprep.subr.bf16.mxu0 0
  %1396 = vmatpush1.bf16.msra.mxu0 0
  %1397 = vmatprep.mubr.bf16.mxu0 0
  %1398 = vmatmul.mubr.bf16.gmra.mrb[0].mxu0 %v694
  %v1399 = vpop.f32.mrb[0].mxu0
  %v1400 = vadd.f32 0.0, %v1399
  %v1401 = vpop.f32.mrb[0].mxu0
  %v1402 = vpop.f32.mrb[0].mxu0
  %v1403 = vpop.f32.mrb[0].mxu0
  %1404 = vdwg.mxu0
  %v1405 = vadd.f32 %v1118, %v1359
  %v1406 = vxor.u32 %v1405, 2147483648
  %v1407 = vmul.f32 %v1406, 1.442695
  %v1408 = vpow.pop %v1407
  %v1409 = vadd.f32 %v1408, 1.0
  %v1410 = vrcp.pop %v1409
  %v1411 = vmul.f32 1.0, %v1410
  %v1412 = vadd.f32 %v1120, %v1361
  %v1413 = vxor.u32 %v1412, 2147483648
  %v1414 = vmul.f32 %v1413, 1.442695
  %v1415 = vpow.pop %v1414
  %v1416 = vadd.f32 %v1415, 1.0
  %v1417 = vrcp.pop %v1416
  %v1418 = vmul.f32 1.0, %v1417
  %v1419 = vadd.f32 %v1400, %v684
  %v1420 = vmul.f32 %v1411, %v1419
  %v1421 = vadd.f32 %v1159, %v1420
  %v1422 = vtanh.pop %v1421
  %v1423 = vsub.f32 1.0, %v1418
  %v1424 = vmul.f32 %v1423, %v1422
  %v1425 = vmul.f32 %v1418, %v693
  %v1426 = vadd.f32 %v1424, %v1425
  %v1427 = vpack.c.bf16 %v1426, %v1426
  %v1428 = vld [vmem:[%s7] sm:$0xf]
  %v1429 = vld [vmem:[%s7 + $0x4] sm:$0xf]
  %v1430 = vld [vmem:[%s7 + $0x8] sm:$0xf]
  %v1431 = vld [vmem:[%s7 + $0xc] sm:$0xf]
  %v1432 = vld [vmem:[%s7 + $0x10] sm:$0xf]
  %v1433 = vld [vmem:[%s7 + $0x14] sm:$0xf]
  %v1434 = vld [vmem:[%s7 + $0x18] sm:$0xf]
  %v1435 = vld [vmem:[%s7 + $0x1c] sm:$0xf]
  %v1436 = vld [vmem:[%s7 + $0x20] sm:$0xf]
  %v1437 = vld [vmem:[%s7 + $0x24] sm:$0xf]
  %v1438 = vld [vmem:[%s7 + $0x28] sm:$0xf]
  %v1439 = vld [vmem:[%s7 + $0x2c] sm:$0xf]
  %v1440 = vld [vmem:[%s7 + $0x30] sm:$0xf]
  %v1441 = vld [vmem:[%s7 + $0x34] sm:$0xf]
  %v1442 = vld [vmem:[%s7 + $0x38] sm:$0xf]
  %v1443 = vld [vmem:[%s7 + $0x3c] sm:$0xf]
  %v1460 = vunpack.c.l.b16 %v1428
  %v1461 = vunpack.c.l.b16 %v1429
  %v1462 = vunpack.c.l.b16 %v1430
  %v1463 = vunpack.c.l.b16 %v1431
  %v1464 = vunpack.c.l.b16 %v1432
  %v1465 = vunpack.c.l.b16 %v1433
  %v1466 = vunpack.c.l.b16 %v1434
  %v1467 = vunpack.c.l.b16 %v1435
  %v1468 = vunpack.c.l.b16 %v1436
  %v1469 = vunpack.c.l.b16 %v1437
  %v1470 = vunpack.c.l.b16 %v1438
  %v1471 = vunpack.c.l.b16 %v1439
  %v1472 = vunpack.c.l.b16 %v1440
  %v1473 = vunpack.c.l.b16 %v1441
  %v1474 = vunpack.c.l.b16 %v1442
  %v1475 = vunpack.c.l.b16 %v1443
  %v1476 = vpack.c.b16 %v1461, %v1460
  %v1477 = vpack.c.b16 %v1463, %v1462
  %v1478 = vpack.c.b16 %v1465, %v1464
  %v1479 = vpack.c.b16 %v1467, %v1466
  %v1480 = vpack.c.b16 %v1469, %v1468
  %v1481 = vpack.c.b16 %v1471, %v1470
  %v1482 = vpack.c.b16 %v1473, %v1472
  %v1483 = vpack.c.b16 %v1475, %v1474
  %1492 = vmatprep.subr.bf16.mxu0 0
  %1493 = vmatpush1.bf16.msra.mxu0 %v1476
  %1494 = vmatprep.subr.bf16.mxu0 0
  %1495 = vmatpush1.bf16.msra.mxu0 %v1477
  %1496 = vmatprep.subr.bf16.mxu0 0
  %1497 = vmatpush1.bf16.msra.mxu0 %v1478
  %1498 = vmatprep.subr.bf16.mxu0 0
  %1499 = vmatpush1.bf16.msra.mxu0 %v1479
  %1500 = vmatprep.subr.bf16.mxu0 0
  %1501 = vmatpush1.bf16.msra.mxu0 %v1480
  %1502 = vmatprep.subr.bf16.mxu0 0
  %1503 = vmatpush1.bf16.msra.mxu0 %v1481
  %1504 = vmatprep.subr.bf16.mxu0 0
  %1505 = vmatpush1.bf16.msra.mxu0 %v1482
  %1506 = vmatprep.subr.bf16.mxu0 0
  %1507 = vmatpush1.bf16.msra.mxu0 %v1483
  %1508 = vmatprep.subr.bf16.mxu0 0
  %1509 = vmatpush1.bf16.msra.mxu0 0
  %1510 = vmatprep.subr.bf16.mxu0 0
  %1511 = vmatpush1.bf16.msra.mxu0 0
  %1512 = vmatprep.subr.bf16.mxu0 0
  %1513 = vmatpush1.bf16.msra.mxu0 0
  %1514 = vmatprep.subr.bf16.mxu0 0
  %1515 = vmatpush1.bf16.msra.mxu0 0
  %1516 = vmatprep.subr.bf16.mxu0 0
  %1517 = vmatpush1.bf16.msra.mxu0 0
  %1518 = vmatprep.subr.bf16.mxu0 0
  %1519 = vmatpush1.bf16.msra.mxu0 0
  %1520 = vmatprep.subr.bf16.mxu0 0
  %1521 = vmatpush1.bf16.msra.mxu0 0
  %1522 = vmatprep.subr.bf16.mxu0 0
  %1523 = vmatpush1.bf16.msra.mxu0 0
  %1524 = vmatprep.mubr.bf16.mxu0 0
  %1525 = vmatmul.mubr.bf16.gmra.mrb[0].mxu0 %v1427
  %v1526 = vpop.f32.mrb[0].mxu0
  %v1527 = vadd.f32 %v715, %v1526
  %v1528 = vpop.f32.mrb[0].mxu0
  %v1529 = vpop.f32.mrb[0].mxu0
  %v1530 = vpop.f32.mrb[0].mxu0
  %1531 = vdwg.mxu0
  %v1532 = vpack.c.bf16 %v1527, %v1527
  %s1533 = scalar_lea.vmem %s9, 4
  %1534 = vst [vmem:[%s1533] sm:$0xf] %v1532
  %1535 = vmax.xlane.f32.xlu0 %v1527
  %v1536 = vpop.xlane.xlu0 %1535
  %v1537 = vsub.f32 %v1527, %v1536
  %v1538 = vmul.f32 %v1537, 1.442695
  %v1539 = vpow.pop %v1538
  %1540 = vadd.xlane.f32.xlu0 %v1539
  %v1541 = vpop.xlane.xlu0 %1540
  %v1542 = vrcp.pop %v1541
  %v1543 = vpack.c.bf16 %v1539, %v1539
  %v1544 = vld [vmem:[%s1] sm:$0xf]
  %v1545 = vld [vmem:[%s1 + $0x4] sm:$0xf]
  %v1546 = vld [vmem:[%s1 + $0x8] sm:$0xf]
  %v1547 = vld [vmem:[%s1 + $0xc] sm:$0xf]
  %v1548 = vld [vmem:[%s1 + $0x10] sm:$0xf]
  %v1549 = vld [vmem:[%s1 + $0x14] sm:$0xf]
  %v1550 = vld [vmem:[%s1 + $0x18] sm:$0xf]
  %v1551 = vld [vmem:[%s1 + $0x1c] sm:$0xf]
  %v1552 = vld [vmem:[%s1 + $0x20] sm:$0xf]
  %v1553 = vld [vmem:[%s1 + $0x24] sm:$0xf]
  %v1554 = vld [vmem:[%s1 + $0x28] sm:$0xf]
  %v1555 = vld [vmem:[%s1 + $0x2c] sm:$0xf]
  %v1556 = vld [vmem:[%s1 + $0x30] sm:$0xf]
  %v1557 = vld [vmem:[%s1 + $0x34] sm:$0xf]
  %v1558 = vld [vmem:[%s1 + $0x38] sm:$0xf]
  %v1559 = vld [vmem:[%s1 + $0x3c] sm:$0xf]
  %v1576 = vunpack.c.l.b16 %v1544
  %v1577 = vunpack.c.l.b16 %v1545
  %v1578 = vunpack.c.l.b16 %v1546
  %v1579 = vunpack.c.l.b16 %v1547
  %v1580 = vunpack.c.l.b16 %v1548
  %v1581 = vunpack.c.l.b16 %v1549
  %v1582 = vunpack.c.l.b16 %v1550
  %v1583 = vunpack.c.l.b16 %v1551
  %v1584 = vunpack.c.l.b16 %v1552
  %v1585 = vunpack.c.l.b16 %v1553
  %v1586 = vunpack.c.l.b16 %v1554
  %v1587 = vunpack.c.l.b16 %v1555
  %v1588 = vunpack.c.l.b16 %v1556
  %v1589 = vunpack.c.l.b16 %v1557
  %v1590 = vunpack.c.l.b16 %v1558
  %v1591 = vunpack.c.l.b16 %v1559
  %v1592 = vpack.c.b16 %v1577, %v1576
  %v1593 = vpack.c.b16 %v1579, %v1578
  %v1594 = vpack.c.b16 %v1581, %v1580
  %v1595 = vpack.c.b16 %v1583, %v1582
  %v1596 = vpack.c.b16 %v1585, %v1584
  %v1597 = vpack.c.b16 %v1587, %v1586
  %v1598 = vpack.c.b16 %v1589, %v1588
  %v1599 = vpack.c.b16 %v1591, %v1590
  %1608 = vmatprep.subr.bf16.mxu0 0
  %1609 = vmatpush1.bf16.msra.mxu0 %v1592
  %1610 = vmatprep.subr.bf16.mxu0 0
  %1611 = vmatpush1.bf16.msra.mxu0 %v1593
  %1612 = vmatprep.subr.bf16.mxu0 0
  %1613 = vmatpush1.bf16.msra.mxu0 %v1594
  %1614 = vmatprep.subr.bf16.mxu0 0
  %1615 = vmatpush1.bf16.msra.mxu0 %v1595
  %1616 = vmatprep.subr.bf16.mxu0 0
  %1617 = vmatpush1.bf16.msra.mxu0 %v1596
  %1618 = vmatprep.subr.bf16.mxu0 0
  %1619 = vmatpush1.bf16.msra.mxu0 %v1597
  %1620 = vmatprep.subr.bf16.mxu0 0
  %1621 = vmatpush1.bf16.msra.mxu0 %v1598
  %1622 = vmatprep.subr.bf16.mxu0 0
  %1623 = vmatpush1.bf16.msra.mxu0 %v1599
  %1624 = vmatprep.subr.bf16.mxu0 0
  %1625 = vmatpush1.bf16.msra.mxu0 0
  %1626 = vmatprep.subr.bf16.mxu0 0
  %1627 = vmatpush1.bf16.msra.mxu0 0
  %1628 = vmatprep.subr.bf16.mxu0 0
  %1629 = vmatpush1.bf16.msra.mxu0 0
  %1630 = vmatprep.subr.bf16.mxu0 0
  %1631 = vmatpush1.bf16.msra.mxu0 0
  %1632 = vmatprep.subr.bf16.mxu0 0
  %1633 = vmatpush1.bf16.msra.mxu0 0
  %1634 = vmatprep.subr.bf16.mxu0 0
  %1635 = vmatpush1.bf16.msra.mxu0 0
  %1636 = vmatprep.subr.bf16.mxu0 0
  %1637 = vmatpush1.bf16.msra.mxu0 0
  %1638 = vmatprep.subr.bf16.mxu0 0
  %1639 = vmatpush1.bf16.msra.mxu0 0
  %1640 = vmatprep.mubr.bf16.mxu0 0
  %1641 = vmatmul.mubr.bf16.gmra.mrb[0].mxu0 %v1543
  %v1642 = vpop.f32.mrb[0].mxu0
  %v1643 = vadd.f32 0.0, %v1642
  %v1644 = vpop.f32.mrb[0].mxu0
  %v1645 = vpop.f32.mrb[0].mxu0
  %v1646 = vpop.f32.mrb[0].mxu0
  %1647 = vdwg.mxu0
  %v1648 = vmul.f32 %v1643, %v1542
  %v1649 = vadd.f32 %v1648, %v163
  %v1650 = vpack.c.bf16 %v1649, %v1649
  %v1651 = vld [vmem:[%s3] sm:$0xff]
  %v1652 = vld [vmem:[%s3 + $0x8] sm:$0xf]
  %v1653 = vld [vmem:[%s3 + $0xc] sm:$0xff]
  %v1654 = vld [vmem:[%s3 + $0x14] sm:$0xf]
  %v1655 = vld [vmem:[%s3 + $0x18] sm:$0xff]
  %v1656 = vld [vmem:[%s3 + $0x20] sm:$0xf]
  %v1657 = vld [vmem:[%s3 + $0x24] sm:$0xff]
  %v1658 = vld [vmem:[%s3 + $0x2c] sm:$0xf]
  %v1659 = vld [vmem:[%s3 + $0x30] sm:$0xff]
  %v1660 = vld [vmem:[%s3 + $0x38] sm:$0xf]
  %v1661 = vld [vmem:[%s3 + $0x3c] sm:$0xff]
  %v1662 = vld [vmem:[%s3 + $0x44] sm:$0xf]
  %v1663 = vld [vmem:[%s3 + $0x48] sm:$0xff]
  %v1664 = vld [vmem:[%s3 + $0x50] sm:$0xf]
  %v1665 = vld [vmem:[%s3 + $0x54] sm:$0xff]
  %v1666 = vld [vmem:[%s3 + $0x5c] sm:$0xf]
  %v1667 = vld [vmem:[%s3 + $0x60] sm:$0xff]
  %v1668 = vld [vmem:[%s3 + $0x68] sm:$0xf]
  %v1669 = vld [vmem:[%s3 + $0x6c] sm:$0xff]
  %v1670 = vld [vmem:[%s3 + $0x74] sm:$0xf]
  %v1671 = vld [vmem:[%s3 + $0x78] sm:$0xff]
  %v1672 = vld [vmem:[%s3 + $0x80] sm:$0xf]
  %v1673 = vld [vmem:[%s3 + $0x84] sm:$0xff]
  %v1674 = vld [vmem:[%s3 + $0x8c] sm:$0xf]
  %v1675 = vld [vmem:[%s3 + $0x90] sm:$0xff]
  %v1676 = vld [vmem:[%s3 + $0x98] sm:$0xf]
  %v1677 = vld [vmem:[%s3 + $0x9c] sm:$0xff]
  %v1678 = vld [vmem:[%s3 + $0xa4] sm:$0xf]
  %v1679 = vld [vmem:[%s3 + $0xa8] sm:$0xff]
  %v1680 = vld [vmem:[%s3 + $0xb0] sm:$0xf]
  %v1681 = vld [vmem:[%s3 + $0xb4] sm:$0xff]
  %v1682 = vld [vmem:[%s3 + $0xbc] sm:$0xf]
  %v1715 = vunpack.c.l.b16 %v1651
  %v1716 = vunpack.c.h.b16 %v1651
  %v1717 = vunpack.c.l.b16 %v1652
  %v1718 = vunpack.c.l.b16 %v1653
  %v1719 = vunpack.c.h.b16 %v1653
  %v1720 = vunpack.c.l.b16 %v1654
  %v1721 = vunpack.c.l.b16 %v1655
  %v1722 = vunpack.c.h.b16 %v1655
  %v1723 = vunpack.c.l.b16 %v1656
  %v1724 = vunpack.c.l.b16 %v1657
  %v1725 = vunpack.c.h.b16 %v1657
  %v1726 = vunpack.c.l.b16 %v1658
  %v1727 = vunpack.c.l.b16 %v1659
  %v1728 = vunpack.c.h.b16 %v1659
  %v1729 = vunpack.c.l.b16 %v1660
  %v1730 = vunpack.c.l.b16 %v1661
  %v1731 = vunpack.c.h.b16 %v1661
  %v1732 = vunpack.c.l.b16 %v1662
  %v1733 = vunpack.c.l.b16 %v1663
  %v1734 = vunpack.c.h.b16 %v1663
  %v1735 = vunpack.c.l.b16 %v1664
  %v1736 = vunpack.c.l.b16 %v1665
  %v1737 = vunpack.c.h.b16 %v1665
  %v1738 = vunpack.c.l.b16 %v1666
  %v1739 = vunpack.c.l.b16 %v1667
  %v1740 = vunpack.c.h.b16 %v1667
  %v1741 = vunpack.c.l.b16 %v1668
  %v1742 = vunpack.c.l.b16 %v1669
  %v1743 = vunpack.c.h.b16 %v1669
  %v1744 = vunpack.c.l.b16 %v1670
  %v1745 = vunpack.c.l.b16 %v1671
  %v1746 = vunpack.c.h.b16 %v1671
  %v1747 = vunpack.c.l.b16 %v1672
  %v1748 = vunpack.c.l.b16 %v1673
  %v1749 = vunpack.c.h.b16 %v1673
  %v1750 = vunpack.c.l.b16 %v1674
  %v1751 = vunpack.c.l.b16 %v1675
  %v1752 = vunpack.c.h.b16 %v1675
  %v1753 = vunpack.c.l.b16 %v1676
  %v1754 = vunpack.c.l.b16 %v1677
  %v1755 = vunpack.c.h.b16 %v1677
  %v1756 = vunpack.c.l.b16 %v1678
  %v1757 = vunpack.c.l.b16 %v1679
  %v1758 = vunpack.c.h.b16 %v1679
  %v1759 = vunpack.c.l.b16 %v1680
  %v1760 = vunpack.c.l.b16 %v1681
  %v1761 = vunpack.c.h.b16 %v1681
  %v1762 = vunpack.c.l.b16 %v1682
  %v1763 = vpack.c.b16 %v1718, %v1715
  %v1764 = vpack.c.b16 %v1719, %v1716
  %v1765 = vpack.c.b16 %v1720, %v1717
  %v1766 = vpack.c.b16 %v1724, %v1721
  %v1767 = vpack.c.b16 %v1725, %v1722
  %v1768 = vpack.c.b16 %v1726, %v1723
  %v1769 = vpack.c.b16 %v1730, %v1727
  %v1770 = vpack.c.b16 %v1731, %v1728
  %v1771 = vpack.c.b16 %v1732, %v1729
  %v1772 = vpack.c.b16 %v1736, %v1733
  %v1773 = vpack.c.b16 %v1737, %v1734
  %v1774 = vpack.c.b16 %v1738, %v1735
  %v1775 = vpack.c.b16 %v1742, %v1739
  %v1776 = vpack.c.b16 %v1743, %v1740
  %v1777 = vpack.c.b16 %v1744, %v1741
  %v1778 = vpack.c.b16 %v1748, %v1745
  %v1779 = vpack.c.b16 %v1749, %v1746
  %v1780 = vpack.c.b16 %v1750, %v1747
  %v1781 = vpack.c.b16 %v1754, %v1751
  %v1782 = vpack.c.b16 %v1755, %v1752
  %v1783 = vpack.c.b16 %v1756, %v1753
  %v1784 = vpack.c.b16 %v1760, %v1757
  %v1785 = vpack.c.b16 %v1761, %v1758
  %v1786 = vpack.c.b16 %v1762, %v1759
  %1811 = vmatprep.subr.bf16.mxu0 %v1764
  %1812 = vmatpush1.bf16.msra.mxu0 %v1763
  %1813 = vmatprep.subr.bf16.mxu0 %v1767
  %1814 = vmatpush1.bf16.msra.mxu0 %v1766
  %1815 = vmatprep.subr.bf16.mxu0 %v1770
  %1816 = vmatpush1.bf16.msra.mxu0 %v1769
  %1817 = vmatprep.subr.bf16.mxu0 %v1773
  %1818 = vmatpush1.bf16.msra.mxu0 %v1772
  %1819 = vmatprep.subr.bf16.mxu0 %v1776
  %1820 = vmatpush1.bf16.msra.mxu0 %v1775
  %1821 = vmatprep.subr.bf16.mxu0 %v1779
  %1822 = vmatpush1.bf16.msra.mxu0 %v1778
  %1823 = vmatprep.subr.bf16.mxu0 %v1782
  %1824 = vmatpush1.bf16.msra.mxu0 %v1781
  %1825 = vmatprep.subr.bf16.mxu0 %v1785
  %1826 = vmatpush1.bf16.msra.mxu0 %v1784
  %1827 = vmatprep.subr.bf16.mxu0 0
  %1828 = vmatpush1.bf16.msra.mxu0 0
  %1829 = vmatprep.subr.bf16.mxu0 0
  %1830 = vmatpush1.bf16.msra.mxu0 0
  %1831 = vmatprep.subr.bf16.mxu0 0
  %1832 = vmatpush1.bf16.msra.mxu0 0
  %1833 = vmatprep.subr.bf16.mxu0 0
  %1834 = vmatpush1.bf16.msra.mxu0 0
  %1835 = vmatprep.subr.bf16.mxu0 0
  %1836 = vmatpush1.bf16.msra.mxu0 0
  %1837 = vmatprep.subr.bf16.mxu0 0
  %1838 = vmatpush1.bf16.msra.mxu0 0
  %1839 = vmatprep.subr.bf16.mxu0 0
  %1840 = vmatpush1.bf16.msra.mxu0 0
  %1841 = vmatprep.subr.bf16.mxu0 0
  %1842 = vmatpush1.bf16.msra.mxu0 0
  %1843 = vmatprep.mubr.bf16.mxu0 0
  %1844 = vmatmul.mubr.bf16.gmra.mrb[0].mxu0 %v1650
  %v1845 = vpop.f32.mrb[0].mxu0
  %v1846 = vadd.f32 %v203, %v1845
  %v1847 = vpop.f32.mrb[0].mxu0
  %v1848 = vadd.f32 %v207, %v1847
  %v1849 = vpop.f32.mrb[0].mxu0
  %v1850 = vpop.f32.mrb[0].mxu0
  %1851 = vdwg.mxu0
  %1852 = vmatprep.subr.bf16.mxu0 0
  %1853 = vmatpush1.bf16.msra.mxu0 %v1765
  %1854 = vmatprep.subr.bf16.mxu0 0
  %1855 = vmatpush1.bf16.msra.mxu0 %v1768
  %1856 = vmatprep.subr.bf16.mxu0 0
  %1857 = vmatpush1.bf16.msra.mxu0 %v1771
  %1858 = vmatprep.subr.bf16.mxu0 0
  %1859 = vmatpush1.bf16.msra.mxu0 %v1774
  %1860 = vmatprep.subr.bf16.mxu0 0
  %1861 = vmatpush1.bf16.msra.mxu0 %v1777
  %1862 = vmatprep.subr.bf16.mxu0 0
  %1863 = vmatpush1.bf16.msra.mxu0 %v1780
  %1864 = vmatprep.subr.bf16.mxu0 0
  %1865 = vmatpush1.bf16.msra.mxu0 %v1783
  %1866 = vmatprep.subr.bf16.mxu0 0
  %1867 = vmatpush1.bf16.msra.mxu0 %v1786
  %1868 = vmatprep.subr.bf16.mxu0 0
  %1869 = vmatpush1.bf16.msra.mxu0 0
  %1870 = vmatprep.subr.bf16.mxu0 0
  %1871 = vmatpush1.bf16.msra.mxu0 0
  %1872 = vmatprep.subr.bf16.mxu0 0
  %1873 = vmatpush1.bf16.msra.mxu0 0
  %1874 = vmatprep.subr.bf16.mxu0 0
  %1875 = vmatpush1.bf16.msra.mxu0 0
  %1876 = vmatprep.subr.bf16.mxu0 0
  %1877 = vmatpush1.bf16.msra.mxu0 0
  %1878 = vmatprep.subr.bf16.mxu0 0
  %1879 = vmatpush1.bf16.msra.mxu0 0
  %1880 = vmatprep.subr.bf16.mxu0 0
  %1881 = vmatpush1.bf16.msra.mxu0 0
  %1882 = vmatprep.subr.bf16.mxu0 0
  %1883 = vmatpush1.bf16.msra.mxu0 0
  %1884 = vmatprep.mubr.bf16.mxu0 0
  %1885 = vmatmul.mubr.bf16.gmra.mrb[0].mxu0 %v1650
  %v1886 = vpop.f32.mrb[0].mxu0
  %v1887 = vadd.f32 %v211, %v1886
  %v1888 = vpop.f32.mrb[0].mxu0
  %v1889 = vpop.f32.mrb[0].mxu0
  %v1890 = vpop.f32.mrb[0].mxu0
  %1891 = vdwg.mxu0
  %v1892 = vld [vmem:[%s4] sm:$0xff]
  %v1893 = vld [vmem:[%s4 + $0x8] sm:$0xf]
  %v1894 = vld [vmem:[%s4 + $0xc] sm:$0xff]
  %v1895 = vld [vmem:[%s4 + $0x14] sm:$0xf]
  %v1896 = vld [vmem:[%s4 + $0x18] sm:$0xff]
  %v1897 = vld [vmem:[%s4 + $0x20] sm:$0xf]
  %v1898 = vld [vmem:[%s4 + $0x24] sm:$0xff]
  %v1899 = vld [vmem:[%s4 + $0x2c] sm:$0xf]
  %v1900 = vld [vmem:[%s4 + $0x30] sm:$0xff]
  %v1901 = vld [vmem:[%s4 + $0x38] sm:$0xf]
  %v1902 = vld [vmem:[%s4 + $0x3c] sm:$0xff]
  %v1903 = vld [vmem:[%s4 + $0x44] sm:$0xf]
  %v1904 = vld [vmem:[%s4 + $0x48] sm:$0xff]
  %v1905 = vld [vmem:[%s4 + $0x50] sm:$0xf]
  %v1906 = vld [vmem:[%s4 + $0x54] sm:$0xff]
  %v1907 = vld [vmem:[%s4 + $0x5c] sm:$0xf]
  %v1908 = vld [vmem:[%s4 + $0x60] sm:$0xff]
  %v1909 = vld [vmem:[%s4 + $0x68] sm:$0xf]
  %v1910 = vld [vmem:[%s4 + $0x6c] sm:$0xff]
  %v1911 = vld [vmem:[%s4 + $0x74] sm:$0xf]
  %v1912 = vld [vmem:[%s4 + $0x78] sm:$0xff]
  %v1913 = vld [vmem:[%s4 + $0x80] sm:$0xf]
  %v1914 = vld [vmem:[%s4 + $0x84] sm:$0xff]
  %v1915 = vld [vmem:[%s4 + $0x8c] sm:$0xf]
  %v1916 = vld [vmem:[%s4 + $0x90] sm:$0xff]
  %v1917 = vld [vmem:[%s4 + $0x98] sm:$0xf]
  %v1918 = vld [vmem:[%s4 + $0x9c] sm:$0xff]
  %v1919 = vld [vmem:[%s4 + $0xa4] sm:$0xf]
  %v1920 = vld [vmem:[%s4 + $0xa8] sm:$0xff]
  %v1921 = vld [vmem:[%s4 + $0xb0] sm:$0xf]
  %v1922 = vld [vmem:[%s4 + $0xb4] sm:$0xff]
  %v1923 = vld [vmem:[%s4 + $0xbc] sm:$0xf]
  %v1956 = vunpack.c.l.b16 %v1892
  %v1957 = vunpack.c.h.b16 %v1892
  %v1958 = vunpack.c.l.b16 %v1893
  %v1959 = vunpack.c.l.b16 %v1894
  %v1960 = vunpack.c.h.b16 %v1894
  %v1961 = vunpack.c.l.b16 %v1895
  %v1962 = vunpack.c.l.b16 %v1896
  %v1963 = vunpack.c.h.b16 %v1896
  %v1964 = vunpack.c.l.b16 %v1897
  %v1965 = vunpack.c.l.b16 %v1898
  %v1966 = vunpack.c.h.b16 %v1898
  %v1967 = vunpack.c.l.b16 %v1899
  %v1968 = vunpack.c.l.b16 %v1900
  %v1969 = vunpack.c.h.b16 %v1900
  %v1970 = vunpack.c.l.b16 %v1901
  %v1971 = vunpack.c.l.b16 %v1902
  %v1972 = vunpack.c.h.b16 %v1902
  %v1973 = vunpack.c.l.b16 %v1903
  %v1974 = vunpack.c.l.b16 %v1904
  %v1975 = vunpack.c.h.b16 %v1904
  %v1976 = vunpack.c.l.b16 %v1905
  %v1977 = vunpack.c.l.b16 %v1906
  %v1978 = vunpack.c.h.b16 %v1906
  %v1979 = vunpack.c.l.b16 %v1907
  %v1980 = vunpack.c.l.b16 %v1908
  %v1981 = vunpack.c.h.b16 %v1908
  %v1982 = vunpack.c.l.b16 %v1909
  %v1983 = vunpack.c.l.b16 %v1910
  %v1984 = vunpack.c.h.b16 %v1910
  %v1985 = vunpack.c.l.b16 %v1911
  %v1986 = vunpack.c.l.b16 %v1912
  %v1987 = vunpack.c.h.b16 %v1912
  %v1988 = vunpack.c.l.b16 %v1913
  %v1989 = vunpack.c.l.b16 %v1914
  %v1990 = vunpack.c.h.b16 %v1914
  %v1991 = vunpack.c.l.b16 %v1915
  %v1992 = vunpack.c.l.b16 %v1916
  %v1993 = vunpack.c.h.b16 %v1916
  %v1994 = vunpack.c.l.b16 %v1917
  %v1995 = vunpack.c.l.b16 %v1918
  %v1996 = vunpack.c.h.b16 %v1918
  %v1997 = vunpack.c.l.b16 %v1919
  %v1998 = vunpack.c.l.b16 %v1920
  %v1999 = vunpack.c.h.b16 %v1920
  %v2000 = vunpack.c.l.b16 %v1921
  %v2001 = vunpack.c.l.b16 %v1922
  %v2002 = vunpack.c.h.b16 %v1922
  %v2003 = vunpack.c.l.b16 %v1923
  %v2004 = vpack.c.b16 %v1959, %v1956
  %v2005 = vpack.c.b16 %v1960, %v1957
  %v2006 = vpack.c.b16 %v1961, %v1958
  %v2007 = vpack.c.b16 %v1965, %v1962
  %v2008 = vpack.c.b16 %v1966, %v1963
  %v2009 = vpack.c.b16 %v1967, %v1964
  %v2010 = vpack.c.b16 %v1971, %v1968
  %v2011 = vpack.c.b16 %v1972, %v1969
  %v2012 = vpack.c.b16 %v1973, %v1970
  %v2013 = vpack.c.b16 %v1977, %v1974
  %v2014 = vpack.c.b16 %v1978, %v1975
  %v2015 = vpack.c.b16 %v1979, %v1976
  %v2016 = vpack.c.b16 %v1983, %v1980
  %v2017 = vpack.c.b16 %v1984, %v1981
  %v2018 = vpack.c.b16 %v1985, %v1982
  %v2019 = vpack.c.b16 %v1989, %v1986
  %v2020 = vpack.c.b16 %v1990, %v1987
  %v2021 = vpack.c.b16 %v1991, %v1988
  %v2022 = vpack.c.b16 %v1995, %v1992
  %v2023 = vpack.c.b16 %v1996, %v1993
  %v2024 = vpack.c.b16 %v1997, %v1994
  %v2025 = vpack.c.b16 %v2001, %v1998
  %v2026 = vpack.c.b16 %v2002, %v1999
  %v2027 = vpack.c.b16 %v2003, %v2000
  %2052 = vmatprep.subr.bf16.mxu0 %v2005
  %2053 = vmatpush1.bf16.msra.mxu0 %v2004
  %2054 = vmatprep.subr.bf16.mxu0 %v2008
  %2055 = vmatpush1.bf16.msra.mxu0 %v2007
  %2056 = vmatprep.subr.bf16.mxu0 %v2011
  %2057 = vmatpush1.bf16.msra.mxu0 %v2010
  %2058 = vmatprep.subr.bf16.mxu0 %v2014
  %2059 = vmatpush1.bf16.msra.mxu0 %v2013
  %2060 = vmatprep.subr.bf16.mxu0 %v2017
  %2061 = vmatpush1.bf16.msra.mxu0 %v2016
  %2062 = vmatprep.subr.bf16.mxu0 %v2020
  %2063 = vmatpush1.bf16.msra.mxu0 %v2019
  %2064 = vmatprep.subr.bf16.mxu0 %v2023
  %2065 = vmatpush1.bf16.msra.mxu0 %v2022
  %2066 = vmatprep.subr.bf16.mxu0 %v2026
  %2067 = vmatpush1.bf16.msra.mxu0 %v2025
  %2068 = vmatprep.subr.bf16.mxu0 0
  %2069 = vmatpush1.bf16.msra.mxu0 0
  %2070 = vmatprep.subr.bf16.mxu0 0
  %2071 = vmatpush1.bf16.msra.mxu0 0
  %2072 = vmatprep.subr.bf16.mxu0 0
  %2073 = vmatpush1.bf16.msra.mxu0 0
  %2074 = vmatprep.subr.bf16.mxu0 0
  %2075 = vmatpush1.bf16.msra.mxu0 0
  %2076 = vmatprep.subr.bf16.mxu0 0
  %2077 = vmatpush1.bf16.msra.mxu0 0
  %2078 = vmatprep.subr.bf16.mxu0 0
  %2079 = vmatpush1.bf16.msra.mxu0 0
  %2080 = vmatprep.subr.bf16.mxu0 0
  %2081 = vmatpush1.bf16.msra.mxu0 0
  %2082 = vmatprep.subr.bf16.mxu0 0
  %2083 = vmatpush1.bf16.msra.mxu0 0
  %2084 = vmatprep.mubr.bf16.mxu0 0
  %2085 = vmatmul.mubr.bf16.gmra.mrb[0].mxu0 %v1427
  %v2086 = vpop.f32.mrb[0].mxu0
  %v2087 = vadd.f32 0.0, %v2086
  %v2088 = vpop.f32.mrb[0].mxu0
  %v2089 = vadd.f32 0.0, %v2088
  %v2090 = vpop.f32.mrb[0].mxu0
  %v2091 = vpop.f32.mrb[0].mxu0
  %2092 = vdwg.mxu0
  %2093 = vmatprep.subr.bf16.mxu0 0
  %2094 = vmatpush1.bf16.msra.mxu0 %v2006
  %2095 = vmatprep.subr.bf16.mxu0 0
  %2096 = vmatpush1.bf16.msra.mxu0 %v2009
  %2097 = vmatprep.subr.bf16.mxu0 0
  %2098 = vmatpush1.bf16.msra.mxu0 %v2012
  %2099 = vmatprep.subr.bf16.mxu0 0
  %2100 = vmatpush1.bf16.msra.mxu0 %v2015
  %2101 = vmatprep.subr.bf16.mxu0 0
  %2102 = vmatpush1.bf16.msra.mxu0 %v2018
  %2103 = vmatprep.subr.bf16.mxu0 0
  %2104 = vmatpush1.bf16.msra.mxu0 %v2021
  %2105 = vmatprep.subr.bf16.mxu0 0
  %2106 = vmatpush1.bf16.msra.mxu0 %v2024
  %2107 = vmatprep.subr.bf16.mxu0 0
  %2108 = vmatpush1.bf16.msra.mxu0 %v2027
  %2109 = vmatprep.subr.bf16.mxu0 0
  %2110 = vmatpush1.bf16.msra.mxu0 0
  %2111 = vmatprep.subr.bf16.mxu0 0
  %2112 = vmatpush1.bf16.msra.mxu0 0
  %2113 = vmatprep.subr.bf16.mxu0 0
  %2114 = vmatpush1.bf16.msra.mxu0 0
  %2115 = vmatprep.subr.bf16.mxu0 0
  %2116 = vmatpush1.bf16.msra.mxu0 0
  %2117 = vmatprep.subr.bf16.mxu0 0
  %2118 = vmatpush1.bf16.msra.mxu0 0
  %2119 = vmatprep.subr.bf16.mxu0 0
  %2120 = vmatpush1.bf16.msra.mxu0 0
  %2121 = vmatprep.subr.bf16.mxu0 0
  %2122 = vmatpush1.bf16.msra.mxu0 0
  %2123 = vmatprep.subr.bf16.mxu0 0
  %2124 = vmatpush1.bf16.msra.mxu0 0
  %2125 = vmatprep.mubr.bf16.mxu0 0
  %2126 = vmatmul.mubr.bf16.gmra.mrb[0].mxu0 %v1427
  %v2127 = vpop.f32.mrb[0].mxu0
  %v2128 = vadd.f32 0.0, %v2127
  %v2129 = vpop.f32.mrb[0].mxu0
  %v2130 = vpop.f32.mrb[0].mxu0
  %v2131 = vpop.f32.mrb[0].mxu0
  %2132 = vdwg.mxu0
  %v2133 = vadd.f32 %v1846, %v2087
  %v2134 = vxor.u32 %v2133, 2147483648
  %v2135 = vmul.f32 %v2134, 1.442695
  %v2136 = vpow.pop %v2135
  %v2137 = vadd.f32 %v2136, 1.0
  %v2138 = vrcp.pop %v2137
  %v2139 = vmul.f32 1.0, %v2138
  %v2140 = vadd.f32 %v1848, %v2089
  %v2141 = vxor.u32 %v2140, 2147483648
  %v2142 = vmul.f32 %v2141, 1.442695
  %v2143 = vpow.pop %v2142
  %v2144 = vadd.f32 %v2143, 1.0
  %v2145 = vrcp.pop %v2144
  %v2146 = vmul.f32 1.0, %v2145
  %v2147 = vadd.f32 %v2128, %v684
  %v2148 = vmul.f32 %v2139, %v2147
  %v2149 = vadd.f32 %v1887, %v2148
  %v2150 = vtanh.pop %v2149
  %v2151 = vsub.f32 1.0, %v2146
  %v2152 = vmul.f32 %v2151, %v2150
  %v2153 = vmul.f32 %v2146, %v1426
  %v2154 = vadd.f32 %v2152, %v2153
  %v2155 = vpack.c.bf16 %v2154, %v2154
  %v2156 = vld [vmem:[%s7] sm:$0xf]
  %v2157 = vld [vmem:[%s7 + $0x4] sm:$0xf]
  %v2158 = vld [vmem:[%s7 + $0x8] sm:$0xf]
  %v2159 = vld [vmem:[%s7 + $0xc] sm:$0xf]
  %v2160 = vld [vmem:[%s7 + $0x10] sm:$0xf]
  %v2161 = vld [vmem:[%s7 + $0x14] sm:$0xf]
  %v2162 = vld [vmem:[%s7 + $0x18] sm:$0xf]
  %v2163 = vld [vmem:[%s7 + $0x1c] sm:$0xf]
  %v2164 = vld [vmem:[%s7 + $0x20] sm:$0xf]
  %v2165 = vld [vmem:[%s7 + $0x24] sm:$0xf]
  %v2166 = vld [vmem:[%s7 + $0x28] sm:$0xf]
  %v2167 = vld [vmem:[%s7 + $0x2c] sm:$0xf]
  %v2168 = vld [vmem:[%s7 + $0x30] sm:$0xf]
  %v2169 = vld [vmem:[%s7 + $0x34] sm:$0xf]
  %v2170 = vld [vmem:[%s7 + $0x38] sm:$0xf]
  %v2171 = vld [vmem:[%s7 + $0x3c] sm:$0xf]
  %v2188 = vunpack.c.l.b16 %v2156
  %v2189 = vunpack.c.l.b16 %v2157
  %v2190 = vunpack.c.l.b16 %v2158
  %v2191 = vunpack.c.l.b16 %v2159
  %v2192 = vunpack.c.l.b16 %v2160
  %v2193 = vunpack.c.l.b16 %v2161
  %v2194 = vunpack.c.l.b16 %v2162
  %v2195 = vunpack.c.l.b16 %v2163
  %v2196 = vunpack.c.l.b16 %v2164
  %v2197 = vunpack.c.l.b16 %v2165
  %v2198 = vunpack.c.l.b16 %v2166
  %v2199 = vunpack.c.l.b16 %v2167
  %v2200 = vunpack.c.l.b16 %v2168
  %v2201 = vunpack.c.l.b16 %v2169
  %v2202 = vunpack.c.l.b16 %v2170
  %v2203 = vunpack.c.l.b16 %v2171
  %v2204 = vpack.c.b16 %v2189, %v2188
  %v2205 = vpack.c.b16 %v2191, %v2190
  %v2206 = vpack.c.b16 %v2193, %v2192
  %v2207 = vpack.c.b16 %v2195, %v2194
  %v2208 = vpack.c.b16 %v2197, %v2196
  %v2209 = vpack.c.b16 %v2199, %v2198
  %v2210 = vpack.c.b16 %v2201, %v2200
  %v2211 = vpack.c.b16 %v2203, %v2202
  %2220 = vmatprep.subr.bf16.mxu0 0
  %2221 = vmatpush1.bf16.msra.mxu0 %v2204
  %2222 = vmatprep.subr.bf16.mxu0 0
  %2223 = vmatpush1.bf16.msra.mxu0 %v2205
  %2224 = vmatprep.subr.bf16.mxu0 0
  %2225 = vmatpush1.bf16.msra.mxu0 %v2206
  %2226 = vmatprep.subr.bf16.mxu0 0
  %2227 = vmatpush1.bf16.msra.mxu0 %v2207
  %2228 = vmatprep.subr.bf16.mxu0 0
  %2229 = vmatpush1.bf16.msra.mxu0 %v2208
  %2230 = vmatprep.subr.bf16.mxu0 0
  %2231 = vmatpush1.bf16.msra.mxu0 %v2209
  %2232 = vmatprep.subr.bf16.mxu0 0
  %2233 = vmatpush1.bf16.msra.mxu0 %v2210
  %2234 = vmatprep.subr.bf16.mxu0 0
  %2235 = vmatpush1.bf16.msra.mxu0 %v2211
  %2236 = vmatprep.subr.bf16.mxu0 0
  %2237 = vmatpush1.bf16.msra.mxu0 0
  %2238 = vmatprep.subr.bf16.mxu0 0
  %2239 = vmatpush1.bf16.msra.mxu0 0
  %2240 = vmatprep.subr.bf16.mxu0 0
  %2241 = vmatpush1.bf16.msra.mxu0 0
  %2242 = vmatprep.subr.bf16.mxu0 0
  %2243 = vmatpush1.bf16.msra.mxu0 0
  %2244 = vmatprep.subr.bf16.mxu0 0
  %2245 = vmatpush1.bf16.msra.mxu0 0
  %2246 = vmatprep.subr.bf16.mxu0 0
  %2247 = vmatpush1.bf16.msra.mxu0 0
  %2248 = vmatprep.subr.bf16.mxu0 0
  %2249 = vmatpush1.bf16.msra.mxu0 0
  %2250 = vmatprep.subr.bf16.mxu0 0
  %2251 = vmatpush1.bf16.msra.mxu0 0
  %2252 = vmatprep.mubr.bf16.mxu0 0
  %2253 = vmatmul.mubr.bf16.gmra.mrb[0].mxu0 %v2155
  %v2254 = vpop.f32.mrb[0].mxu0
  %v2255 = vadd.f32 %v715, %v2254
  %v2256 = vpop.f32.mrb[0].mxu0
  %v2257 = vpop.f32.mrb[0].mxu0
  %v2258 = vpop.f32.mrb[0].mxu0
  %2259 = vdwg.mxu0
  %v2260 = vpack.c.bf16 %v2255, %v2255
  %s2261 = scalar_lea.vmem %s9, 8
  %2262 = vst [vmem:[%s2261] sm:$0xf] %v2260
  %2263 = vmax.xlane.f32.xlu0 %v2255
  %v2264 = vpop.xlane.xlu0 %2263
  %v2265 = vsub.f32 %v2255, %v2264
  %v2266 = vmul.f32 %v2265, 1.442695
  %v2267 = vpow.pop %v2266
  %2268 = vadd.xlane.f32.xlu0 %v2267
  %v2269 = vpop.xlane.xlu0 %2268
  %v2270 = vrcp.pop %v2269
  %v2271 = vpack.c.bf16 %v2267, %v2267
  %v2272 = vld [vmem:[%s1] sm:$0xf]
  %v2273 = vld [vmem:[%s1 + $0x4] sm:$0xf]
  %v2274 = vld [vmem:[%s1 + $0x8] sm:$0xf]
  %v2275 = vld [vmem:[%s1 + $0xc] sm:$0xf]
  %v2276 = vld [vmem:[%s1 + $0x10] sm:$0xf]
  %v2277 = vld [vmem:[%s1 + $0x14] sm:$0xf]
  %v2278 = vld [vmem:[%s1 + $0x18] sm:$0xf]
  %v2279 = vld [vmem:[%s1 + $0x1c] sm:$0xf]
  %v2280 = vld [vmem:[%s1 + $0x20] sm:$0xf]
  %v2281 = vld [vmem:[%s1 + $0x24] sm:$0xf]
  %v2282 = vld [vmem:[%s1 + $0x28] sm:$0xf]
  %v2283 = vld [vmem:[%s1 + $0x2c] sm:$0xf]
  %v2284 = vld [vmem:[%s1 + $0x30] sm:$0xf]
  %v2285 = vld [vmem:[%s1 + $0x34] sm:$0xf]
  %v2286 = vld [vmem:[%s1 + $0x38] sm:$0xf]
  %v2287 = vld [vmem:[%s1 + $0x3c] sm:$0xf]
  %v2304 = vunpack.c.l.b16 %v2272
  %v2305 = vunpack.c.l.b16 %v2273
  %v2306 = vunpack.c.l.b16 %v2274
  %v2307 = vunpack.c.l.b16 %v2275
  %v2308 = vunpack.c.l.b16 %v2276
  %v2309 = vunpack.c.l.b16 %v2277
  %v2310 = vunpack.c.l.b16 %v2278
  %v2311 = vunpack.c.l.b16 %v2279
  %v2312 = vunpack.c.l.b16 %v2280
  %v2313 = vunpack.c.l.b16 %v2281
  %v2314 = vunpack.c.l.b16 %v2282
  %v2315 = vunpack.c.l.b16 %v2283
  %v2316 = vunpack.c.l.b16 %v2284
  %v2317 = vunpack.c.l.b16 %v2285
  %v2318 = vunpack.c.l.b16 %v2286
  %v2319 = vunpack.c.l.b16 %v2287
  %v2320 = vpack.c.b16 %v2305, %v2304
  %v2321 = vpack.c.b16 %v2307, %v2306
  %v2322 = vpack.c.b16 %v2309, %v2308
  %v2323 = vpack.c.b16 %v2311, %v2310
  %v2324 = vpack.c.b16 %v2313, %v2312
  %v2325 = vpack.c.b16 %v2315, %v2314
  %v2326 = vpack.c.b16 %v2317, %v2316
  %v2327 = vpack.c.b16 %v2319, %v2318
  %2336 = vmatprep.subr.bf16.mxu0 0
  %2337 = vmatpush1.bf16.msra.mxu0 %v2320
  %2338 = vmatprep.subr.bf16.mxu0 0
  %2339 = vmatpush1.bf16.msra.mxu0 %v2321
  %2340 = vmatprep.subr.bf16.mxu0 0
  %2341 = vmatpush1.bf16.msra.mxu0 %v2322
  %2342 = vmatprep.subr.bf16.mxu0 0
  %2343 = vmatpush1.bf16.msra.mxu0 %v2323
  %2344 = vmatprep.subr.bf16.mxu0 0
  %2345 = vmatpush1.bf16.msra.mxu0 %v2324
  %2346 = vmatprep.subr.bf16.mxu0 0
  %2347 = vmatpush1.bf16.msra.mxu0 %v2325
  %2348 = vmatprep.subr.bf16.mxu0 0
  %2349 = vmatpush1.bf16.msra.mxu0 %v2326
  %2350 = vmatprep.subr.bf16.mxu0 0
  %2351 = vmatpush1.bf16.msra.mxu0 %v2327
  %2352 = vmatprep.subr.bf16.mxu0 0
  %2353 = vmatpush1.bf16.msra.mxu0 0
  %2354 = vmatprep.subr.bf16.mxu0 0
  %2355 = vmatpush1.bf16.msra.mxu0 0
  %2356 = vmatprep.subr.bf16.mxu0 0
  %2357 = vmatpush1.bf16.msra.mxu0 0
  %2358 = vmatprep.subr.bf16.mxu0 0
  %2359 = vmatpush1.bf16.msra.mxu0 0
  %2360 = vmatprep.subr.bf16.mxu0 0
  %2361 = vmatpush1.bf16.msra.mxu0 0
  %2362 = vmatprep.subr.bf16.mxu0 0
  %2363 = vmatpush1.bf16.msra.mxu0 0
  %2364 = vmatprep.subr.bf16.mxu0 0
  %2365 = vmatpush1.bf16.msra.mxu0 0
  %2366 = vmatprep.subr.bf16.mxu0 0
  %2367 = vmatpush1.bf16.msra.mxu0 0
  %2368 = vmatprep.mubr.bf16.mxu0 0
  %2369 = vmatmul.mubr.bf16.gmra.mrb[0].mxu0 %v2271
  %v2370 = vpop.f32.mrb[0].mxu0
  %v2371 = vadd.f32 0.0, %v2370
  %v2372 = vpop.f32.mrb[0].mxu0
  %v2373 = vpop.f32.mrb[0].mxu0
  %v2374 = vpop.f32.mrb[0].mxu0
  %2375 = vdwg.mxu0
  %v2376 = vmul.f32 %v2371, %v2270
  %v2377 = vadd.f32 %v2376, %v163
  %v2378 = vpack.c.bf16 %v2377, %v2377
  %v2379 = vld [vmem:[%s3] sm:$0xff]
  %v2380 = vld [vmem:[%s3 + $0x8] sm:$0xf]
  %v2381 = vld [vmem:[%s3 + $0xc] sm:$0xff]
  %v2382 = vld [vmem:[%s3 + $0x14] sm:$0xf]
  %v2383 = vld [vmem:[%s3 + $0x18] sm:$0xff]
  %v2384 = vld [vmem:[%s3 + $0x20] sm:$0xf]
  %v2385 = vld [vmem:[%s3 + $0x24] sm:$0xff]
  %v2386 = vld [vmem:[%s3 + $0x2c] sm:$0xf]
  %v2387 = vld [vmem:[%s3 + $0x30] sm:$0xff]
  %v2388 = vld [vmem:[%s3 + $0x38] sm:$0xf]
  %v2389 = vld [vmem:[%s3 + $0x3c] sm:$0xff]
  %v2390 = vld [vmem:[%s3 + $0x44] sm:$0xf]
  %v2391 = vld [vmem:[%s3 + $0x48] sm:$0xff]
  %v2392 = vld [vmem:[%s3 + $0x50] sm:$0xf]
  %v2393 = vld [vmem:[%s3 + $0x54] sm:$0xff]
  %v2394 = vld [vmem:[%s3 + $0x5c] sm:$0xf]
  %v2395 = vld [vmem:[%s3 + $0x60] sm:$0xff]
  %v2396 = vld [vmem:[%s3 + $0x68] sm:$0xf]
  %v2397 = vld [vmem:[%s3 + $0x6c] sm:$0xff]
  %v2398 = vld [vmem:[%s3 + $0x74] sm:$0xf]
  %v2399 = vld [vmem:[%s3 + $0x78] sm:$0xff]
  %v2400 = vld [vmem:[%s3 + $0x80] sm:$0xf]
  %v2401 = vld [vmem:[%s3 + $0x84] sm:$0xff]
  %v2402 = vld [vmem:[%s3 + $0x8c] sm:$0xf]
  %v2403 = vld [vmem:[%s3 + $0x90] sm:$0xff]
  %v2404 = vld [vmem:[%s3 + $0x98] sm:$0xf]
  %v2405 = vld [vmem:[%s3 + $0x9c] sm:$0xff]
  %v2406 = vld [vmem:[%s3 + $0xa4] sm:$0xf]
  %v2407 = vld [vmem:[%s3 + $0xa8] sm:$0xff]
  %v2408 = vld [vmem:[%s3 + $0xb0] sm:$0xf]
  %v2409 = vld [vmem:[%s3 + $0xb4] sm:$0xff]
  %v2410 = vld [vmem:[%s3 + $0xbc] sm:$0xf]
  %v2443 = vunpack.c.l.b16 %v2379
  %v2444 = vunpack.c.h.b16 %v2379
  %v2445 = vunpack.c.l.b16 %v2380
  %v2446 = vunpack.c.l.b16 %v2381
  %v2447 = vunpack.c.h.b16 %v2381
  %v2448 = vunpack.c.l.b16 %v2382
  %v2449 = vunpack.c.l.b16 %v2383
  %v2450 = vunpack.c.h.b16 %v2383
  %v2451 = vunpack.c.l.b16 %v2384
  %v2452 = vunpack.c.l.b16 %v2385
  %v2453 = vunpack.c.h.b16 %v2385
  %v2454 = vunpack.c.l.b16 %v2386
  %v2455 = vunpack.c.l.b16 %v2387
  %v2456 = vunpack.c.h.b16 %v2387
  %v2457 = vunpack.c.l.b16 %v2388
  %v2458 = vunpack.c.l.b16 %v2389
  %v2459 = vunpack.c.h.b16 %v2389
  %v2460 = vunpack.c.l.b16 %v2390
  %v2461 = vunpack.c.l.b16 %v2391
  %v2462 = vunpack.c.h.b16 %v2391
  %v2463 = vunpack.c.l.b16 %v2392
  %v2464 = vunpack.c.l.b16 %v2393
  %v2465 = vunpack.c.h.b16 %v2393
  %v2466 = vunpack.c.l.b16 %v2394
  %v2467 = vunpack.c.l.b16 %v2395
  %v2468 = vunpack.c.h.b16 %v2395
  %v2469 = vunpack.c.l.b16 %v2396
  %v2470 = vunpack.c.l.b16 %v2397
  %v2471 = vunpack.c.h.b16 %v2397
  %v2472 = vunpack.c.l.b16 %v2398
  %v2473 = vunpack.c.l.b16 %v2399
  %v2474 = vunpack.c.h.b16 %v2399
  %v2475 = vunpack.c.l.b16 %v2400
  %v2476 = vunpack.c.l.b16 %v2401
  %v2477 = vunpack.c.h.b16 %v2401
  %v2478 = vunpack.c.l.b16 %v2402
  %v2479 = vunpack.c.l.b16 %v2403
  %v2480 = vunpack.c.h.b16 %v2403
  %v2481 = vunpack.c.l.b16 %v2404
  %v2482 = vunpack.c.l.b16 %v2405
  %v2483 = vunpack.c.h.b16 %v2405
  %v2484 = vunpack.c.l.b16 %v2406
  %v2485 = vunpack.c.l.b16 %v2407
  %v2486 = vunpack.c.h.b16 %v2407
  %v2487 = vunpack.c.l.b16 %v2408
  %v2488 = vunpack.c.l.b16 %v2409
  %v2489 = vunpack.c.h.b16 %v2409
  %v2490 = vunpack.c.l.b16 %v2410
  %v2491 = vpack.c.b16 %v2446, %v2443
  %v2492 = vpack.c.b16 %v2447, %v2444
  %v2493 = vpack.c.b16 %v2448, %v2445
  %v2494 = vpack.c.b16 %v2452, %v2449
  %v2495 = vpack.c.b16 %v2453, %v2450
  %v2496 = vpack.c.b16 %v2454, %v2451
  %v2497 = vpack.c.b16 %v2458, %v2455
  %v2498 = vpack.c.b16 %v2459, %v2456
  %v2499 = vpack.c.b16 %v2460, %v2457
  %v2500 = vpack.c.b16 %v2464, %v2461
  %v2501 = vpack.c.b16 %v2465, %v2462
  %v2502 = vpack.c.b16 %v2466, %v2463
  %v2503 = vpack.c.b16 %v2470, %v2467
  %v2504 = vpack.c.b16 %v2471, %v2468
  %v2505 = vpack.c.b16 %v2472, %v2469
  %v2506 = vpack.c.b16 %v2476, %v2473
  %v2507 = vpack.c.b16 %v2477, %v2474
  %v2508 = vpack.c.b16 %v2478, %v2475
  %v2509 = vpack.c.b16 %v2482, %v2479
  %v2510 = vpack.c.b16 %v2483, %v2480
  %v2511 = vpack.c.b16 %v2484, %v2481
  %v2512 = vpack.c.b16 %v2488, %v2485
  %v2513 = vpack.c.b16 %v2489, %v2486
  %v2514 = vpack.c.b16 %v2490, %v2487
  %2539 = vmatprep.subr.bf16.mxu0 %v2492
  %2540 = vmatpush1.bf16.msra.mxu0 %v2491
  %2541 = vmatprep.subr.bf16.mxu0 %v2495
  %2542 = vmatpush1.bf16.msra.mxu0 %v2494
  %2543 = vmatprep.subr.bf16.mxu0 %v2498
  %2544 = vmatpush1.bf16.msra.mxu0 %v2497
  %2545 = vmatprep.subr.bf16.mxu0 %v2501
  %2546 = vmatpush1.bf16.msra.mxu0 %v2500
  %2547 = vmatprep.subr.bf16.mxu0 %v2504
  %2548 = vmatpush1.bf16.msra.mxu0 %v2503
  %2549 = vmatprep.subr.bf16.mxu0 %v2507
  %2550 = vmatpush1.bf16.msra.mxu0 %v2506
  %2551 = vmatprep.subr.bf16.mxu0 %v2510
  %2552 = vmatpush1.bf16.msra.mxu0 %v2509
  %2553 = vmatprep.subr.bf16.mxu0 %v2513
  %2554 = vmatpush1.bf16.msra.mxu0 %v2512
  %2555 = vmatprep.subr.bf16.mxu0 0
  %2556 = vmatpush1.bf16.msra.mxu0 0
  %2557 = vmatprep.subr.bf16.mxu0 0
  %2558 = vmatpush1.bf16.msra.mxu0 0
  %2559 = vmatprep.subr.bf16.mxu0 0
  %2560 = vmatpush1.bf16.msra.mxu0 0
  %2561 = vmatprep.subr.bf16.mxu0 0
  %2562 = vmatpush1.bf16.msra.mxu0 0
  %2563 = vmatprep.subr.bf16.mxu0 0
  %2564 = vmatpush1.bf16.msra.mxu0 0
  %2565 = vmatprep.subr.bf16.mxu0 0
  %2566 = vmatpush1.bf16.msra.mxu0 0
  %2567 = vmatprep.subr.bf16.mxu0 0
  %2568 = vmatpush1.bf16.msra.mxu0 0
  %2569 = vmatprep.subr.bf16.mxu0 0
  %2570 = vmatpush1.bf16.msra.mxu0 0
  %2571 = vmatprep.mubr.bf16.mxu0 0
  %2572 = vmatmul.mubr.bf16.gmra.mrb[0].mxu0 %v2378
  %v2573 = vpop.f32.mrb[0].mxu0
  %v2574 = vadd.f32 %v203, %v2573
  %v2575 = vpop.f32.mrb[0].mxu0
  %v2576 = vadd.f32 %v207, %v2575
  %v2577 = vpop.f32.mrb[0].mxu0
  %v2578 = vpop.f32.mrb[0].mxu0
  %2579 = vdwg.mxu0
  %2580 = vmatprep.subr.bf16.mxu0 0
  %2581 = vmatpush1.bf16.msra.mxu0 %v2493
  %2582 = vmatprep.subr.bf16.mxu0 0
  %2583 = vmatpush1.bf16.msra.mxu0 %v2496
  %2584 = vmatprep.subr.bf16.mxu0 0
  %2585 = vmatpush1.bf16.msra.mxu0 %v2499
  %2586 = vmatprep.subr.bf16.mxu0 0
  %2587 = vmatpush1.bf16.msra.mxu0 %v2502
  %2588 = vmatprep.subr.bf16.mxu0 0
  %2589 = vmatpush1.bf16.msra.mxu0 %v2505
  %2590 = vmatprep.subr.bf16.mxu0 0
  %2591 = vmatpush1.bf16.msra.mxu0 %v2508
  %2592 = vmatprep.subr.bf16.mxu0 0
  %2593 = vmatpush1.bf16.msra.mxu0 %v2511
  %2594 = vmatprep.subr.bf16.mxu0 0
  %2595 = vmatpush1.bf16.msra.mxu0 %v2514
  %2596 = vmatprep.subr.bf16.mxu0 0
  %2597 = vmatpush1.bf16.msra.mxu0 0
  %2598 = vmatprep.subr.bf16.mxu0 0
  %2599 = vmatpush1.bf16.msra.mxu0 0
  %2600 = vmatprep.subr.bf16.mxu0 0
  %2601 = vmatpush1.bf16.msra.mxu0 0
  %2602 = vmatprep.subr.bf16.mxu0 0
  %2603 = vmatpush1.bf16.msra.mxu0 0
  %2604 = vmatprep.subr.bf16.mxu0 0
  %2605 = vmatpush1.bf16.msra.mxu0 0
  %2606 = vmatprep.subr.bf16.mxu0 0
  %2607 = vmatpush1.bf16.msra.mxu0 0
  %2608 = vmatprep.subr.bf16.mxu0 0
  %2609 = vmatpush1.bf16.msra.mxu0 0
  %2610 = vmatprep.subr.bf16.mxu0 0
  %2611 = vmatpush1.bf16.msra.mxu0 0
  %2612 = vmatprep.mubr.bf16.mxu0 0
  %2613 = vmatmul.mubr.bf16.gmra.mrb[0].mxu0 %v2378
  %v2614 = vpop.f32.mrb[0].mxu0
  %v2615 = vadd.f32 %v211, %v2614
  %v2616 = vpop.f32.mrb[0].mxu0
  %v2617 = vpop.f32.mrb[0].mxu0
  %v2618 = vpop.f32.mrb[0].mxu0
  %2619 = vdwg.mxu0
  %v2620 = vld [vmem:[%s4] sm:$0xff]
  %v2621 = vld [vmem:[%s4 + $0x8] sm:$0xf]
  %v2622 = vld [vmem:[%s4 + $0xc] sm:$0xff]
  %v2623 = vld [vmem:[%s4 + $0x14] sm:$0xf]
  %v2624 = vld [vmem:[%s4 + $0x18] sm:$0xff]
  %v2625 = vld [vmem:[%s4 + $0x20] sm:$0xf]
  %v2626 = vld [vmem:[%s4 + $0x24] sm:$0xff]
  %v2627 = vld [vmem:[%s4 + $0x2c] sm:$0xf]
  %v2628 = vld [vmem:[%s4 + $0x30] sm:$0xff]
  %v2629 = vld [vmem:[%s4 + $0x38] sm:$0xf]
  %v2630 = vld [vmem:[%s4 + $0x3c] sm:$0xff]
  %v2631 = vld [vmem:[%s4 + $0x44] sm:$0xf]
  %v2632 = vld [vmem:[%s4 + $0x48] sm:$0xff]
  %v2633 = vld [vmem:[%s4 + $0x50] sm:$0xf]
  %v2634 = vld [vmem:[%s4 + $0x54] sm:$0xff]
  %v2635 = vld [vmem:[%s4 + $0x5c] sm:$0xf]
  %v2636 = vld [vmem:[%s4 + $0x60] sm:$0xff]
  %v2637 = vld [vmem:[%s4 + $0x68] sm:$0xf]
  %v2638 = vld [vmem:[%s4 + $0x6c] sm:$0xff]
  %v2639 = vld [vmem:[%s4 + $0x74] sm:$0xf]
  %v2640 = vld [vmem:[%s4 + $0x78] sm:$0xff]
  %v2641 = vld [vmem:[%s4 + $0x80] sm:$0xf]
  %v2642 = vld [vmem:[%s4 + $0x84] sm:$0xff]
  %v2643 = vld [vmem:[%s4 + $0x8c] sm:$0xf]
  %v2644 = vld [vmem:[%s4 + $0x90] sm:$0xff]
  %v2645 = vld [vmem:[%s4 + $0x98] sm:$0xf]
  %v2646 = vld [vmem:[%s4 + $0x9c] sm:$0xff]
  %v2647 = vld [vmem:[%s4 + $0xa4] sm:$0xf]
  %v2648 = vld [vmem:[%s4 + $0xa8] sm:$0xff]
  %v2649 = vld [vmem:[%s4 + $0xb0] sm:$0xf]
  %v2650 = vld [vmem:[%s4 + $0xb4] sm:$0xff]
  %v2651 = vld [vmem:[%s4 + $0xbc] sm:$0xf]
  %v2684 = vunpack.c.l.b16 %v2620
  %v2685 = vunpack.c.h.b16 %v2620
  %v2686 = vunpack.c.l.b16 %v2621
  %v2687 = vunpack.c.l.b16 %v2622
  %v2688 = vunpack.c.h.b16 %v2622
  %v2689 = vunpack.c.l.b16 %v2623
  %v2690 = vunpack.c.l.b16 %v2624
  %v2691 = vunpack.c.h.b16 %v2624
  %v2692 = vunpack.c.l.b16 %v2625
  %v2693 = vunpack.c.l.b16 %v2626
  %v2694 = vunpack.c.h.b16 %v2626
  %v2695 = vunpack.c.l.b16 %v2627
  %v2696 = vunpack.c.l.b16 %v2628
  %v2697 = vunpack.c.h.b16 %v2628
  %v2698 = vunpack.c.l.b16 %v2629
  %v2699 = vunpack.c.l.b16 %v2630
  %v2700 = vunpack.c.h.b16 %v2630
  %v2701 = vunpack.c.l.b16 %v2631
  %v2702 = vunpack.c.l.b16 %v2632
  %v2703 = vunpack.c.h.b16 %v2632
  %v2704 = vunpack.c.l.b16 %v2633
  %v2705 = vunpack.c.l.b16 %v2634
  %v2706 = vunpack.c.h.b16 %v2634
  %v2707 = vunpack.c.l.b16 %v2635
  %v2708 = vunpack.c.l.b16 %v2636
  %v2709 = vunpack.c.h.b16 %v2636
  %v2710 = vunpack.c.l.b16 %v2637
  %v2711 = vunpack.c.l.b16 %v2638
  %v2712 = vunpack.c.h.b16 %v2638
  %v2713 = vunpack.c.l.b16 %v2639
  %v2714 = vunpack.c.l.b16 %v2640
  %v2715 = vunpack.c.h.b16 %v2640
  %v2716 = vunpack.c.l.b16 %v2641
  %v2717 = vunpack.c.l.b16 %v2642
  %v2718 = vunpack.c.h.b16 %v2642
  %v2719 = vunpack.c.l.b16 %v2643
  %v2720 = vunpack.c.l.b16 %v2644
  %v2721 = vunpack.c.h.b16 %v2644
  %v2722 = vunpack.c.l.b16 %v2645
  %v2723 = vunpack.c.l.b16 %v2646
  %v2724 = vunpack.c.h.b16 %v2646
  %v2725 = vunpack.c.l.b16 %v2647
  %v2726 = vunpack.c.l.b16 %v2648
  %v2727 = vunpack.c.h.b16 %v2648
  %v2728 = vunpack.c.l.b16 %v2649
  %v2729 = vunpack.c.l.b16 %v2650
  %v2730 = vunpack.c.h.b16 %v2650
  %v2731 = vunpack.c.l.b16 %v2651
  %v2732 = vpack.c.b16 %v2687, %v2684
  %v2733 = vpack.c.b16 %v2688, %v2685
  %v2734 = vpack.c.b16 %v2689, %v2686
  %v2735 = vpack.c.b16 %v2693, %v2690
  %v2736 = vpack.c.b16 %v2694, %v2691
  %v2737 = vpack.c.b16 %v2695, %v2692
  %v2738 = vpack.c.b16 %v2699, %v2696
  %v2739 = vpack.c.b16 %v2700, %v2697
  %v2740 = vpack.c.b16 %v2701, %v2698
  %v2741 = vpack.c.b16 %v2705, %v2702
  %v2742 = vpack.c.b16 %v2706, %v2703
  %v2743 = vpack.c.b16 %v2707, %v2704
  %v2744 = vpack.c.b16 %v2711, %v2708
  %v2745 = vpack.c.b16 %v2712, %v2709
  %v2746 = vpack.c.b16 %v2713, %v2710
  %v2747 = vpack.c.b16 %v2717, %v2714
  %v2748 = vpack.c.b16 %v2718, %v2715
  %v2749 = vpack.c.b16 %v2719, %v2716
  %v2750 = vpack.c.b16 %v2723, %v2720
  %v2751 = vpack.c.b16 %v2724, %v2721
  %v2752 = vpack.c.b16 %v2725, %v2722
  %v2753 = vpack.c.b16 %v2729, %v2726
  %v2754 = vpack.c.b16 %v2730, %v2727
  %v2755 = vpack.c.b16 %v2731, %v2728
  %2780 = vmatprep.subr.bf16.mxu0 %v2733
  %2781 = vmatpush1.bf16.msra.mxu0 %v2732
  %2782 = vmatprep.subr.bf16.mxu0 %v2736
  %2783 = vmatpush1.bf16.msra.mxu0 %v2735
  %2784 = vmatprep.subr.bf16.mxu0 %v2739
  %2785 = vmatpush1.bf16.msra.mxu0 %v2738
  %2786 = vmatprep.subr.bf16.mxu0 %v2742
  %2787 = vmatpush1.bf16.msra.mxu0 %v2741
  %2788 = vmatprep.subr.bf16.mxu0 %v2745
  %2789 = vmatpush1.bf16.msra.mxu0 %v2744
  %2790 = vmatprep.subr.bf16.mxu0 %v2748
  %2791 = vmatpush1.bf16.msra.mxu0 %v2747
  %2792 = vmatprep.subr.bf16.mxu0 %v2751
  %2793 = vmatpush1.bf16.msra.mxu0 %v2750
  %2794 = vmatprep.subr.bf16.mxu0 %v2754
  %2795 = vmatpush1.bf16.msra.mxu0 %v2753
  %2796 = vmatprep.subr.bf16.mxu0 0
  %2797 = vmatpush1.bf16.msra.mxu0 0
  %2798 = vmatprep.subr.bf16.mxu0 0
  %2799 = vmatpush1.bf16.msra.mxu0 0
  %2800 = vmatprep.subr.bf16.mxu0 0
  %2801 = vmatpush1.bf16.msra.mxu0 0
  %2802 = vmatprep.subr.bf16.mxu0 0
  %2803 = vmatpush1.bf16.msra.mxu0 0
  %2804 = vmatprep.subr.bf16.mxu0 0
  %2805 = vmatpush1.bf16.msra.mxu0 0
  %2806 = vmatprep.subr.bf16.mxu0 0
  %2807 = vmatpush1.bf16.msra.mxu0 0
  %2808 = vmatprep.subr.bf16.mxu0 0
  %2809 = vmatpush1.bf16.msra.mxu0 0
  %2810 = vmatprep.subr.bf16.mxu0 0
  %2811 = vmatpush1.bf16.msra.mxu0 0
  %2812 = vmatprep.mubr.bf16.mxu0 0
  %2813 = vmatmul.mubr.bf16.gmra.mrb[0].mxu0 %v2155
  %v2814 = vpop.f32.mrb[0].mxu0
  %v2815 = vadd.f32 0.0, %v2814
  %v2816 = vpop.f32.mrb[0].mxu0
  %v2817 = vadd.f32 0.0, %v2816
  %v2818 = vpop.f32.mrb[0].mxu0
  %v2819 = vpop.f32.mrb[0].mxu0
  %2820 = vdwg.mxu0
  %2821 = vmatprep.subr.bf16.mxu0 0
  %2822 = vmatpush1.bf16.msra.mxu0 %v2734
  %2823 = vmatprep.subr.bf16.mxu0 0
  %2824 = vmatpush1.bf16.msra.mxu0 %v2737
  %2825 = vmatprep.subr.bf16.mxu0 0
  %2826 = vmatpush1.bf16.msra.mxu0 %v2740
  %2827 = vmatprep.subr.bf16.mxu0 0
  %2828 = vmatpush1.bf16.msra.mxu0 %v2743
  %2829 = vmatprep.subr.bf16.mxu0 0
  %2830 = vmatpush1.bf16.msra.mxu0 %v2746
  %2831 = vmatprep.subr.bf16.mxu0 0
  %2832 = vmatpush1.bf16.msra.mxu0 %v2749
  %2833 = vmatprep.subr.bf16.mxu0 0
  %2834 = vmatpush1.bf16.msra.mxu0 %v2752
  %2835 = vmatprep.subr.bf16.mxu0 0
  %2836 = vmatpush1.bf16.msra.mxu0 %v2755
  %2837 = vmatprep.subr.bf16.mxu0 0
  %2838 = vmatpush1.bf16.msra.mxu0 0
  %2839 = vmatprep.subr.bf16.mxu0 0
  %2840 = vmatpush1.bf16.msra.mxu0 0
  %2841 = vmatprep.subr.bf16.mxu0 0
  %2842 = vmatpush1.bf16.msra.mxu0 0
  %2843 = vmatprep.subr.bf16.mxu0 0
  %2844 = vmatpush1.bf16.msra.mxu0 0
  %2845 = vmatprep.subr.bf16.mxu0 0
  %2846 = vmatpush1.bf16.msra.mxu0 0
  %2847 = vmatprep.subr.bf16.mxu0 0
  %2848 = vmatpush1.bf16.msra.mxu0 0
  %2849 = vmatprep.subr.bf16.mxu0 0
  %2850 = vmatpush1.bf16.msra.mxu0 0
  %2851 = vmatprep.subr.bf16.mxu0 0
  %2852 = vmatpush1.bf16.msra.mxu0 0
  %2853 = vmatprep.mubr.bf16.mxu0 0
  %2854 = vmatmul.mubr.bf16.gmra.mrb[0].mxu0 %v2155
  %v2855 = vpop.f32.mrb[0].mxu0
  %v2856 = vadd.f32 0.0, %v2855
  %v2857 = vpop.f32.mrb[0].mxu0
  %v2858 = vpop.f32.mrb[0].mxu0
  %v2859 = vpop.f32.mrb[0].mxu0
  %2860 = vdwg.mxu0
  %v2861 = vadd.f32 %v2574, %v2815
  %v2862 = vxor.u32 %v2861, 2147483648
  %v2863 = vmul.f32 %v2862, 1.442695
  %v2864 = vpow.pop %v2863
  %v2865 = vadd.f32 %v2864, 1.0
  %v2866 = vrcp.pop %v2865
  %v2867 = vmul.f32 1.0, %v2866
  %v2868 = vadd.f32 %v2576, %v2817
  %v2869 = vxor.u32 %v2868, 2147483648
  %v2870 = vmul.f32 %v2869, 1.442695
  %v2871 = vpow.pop %v2870
  %v2872 = vadd.f32 %v2871, 1.0
  %v2873 = vrcp.pop %v2872
  %v2874 = vmul.f32 1.0, %v2873
  %v2875 = vadd.f32 %v2856, %v684
  %v2876 = vmul.f32 %v2867, %v2875
  %v2877 = vadd.f32 %v2615, %v2876
  %v2878 = vtanh.pop %v2877
  %v2879 = vsub.f32 1.0, %v2874
  %v2880 = vmul.f32 %v2879, %v2878
  %v2881 = vmul.f32 %v2874, %v2154
  %v2882 = vadd.f32 %v2880, %v2881
  %v2883 = vpack.c.bf16 %v2882, %v2882
  %v2884 = vld [vmem:[%s7] sm:$0xf]
  %v2885 = vld [vmem:[%s7 + $0x4] sm:$0xf]
  %v2886 = vld [vmem:[%s7 + $0x8] sm:$0xf]
  %v2887 = vld [vmem:[%s7 + $0xc] sm:$0xf]
  %v2888 = vld [vmem:[%s7 + $0x10] sm:$0xf]
  %v2889 = vld [vmem:[%s7 + $0x14] sm:$0xf]
  %v2890 = vld [vmem:[%s7 + $0x18] sm:$0xf]
  %v2891 = vld [vmem:[%s7 + $0x1c] sm:$0xf]
  %v2892 = vld [vmem:[%s7 + $0x20] sm:$0xf]
  %v2893 = vld [vmem:[%s7 + $0x24] sm:$0xf]
  %v2894 = vld [vmem:[%s7 + $0x28] sm:$0xf]
  %v2895 = vld [vmem:[%s7 + $0x2c] sm:$0xf]
  %v2896 = vld [vmem:[%s7 + $0x30] sm:$0xf]
  %v2897 = vld [vmem:[%s7 + $0x34] sm:$0xf]
  %v2898 = vld [vmem:[%s7 + $0x38] sm:$0xf]
  %v2899 = vld [vmem:[%s7 + $0x3c] sm:$0xf]
  %v2916 = vunpack.c.l.b16 %v2884
  %v2917 = vunpack.c.l.b16 %v2885
  %v2918 = vunpack.c.l.b16 %v2886
  %v2919 = vunpack.c.l.b16 %v2887
  %v2920 = vunpack.c.l.b16 %v2888
  %v2921 = vunpack.c.l.b16 %v2889
  %v2922 = vunpack.c.l.b16 %v2890
  %v2923 = vunpack.c.l.b16 %v2891
  %v2924 = vunpack.c.l.b16 %v2892
  %v2925 = vunpack.c.l.b16 %v2893
  %v2926 = vunpack.c.l.b16 %v2894
  %v2927 = vunpack.c.l.b16 %v2895
  %v2928 = vunpack.c.l.b16 %v2896
  %v2929 = vunpack.c.l.b16 %v2897
  %v2930 = vunpack.c.l.b16 %v2898
  %v2931 = vunpack.c.l.b16 %v2899
  %v2932 = vpack.c.b16 %v2917, %v2916
  %v2933 = vpack.c.b16 %v2919, %v2918
  %v2934 = vpack.c.b16 %v2921, %v2920
  %v2935 = vpack.c.b16 %v2923, %v2922
  %v2936 = vpack.c.b16 %v2925, %v2924
  %v2937 = vpack.c.b16 %v2927, %v2926
  %v2938 = vpack.c.b16 %v2929, %v2928
  %v2939 = vpack.c.b16 %v2931, %v2930
  %2948 = vmatprep.subr.bf16.mxu0 0
  %2949 = vmatpush1.bf16.msra.mxu0 %v2932
  %2950 = vmatprep.subr.bf16.mxu0 0
  %2951 = vmatpush1.bf16.msra.mxu0 %v2933
  %2952 = vmatprep.subr.bf16.mxu0 0
  %2953 = vmatpush1.bf16.msra.mxu0 %v2934
  %2954 = vmatprep.subr.bf16.mxu0 0
  %2955 = vmatpush1.bf16.msra.mxu0 %v2935
  %2956 = vmatprep.subr.bf16.mxu0 0
  %2957 = vmatpush1.bf16.msra.mxu0 %v2936
  %2958 = vmatprep.subr.bf16.mxu0 0
  %2959 = vmatpush1.bf16.msra.mxu0 %v2937
  %2960 = vmatprep.subr.bf16.mxu0 0
  %2961 = vmatpush1.bf16.msra.mxu0 %v2938
  %2962 = vmatprep.subr.bf16.mxu0 0
  %2963 = vmatpush1.bf16.msra.mxu0 %v2939
  %2964 = vmatprep.subr.bf16.mxu0 0
  %2965 = vmatpush1.bf16.msra.mxu0 0
  %2966 = vmatprep.subr.bf16.mxu0 0
  %2967 = vmatpush1.bf16.msra.mxu0 0
  %2968 = vmatprep.subr.bf16.mxu0 0
  %2969 = vmatpush1.bf16.msra.mxu0 0
  %2970 = vmatprep.subr.bf16.mxu0 0
  %2971 = vmatpush1.bf16.msra.mxu0 0
  %2972 = vmatprep.subr.bf16.mxu0 0
  %2973 = vmatpush1.bf16.msra.mxu0 0
  %2974 = vmatprep.subr.bf16.mxu0 0
  %2975 = vmatpush1.bf16.msra.mxu0 0
  %2976 = vmatprep.subr.bf16.mxu0 0
  %2977 = vmatpush1.bf16.msra.mxu0 0
  %2978 = vmatprep.subr.bf16.mxu0 0
  %2979 = vmatpush1.bf16.msra.mxu0 0
  %2980 = vmatprep.mubr.bf16.mxu0 0
  %2981 = vmatmul.mubr.bf16.gmra.mrb[0].mxu0 %v2883
  %v2982 = vpop.f32.mrb[0].mxu0
  %v2983 = vadd.f32 %v715, %v2982
  %v2984 = vpop.f32.mrb[0].mxu0
  %v2985 = vpop.f32.mrb[0].mxu0
  %v2986 = vpop.f32.mrb[0].mxu0
  %2987 = vdwg.mxu0
  %v2988 = vpack.c.bf16 %v2983, %v2983
  %s2989 = scalar_lea.vmem %s9, 12
  %2990 = vst [vmem:[%s2989] sm:$0xf] %v2988
  %2991 = vmax.xlane.f32.xlu0 %v2983
  %v2992 = vpop.xlane.xlu0 %2991
  %v2993 = vsub.f32 %v2983, %v2992
  %v2994 = vmul.f32 %v2993, 1.442695
  %v2995 = vpow.pop %v2994
  %2996 = vadd.xlane.f32.xlu0 %v2995
  %v2997 = vpop.xlane.xlu0 %2996
  %v2998 = vrcp.pop %v2997
  %v2999 = vpack.c.bf16 %v2995, %v2995
  %v3000 = vld [vmem:[%s1] sm:$0xf]
  %v3001 = vld [vmem:[%s1 + $0x4] sm:$0xf]
  %v3002 = vld [vmem:[%s1 + $0x8] sm:$0xf]
  %v3003 = vld [vmem:[%s1 + $0xc] sm:$0xf]
  %v3004 = vld [vmem:[%s1 + $0x10] sm:$0xf]
  %v3005 = vld [vmem:[%s1 + $0x14] sm:$0xf]
  %v3006 = vld [vmem:[%s1 + $0x18] sm:$0xf]
  %v3007 = vld [vmem:[%s1 + $0x1c] sm:$0xf]
  %v3008 = vld [vmem:[%s1 + $0x20] sm:$0xf]
  %v3009 = vld [vmem:[%s1 + $0x24] sm:$0xf]
  %v3010 = vld [vmem:[%s1 + $0x28] sm:$0xf]
  %v3011 = vld [vmem:[%s1 + $0x2c] sm:$0xf]
  %v3012 = vld [vmem:[%s1 + $0x30] sm:$0xf]
  %v3013 = vld [vmem:[%s1 + $0x34] sm:$0xf]
  %v3014 = vld [vmem:[%s1 + $0x38] sm:$0xf]
  %v3015 = vld [vmem:[%s1 + $0x3c] sm:$0xf]
  %v3032 = vunpack.c.l.b16 %v3000
  %v3033 = vunpack.c.l.b16 %v3001
  %v3034 = vunpack.c.l.b16 %v3002
  %v3035 = vunpack.c.l.b16 %v3003
  %v3036 = vunpack.c.l.b16 %v3004
  %v3037 = vunpack.c.l.b16 %v3005
  %v3038 = vunpack.c.l.b16 %v3006
  %v3039 = vunpack.c.l.b16 %v3007
  %v3040 = vunpack.c.l.b16 %v3008
  %v3041 = vunpack.c.l.b16 %v3009
  %v3042 = vunpack.c.l.b16 %v3010
  %v3043 = vunpack.c.l.b16 %v3011
  %v3044 = vunpack.c.l.b16 %v3012
  %v3045 = vunpack.c.l.b16 %v3013
  %v3046 = vunpack.c.l.b16 %v3014
  %v3047 = vunpack.c.l.b16 %v3015
  %v3048 = vpack.c.b16 %v3033, %v3032
  %v3049 = vpack.c.b16 %v3035, %v3034
  %v3050 = vpack.c.b16 %v3037, %v3036
  %v3051 = vpack.c.b16 %v3039, %v3038
  %v3052 = vpack.c.b16 %v3041, %v3040
  %v3053 = vpack.c.b16 %v3043, %v3042
  %v3054 = vpack.c.b16 %v3045, %v3044
  %v3055 = vpack.c.b16 %v3047, %v3046
  %3064 = vmatprep.subr.bf16.mxu0 0
  %3065 = vmatpush1.bf16.msra.mxu0 %v3048
  %3066 = vmatprep.subr.bf16.mxu0 0
  %3067 = vmatpush1.bf16.msra.mxu0 %v3049
  %3068 = vmatprep.subr.bf16.mxu0 0
  %3069 = vmatpush1.bf16.msra.mxu0 %v3050
  %3070 = vmatprep.subr.bf16.mxu0 0
  %3071 = vmatpush1.bf16.msra.mxu0 %v3051
  %3072 = vmatprep.subr.bf16.mxu0 0
  %3073 = vmatpush1.bf16.msra.mxu0 %v3052
  %3074 = vmatprep.subr.bf16.mxu0 0
  %3075 = vmatpush1.bf16.msra.mxu0 %v3053
  %3076 = vmatprep.subr.bf16.mxu0 0
  %3077 = vmatpush1.bf16.msra.mxu0 %v3054
  %3078 = vmatprep.subr.bf16.mxu0 0
  %3079 = vmatpush1.bf16.msra.mxu0 %v3055
  %3080 = vmatprep.subr.bf16.mxu0 0
  %3081 = vmatpush1.bf16.msra.mxu0 0
  %3082 = vmatprep.subr.bf16.mxu0 0
  %3083 = vmatpush1.bf16.msra.mxu0 0
  %3084 = vmatprep.subr.bf16.mxu0 0
  %3085 = vmatpush1.bf16.msra.mxu0 0
  %3086 = vmatprep.subr.bf16.mxu0 0
  %3087 = vmatpush1.bf16.msra.mxu0 0
  %3088 = vmatprep.subr.bf16.mxu0 0
  %3089 = vmatpush1.bf16.msra.mxu0 0
  %3090 = vmatprep.subr.bf16.mxu0 0
  %3091 = vmatpush1.bf16.msra.mxu0 0
  %3092 = vmatprep.subr.bf16.mxu0 0
  %3093 = vmatpush1.bf16.msra.mxu0 0
  %3094 = vmatprep.subr.bf16.mxu0 0
  %3095 = vmatpush1.bf16.msra.mxu0 0
  %3096 = vmatprep.mubr.bf16.mxu0 0
  %3097 = vmatmul.mubr.bf16.gmra.mrb[0].mxu0 %v2999
  %v3098 = vpop.f32.mrb[0].mxu0
  %v3099 = vadd.f32 0.0, %v3098
  %v3100 = vpop.f32.mrb[0].mxu0
  %v3101 = vpop.f32.mrb[0].mxu0
  %v3102 = vpop.f32.mrb[0].mxu0
  %3103 = vdwg.mxu0
  %v3104 = vmul.f32 %v3099, %v2998
  %v3105 = vadd.f32 %v3104, %v163
  %v3106 = vpack.c.bf16 %v3105, %v3105
  %v3107 = vld [vmem:[%s3] sm:$0xff]
  %v3108 = vld [vmem:[%s3 + $0x8] sm:$0xf]
  %v3109 = vld [vmem:[%s3 + $0xc] sm:$0xff]
  %v3110 = vld [vmem:[%s3 + $0x14] sm:$0xf]
  %v3111 = vld [vmem:[%s3 + $0x18] sm:$0xff]
  %v3112 = vld [vmem:[%s3 + $0x20] sm:$0xf]
  %v3113 = vld [vmem:[%s3 + $0x24] sm:$0xff]
  %v3114 = vld [vmem:[%s3 + $0x2c] sm:$0xf]
  %v3115 = vld [vmem:[%s3 + $0x30] sm:$0xff]
  %v3116 = vld [vmem:[%s3 + $0x38] sm:$0xf]
  %v3117 = vld [vmem:[%s3 + $0x3c] sm:$0xff]
  %v3118 = vld [vmem:[%s3 + $0x44] sm:$0xf]
  %v3119 = vld [vmem:[%s3 + $0x48] sm:$0xff]
  %v3120 = vld [vmem:[%s3 + $0x50] sm:$0xf]
  %v3121 = vld [vmem:[%s3 + $0x54] sm:$0xff]
  %v3122 = vld [vmem:[%s3 + $0x5c] sm:$0xf]
  %v3123 = vld [vmem:[%s3 + $0x60] sm:$0xff]
  %v3124 = vld [vmem:[%s3 + $0x68] sm:$0xf]
  %v3125 = vld [vmem:[%s3 + $0x6c] sm:$0xff]
  %v3126 = vld [vmem:[%s3 + $0x74] sm:$0xf]
  %v3127 = vld [vmem:[%s3 + $0x78] sm:$0xff]
  %v3128 = vld [vmem:[%s3 + $0x80] sm:$0xf]
  %v3129 = vld [vmem:[%s3 + $0x84] sm:$0xff]
  %v3130 = vld [vmem:[%s3 + $0x8c] sm:$0xf]
  %v3131 = vld [vmem:[%s3 + $0x90] sm:$0xff]
  %v3132 = vld [vmem:[%s3 + $0x98] sm:$0xf]
  %v3133 = vld [vmem:[%s3 + $0x9c] sm:$0xff]
  %v3134 = vld [vmem:[%s3 + $0xa4] sm:$0xf]
  %v3135 = vld [vmem:[%s3 + $0xa8] sm:$0xff]
  %v3136 = vld [vmem:[%s3 + $0xb0] sm:$0xf]
  %v3137 = vld [vmem:[%s3 + $0xb4] sm:$0xff]
  %v3138 = vld [vmem:[%s3 + $0xbc] sm:$0xf]
  %v3171 = vunpack.c.l.b16 %v3107
  %v3172 = vunpack.c.h.b16 %v3107
  %v3173 = vunpack.c.l.b16 %v3108
  %v3174 = vunpack.c.l.b16 %v3109
  %v3175 = vunpack.c.h.b16 %v3109
  %v3176 = vunpack.c.l.b16 %v3110
  %v3177 = vunpack.c.l.b16 %v3111
  %v3178 = vunpack.c.h.b16 %v3111
  %v3179 = vunpack.c.l.b16 %v3112
  %v3180 = vunpack.c.l.b16 %v3113
  %v3181 = vunpack.c.h.b16 %v3113
  %v3182 = vunpack.c.l.b16 %v3114
  %v3183 = vunpack.c.l.b16 %v3115
  %v3184 = vunpack.c.h.b16 %v3115
  %v3185 = vunpack.c.l.b16 %v3116
  %v3186 = vunpack.c.l.b16 %v3117
  %v3187 = vunpack.c.h.b16 %v3117
  %v3188 = vunpack.c.l.b16 %v3118
  %v3189 = vunpack.c.l.b16 %v3119
  %v3190 = vunpack.c.h.b16 %v3119
  %v3191 = vunpack.c.l.b16 %v3120
  %v3192 = vunpack.c.l.b16 %v3121
  %v3193 = vunpack.c.h.b16 %v3121
  %v3194 = vunpack.c.l.b16 %v3122
  %v3195 = vunpack.c.l.b16 %v3123
  %v3196 = vunpack.c.h.b16 %v3123
  %v3197 = vunpack.c.l.b16 %v3124
  %v3198 = vunpack.c.l.b16 %v3125
  %v3199 = vunpack.c.h.b16 %v3125
  %v3200 = vunpack.c.l.b16 %v3126
  %v3201 = vunpack.c.l.b16 %v3127
  %v3202 = vunpack.c.h.b16 %v3127
  %v3203 = vunpack.c.l.b16 %v3128
  %v3204 = vunpack.c.l.b16 %v3129
  %v3205 = vunpack.c.h.b16 %v3129
  %v3206 = vunpack.c.l.b16 %v3130
  %v3207 = vunpack.c.l.b16 %v3131
  %v3208 = vunpack.c.h.b16 %v3131
  %v3209 = vunpack.c.l.b16 %v3132
  %v3210 = vunpack.c.l.b16 %v3133
  %v3211 = vunpack.c.h.b16 %v3133
  %v3212 = vunpack.c.l.b16 %v3134
  %v3213 = vunpack.c.l.b16 %v3135
  %v3214 = vunpack.c.h.b16 %v3135
  %v3215 = vunpack.c.l.b16 %v3136
  %v3216 = vunpack.c.l.b16 %v3137
  %v3217 = vunpack.c.h.b16 %v3137
  %v3218 = vunpack.c.l.b16 %v3138
  %v3219 = vpack.c.b16 %v3174, %v3171
  %v3220 = vpack.c.b16 %v3175, %v3172
  %v3221 = vpack.c.b16 %v3176, %v3173
  %v3222 = vpack.c.b16 %v3180, %v3177
  %v3223 = vpack.c.b16 %v3181, %v3178
  %v3224 = vpack.c.b16 %v3182, %v3179
  %v3225 = vpack.c.b16 %v3186, %v3183
  %v3226 = vpack.c.b16 %v3187, %v3184
  %v3227 = vpack.c.b16 %v3188, %v3185
  %v3228 = vpack.c.b16 %v3192, %v3189
  %v3229 = vpack.c.b16 %v3193, %v3190
  %v3230 = vpack.c.b16 %v3194, %v3191
  %v3231 = vpack.c.b16 %v3198, %v3195
  %v3232 = vpack.c.b16 %v3199, %v3196
  %v3233 = vpack.c.b16 %v3200, %v3197
  %v3234 = vpack.c.b16 %v3204, %v3201
  %v3235 = vpack.c.b16 %v3205, %v3202
  %v3236 = vpack.c.b16 %v3206, %v3203
  %v3237 = vpack.c.b16 %v3210, %v3207
  %v3238 = vpack.c.b16 %v3211, %v3208
  %v3239 = vpack.c.b16 %v3212, %v3209
  %v3240 = vpack.c.b16 %v3216, %v3213
  %v3241 = vpack.c.b16 %v3217, %v3214
  %v3242 = vpack.c.b16 %v3218, %v3215
  %3267 = vmatprep.subr.bf16.mxu0 %v3220
  %3268 = vmatpush1.bf16.msra.mxu0 %v3219
  %3269 = vmatprep.subr.bf16.mxu0 %v3223
  %3270 = vmatpush1.bf16.msra.mxu0 %v3222
  %3271 = vmatprep.subr.bf16.mxu0 %v3226
  %3272 = vmatpush1.bf16.msra.mxu0 %v3225
  %3273 = vmatprep.subr.bf16.mxu0 %v3229
  %3274 = vmatpush1.bf16.msra.mxu0 %v3228
  %3275 = vmatprep.subr.bf16.mxu0 %v3232
  %3276 = vmatpush1.bf16.msra.mxu0 %v3231
  %3277 = vmatprep.subr.bf16.mxu0 %v3235
  %3278 = vmatpush1.bf16.msra.mxu0 %v3234
  %3279 = vmatprep.subr.bf16.mxu0 %v3238
  %3280 = vmatpush1.bf16.msra.mxu0 %v3237
  %3281 = vmatprep.subr.bf16.mxu0 %v3241
  %3282 = vmatpush1.bf16.msra.mxu0 %v3240
  %3283 = vmatprep.subr.bf16.mxu0 0
  %3284 = vmatpush1.bf16.msra.mxu0 0
  %3285 = vmatprep.subr.bf16.mxu0 0
  %3286 = vmatpush1.bf16.msra.mxu0 0
  %3287 = vmatprep.subr.bf16.mxu0 0
  %3288 = vmatpush1.bf16.msra.mxu0 0
  %3289 = vmatprep.subr.bf16.mxu0 0
  %3290 = vmatpush1.bf16.msra.mxu0 0
  %3291 = vmatprep.subr.bf16.mxu0 0
  %3292 = vmatpush1.bf16.msra.mxu0 0
  %3293 = vmatprep.subr.bf16.mxu0 0
  %3294 = vmatpush1.bf16.msra.mxu0 0
  %3295 = vmatprep.subr.bf16.mxu0 0
  %3296 = vmatpush1.bf16.msra.mxu0 0
  %3297 = vmatprep.subr.bf16.mxu0 0
  %3298 = vmatpush1.bf16.msra.mxu0 0
  %3299 = vmatprep.mubr.bf16.mxu0 0
  %3300 = vmatmul.mubr.bf16.gmra.mrb[0].mxu0 %v3106
  %v3301 = vpop.f32.mrb[0].mxu0
  %v3302 = vadd.f32 %v203, %v3301
  %v3303 = vpop.f32.mrb[0].mxu0
  %v3304 = vadd.f32 %v207, %v3303
  %v3305 = vpop.f32.mrb[0].mxu0
  %v3306 = vpop.f32.mrb[0].mxu0
  %3307 = vdwg.mxu0
  %3308 = vmatprep.subr.bf16.mxu0 0
  %3309 = vmatpush1.bf16.msra.mxu0 %v3221
  %3310 = vmatprep.subr.bf16.mxu0 0
  %3311 = vmatpush1.bf16.msra.mxu0 %v3224
  %3312 = vmatprep.subr.bf16.mxu0 0
  %3313 = vmatpush1.bf16.msra.mxu0 %v3227
  %3314 = vmatprep.subr.bf16.mxu0 0
  %3315 = vmatpush1.bf16.msra.mxu0 %v3230
  %3316 = vmatprep.subr.bf16.mxu0 0
  %3317 = vmatpush1.bf16.msra.mxu0 %v3233
  %3318 = vmatprep.subr.bf16.mxu0 0
  %3319 = vmatpush1.bf16.msra.mxu0 %v3236
  %3320 = vmatprep.subr.bf16.mxu0 0
  %3321 = vmatpush1.bf16.msra.mxu0 %v3239
  %3322 = vmatprep.subr.bf16.mxu0 0
  %3323 = vmatpush1.bf16.msra.mxu0 %v3242
  %3324 = vmatprep.subr.bf16.mxu0 0
  %3325 = vmatpush1.bf16.msra.mxu0 0
  %3326 = vmatprep.subr.bf16.mxu0 0
  %3327 = vmatpush1.bf16.msra.mxu0 0
  %3328 = vmatprep.subr.bf16.mxu0 0
  %3329 = vmatpush1.bf16.msra.mxu0 0
  %3330 = vmatprep.subr.bf16.mxu0 0
  %3331 = vmatpush1.bf16.msra.mxu0 0
  %3332 = vmatprep.subr.bf16.mxu0 0
  %3333 = vmatpush1.bf16.msra.mxu0 0
  %3334 = vmatprep.subr.bf16.mxu0 0
  %3335 = vmatpush1.bf16.msra.mxu0 0
  %3336 = vmatprep.subr.bf16.mxu0 0
  %3337 = vmatpush1.bf16.msra.mxu0 0
  %3338 = vmatprep.subr.bf16.mxu0 0
  %3339 = vmatpush1.bf16.msra.mxu0 0
  %3340 = vmatprep.mubr.bf16.mxu0 0
  %3341 = vmatmul.mubr.bf16.gmra.mrb[0].mxu0 %v3106
  %v3342 = vpop.f32.mrb[0].mxu0
  %v3343 = vadd.f32 %v211, %v3342
  %v3344 = vpop.f32.mrb[0].mxu0
  %v3345 = vpop.f32.mrb[0].mxu0
  %v3346 = vpop.f32.mrb[0].mxu0
  %3347 = vdwg.mxu0
  %v3348 = vld [vmem:[%s4] sm:$0xff]
  %v3349 = vld [vmem:[%s4 + $0x8] sm:$0xf]
  %v3350 = vld [vmem:[%s4 + $0xc] sm:$0xff]
  %v3351 = vld [vmem:[%s4 + $0x14] sm:$0xf]
  %v3352 = vld [vmem:[%s4 + $0x18] sm:$0xff]
  %v3353 = vld [vmem:[%s4 + $0x20] sm:$0xf]
  %v3354 = vld [vmem:[%s4 + $0x24] sm:$0xff]
  %v3355 = vld [vmem:[%s4 + $0x2c] sm:$0xf]
  %v3356 = vld [vmem:[%s4 + $0x30] sm:$0xff]
  %v3357 = vld [vmem:[%s4 + $0x38] sm:$0xf]
  %v3358 = vld [vmem:[%s4 + $0x3c] sm:$0xff]
  %v3359 = vld [vmem:[%s4 + $0x44] sm:$0xf]
  %v3360 = vld [vmem:[%s4 + $0x48] sm:$0xff]
  %v3361 = vld [vmem:[%s4 + $0x50] sm:$0xf]
  %v3362 = vld [vmem:[%s4 + $0x54] sm:$0xff]
  %v3363 = vld [vmem:[%s4 + $0x5c] sm:$0xf]
  %v3364 = vld [vmem:[%s4 + $0x60] sm:$0xff]
  %v3365 = vld [vmem:[%s4 + $0x68] sm:$0xf]
  %v3366 = vld [vmem:[%s4 + $0x6c] sm:$0xff]
  %v3367 = vld [vmem:[%s4 + $0x74] sm:$0xf]
  %v3368 = vld [vmem:[%s4 + $0x78] sm:$0xff]
  %v3369 = vld [vmem:[%s4 + $0x80] sm:$0xf]
  %v3370 = vld [vmem:[%s4 + $0x84] sm:$0xff]
  %v3371 = vld [vmem:[%s4 + $0x8c] sm:$0xf]
  %v3372 = vld [vmem:[%s4 + $0x90] sm:$0xff]
  %v3373 = vld [vmem:[%s4 + $0x98] sm:$0xf]
  %v3374 = vld [vmem:[%s4 + $0x9c] sm:$0xff]
  %v3375 = vld [vmem:[%s4 + $0xa4] sm:$0xf]
  %v3376 = vld [vmem:[%s4 + $0xa8] sm:$0xff]
  %v3377 = vld [vmem:[%s4 + $0xb0] sm:$0xf]
  %v3378 = vld [vmem:[%s4 + $0xb4] sm:$0xff]
  %v3379 = vld [vmem:[%s4 + $0xbc] sm:$0xf]
  %v3412 = vunpack.c.l.b16 %v3348
  %v3413 = vunpack.c.h.b16 %v3348
  %v3414 = vunpack.c.l.b16 %v3349
  %v3415 = vunpack.c.l.b16 %v3350
  %v3416 = vunpack.c.h.b16 %v3350
  %v3417 = vunpack.c.l.b16 %v3351
  %v3418 = vunpack.c.l.b16 %v3352
  %v3419 = vunpack.c.h.b16 %v3352
  %v3420 = vunpack.c.l.b16 %v3353
  %v3421 = vunpack.c.l.b16 %v3354
  %v3422 = vunpack.c.h.b16 %v3354
  %v3423 = vunpack.c.l.b16 %v3355
  %v3424 = vunpack.c.l.b16 %v3356
  %v3425 = vunpack.c.h.b16 %v3356
  %v3426 = vunpack.c.l.b16 %v3357
  %v3427 = vunpack.c.l.b16 %v3358
  %v3428 = vunpack.c.h.b16 %v3358
  %v3429 = vunpack.c.l.b16 %v3359
  %v3430 = vunpack.c.l.b16 %v3360
  %v3431 = vunpack.c.h.b16 %v3360
  %v3432 = vunpack.c.l.b16 %v3361
  %v3433 = vunpack.c.l.b16 %v3362
  %v3434 = vunpack.c.h.b16 %v3362
  %v3435 = vunpack.c.l.b16 %v3363
  %v3436 = vunpack.c.l.b16 %v3364
  %v3437 = vunpack.c.h.b16 %v3364
  %v3438 = vunpack.c.l.b16 %v3365
  %v3439 = vunpack.c.l.b16 %v3366
  %v3440 = vunpack.c.h.b16 %v3366
  %v3441 = vunpack.c.l.b16 %v3367
  %v3442 = vunpack.c.l.b16 %v3368
  %v3443 = vunpack.c.h.b16 %v3368
  %v3444 = vunpack.c.l.b16 %v3369
  %v3445 = vunpack.c.l.b16 %v3370
  %v3446 = vunpack.c.h.b16 %v3370
  %v3447 = vunpack.c.l.b16 %v3371
  %v3448 = vunpack.c.l.b16 %v3372
  %v3449 = vunpack.c.h.b16 %v3372
  %v3450 = vunpack.c.l.b16 %v3373
  %v3451 = vunpack.c.l.b16 %v3374
  %v3452 = vunpack.c.h.b16 %v3374
  %v3453 = vunpack.c.l.b16 %v3375
  %v3454 = vunpack.c.l.b16 %v3376
  %v3455 = vunpack.c.h.b16 %v3376
  %v3456 = vunpack.c.l.b16 %v3377
  %v3457 = vunpack.c.l.b16 %v3378
  %v3458 = vunpack.c.h.b16 %v3378
  %v3459 = vunpack.c.l.b16 %v3379
  %v3460 = vpack.c.b16 %v3415, %v3412
  %v3461 = vpack.c.b16 %v3416, %v3413
  %v3462 = vpack.c.b16 %v3417, %v3414
  %v3463 = vpack.c.b16 %v3421, %v3418
  %v3464 = vpack.c.b16 %v3422, %v3419
  %v3465 = vpack.c.b16 %v3423, %v3420
  %v3466 = vpack.c.b16 %v3427, %v3424
  %v3467 = vpack.c.b16 %v3428, %v3425
  %v3468 = vpack.c.b16 %v3429, %v3426
  %v3469 = vpack.c.b16 %v3433, %v3430
  %v3470 = vpack.c.b16 %v3434, %v3431
  %v3471 = vpack.c.b16 %v3435, %v3432
  %v3472 = vpack.c.b16 %v3439, %v3436
  %v3473 = vpack.c.b16 %v3440, %v3437
  %v3474 = vpack.c.b16 %v3441, %v3438
  %v3475 = vpack.c.b16 %v3445, %v3442
  %v3476 = vpack.c.b16 %v3446, %v3443
  %v3477 = vpack.c.b16 %v3447, %v3444
  %v3478 = vpack.c.b16 %v3451, %v3448
  %v3479 = vpack.c.b16 %v3452, %v3449
  %v3480 = vpack.c.b16 %v3453, %v3450
  %v3481 = vpack.c.b16 %v3457, %v3454
  %v3482 = vpack.c.b16 %v3458, %v3455
  %v3483 = vpack.c.b16 %v3459, %v3456
  %3508 = vmatprep.subr.bf16.mxu0 %v3461
  %3509 = vmatpush1.bf16.msra.mxu0 %v3460
  %3510 = vmatprep.subr.bf16.mxu0 %v3464
  %3511 = vmatpush1.bf16.msra.mxu0 %v3463
  %3512 = vmatprep.subr.bf16.mxu0 %v3467
  %3513 = vmatpush1.bf16.msra.mxu0 %v3466
  %3514 = vmatprep.subr.bf16.mxu0 %v3470
  %3515 = vmatpush1.bf16.msra.mxu0 %v3469
  %3516 = vmatprep.subr.bf16.mxu0 %v3473
  %3517 = vmatpush1.bf16.msra.mxu0 %v3472
  %3518 = vmatprep.subr.bf16.mxu0 %v3476
  %3519 = vmatpush1.bf16.msra.mxu0 %v3475
  %3520 = vmatprep.subr.bf16.mxu0 %v3479
  %3521 = vmatpush1.bf16.msra.mxu0 %v3478
  %3522 = vmatprep.subr.bf16.mxu0 %v3482
  %3523 = vmatpush1.bf16.msra.mxu0 %v3481
  %3524 = vmatprep.subr.bf16.mxu0 0
  %3525 = vmatpush1.bf16.msra.mxu0 0
  %3526 = vmatprep.subr.bf16.mxu0 0
  %3527 = vmatpush1.bf16.msra.mxu0 0
  %3528 = vmatprep.subr.bf16.mxu0 0
  %3529 = vmatpush1.bf16.msra.mxu0 0
  %3530 = vmatprep.subr.bf16.mxu0 0
  %3531 = vmatpush1.bf16.msra.mxu0 0
  %3532 = vmatprep.subr.bf16.mxu0 0
  %3533 = vmatpush1.bf16.msra.mxu0 0
  %3534 = vmatprep.subr.bf16.mxu0 0
  %3535 = vmatpush1.bf16.msra.mxu0 0
  %3536 = vmatprep.subr.bf16.mxu0 0
  %3537 = vmatpush1.bf16.msra.mxu0 0
  %3538 = vmatprep.subr.bf16.mxu0 0
  %3539 = vmatpush1.bf16.msra.mxu0 0
  %3540 = vmatprep.mubr.bf16.mxu0 0
  %3541 = vmatmul.mubr.bf16.gmra.mrb[0].mxu0 %v2883
  %v3542 = vpop.f32.mrb[0].mxu0
  %v3543 = vadd.f32 0.0, %v3542
  %v3544 = vpop.f32.mrb[0].mxu0
  %v3545 = vadd.f32 0.0, %v3544
  %v3546 = vpop.f32.mrb[0].mxu0
  %v3547 = vpop.f32.mrb[0].mxu0
  %3548 = vdwg.mxu0
  %3549 = vmatprep.subr.bf16.mxu0 0
  %3550 = vmatpush1.bf16.msra.mxu0 %v3462
  %3551 = vmatprep.subr.bf16.mxu0 0
  %3552 = vmatpush1.bf16.msra.mxu0 %v3465
  %3553 = vmatprep.subr.bf16.mxu0 0
  %3554 = vmatpush1.bf16.msra.mxu0 %v3468
  %3555 = vmatprep.subr.bf16.mxu0 0
  %3556 = vmatpush1.bf16.msra.mxu0 %v3471
  %3557 = vmatprep.subr.bf16.mxu0 0
  %3558 = vmatpush1.bf16.msra.mxu0 %v3474
  %3559 = vmatprep.subr.bf16.mxu0 0
  %3560 = vmatpush1.bf16.msra.mxu0 %v3477
  %3561 = vmatprep.subr.bf16.mxu0 0
  %3562 = vmatpush1.bf16.msra.mxu0 %v3480
  %3563 = vmatprep.subr.bf16.mxu0 0
  %3564 = vmatpush1.bf16.msra.mxu0 %v3483
  %3565 = vmatprep.subr.bf16.mxu0 0
  %3566 = vmatpush1.bf16.msra.mxu0 0
  %3567 = vmatprep.subr.bf16.mxu0 0
  %3568 = vmatpush1.bf16.msra.mxu0 0
  %3569 = vmatprep.subr.bf16.mxu0 0
  %3570 = vmatpush1.bf16.msra.mxu0 0
  %3571 = vmatprep.subr.bf16.mxu0 0
  %3572 = vmatpush1.bf16.msra.mxu0 0
  %3573 = vmatprep.subr.bf16.mxu0 0
  %3574 = vmatpush1.bf16.msra.mxu0 0
  %3575 = vmatprep.subr.bf16.mxu0 0
  %3576 = vmatpush1.bf16.msra.mxu0 0
  %3577 = vmatprep.subr.bf16.mxu0 0
  %3578 = vmatpush1.bf16.msra.mxu0 0
  %3579 = vmatprep.subr.bf16.mxu0 0
  %3580 = vmatpush1.bf16.msra.mxu0 0
  %3581 = vmatprep.mubr.bf16.mxu0 0
  %3582 = vmatmul.mubr.bf16.gmra.mrb[0].mxu0 %v2883
  %v3583 = vpop.f32.mrb[0].mxu0
  %v3584 = vadd.f32 0.0, %v3583
  %v3585 = vpop.f32.mrb[0].mxu0
  %v3586 = vpop.f32.mrb[0].mxu0
  %v3587 = vpop.f32.mrb[0].mxu0
  %3588 = vdwg.mxu0
  %v3589 = vadd.f32 %v3302, %v3543
  %v3590 = vxor.u32 %v3589, 2147483648
  %v3591 = vmul.f32 %v3590, 1.442695
  %v3592 = vpow.pop %v3591
  %v3593 = vadd.f32 %v3592, 1.0
  %v3594 = vrcp.pop %v3593
  %v3595 = vmul.f32 1.0, %v3594
  %v3596 = vadd.f32 %v3304, %v3545
  %v3597 = vxor.u32 %v3596, 2147483648
  %v3598 = vmul.f32 %v3597, 1.442695
  %v3599 = vpow.pop %v3598
  %v3600 = vadd.f32 %v3599, 1.0
  %v3601 = vrcp.pop %v3600
  %v3602 = vmul.f32 1.0, %v3601
  %v3603 = vadd.f32 %v3584, %v684
  %v3604 = vmul.f32 %v3595, %v3603
  %v3605 = vadd.f32 %v3343, %v3604
  %v3606 = vtanh.pop %v3605
  %v3607 = vsub.f32 1.0, %v3602
  %v3608 = vmul.f32 %v3607, %v3606
  %v3609 = vmul.f32 %v3602, %v2882
  %v3610 = vadd.f32 %v3608, %v3609
  %v3611 = vpack.c.bf16 %v3610, %v3610
  %v3612 = vld [vmem:[%s7] sm:$0xf]
  %v3613 = vld [vmem:[%s7 + $0x4] sm:$0xf]
  %v3614 = vld [vmem:[%s7 + $0x8] sm:$0xf]
  %v3615 = vld [vmem:[%s7 + $0xc] sm:$0xf]
  %v3616 = vld [vmem:[%s7 + $0x10] sm:$0xf]
  %v3617 = vld [vmem:[%s7 + $0x14] sm:$0xf]
  %v3618 = vld [vmem:[%s7 + $0x18] sm:$0xf]
  %v3619 = vld [vmem:[%s7 + $0x1c] sm:$0xf]
  %v3620 = vld [vmem:[%s7 + $0x20] sm:$0xf]
  %v3621 = vld [vmem:[%s7 + $0x24] sm:$0xf]
  %v3622 = vld [vmem:[%s7 + $0x28] sm:$0xf]
  %v3623 = vld [vmem:[%s7 + $0x2c] sm:$0xf]
  %v3624 = vld [vmem:[%s7 + $0x30] sm:$0xf]
  %v3625 = vld [vmem:[%s7 + $0x34] sm:$0xf]
  %v3626 = vld [vmem:[%s7 + $0x38] sm:$0xf]
  %v3627 = vld [vmem:[%s7 + $0x3c] sm:$0xf]
  %v3644 = vunpack.c.l.b16 %v3612
  %v3645 = vunpack.c.l.b16 %v3613
  %v3646 = vunpack.c.l.b16 %v3614
  %v3647 = vunpack.c.l.b16 %v3615
  %v3648 = vunpack.c.l.b16 %v3616
  %v3649 = vunpack.c.l.b16 %v3617
  %v3650 = vunpack.c.l.b16 %v3618
  %v3651 = vunpack.c.l.b16 %v3619
  %v3652 = vunpack.c.l.b16 %v3620
  %v3653 = vunpack.c.l.b16 %v3621
  %v3654 = vunpack.c.l.b16 %v3622
  %v3655 = vunpack.c.l.b16 %v3623
  %v3656 = vunpack.c.l.b16 %v3624
  %v3657 = vunpack.c.l.b16 %v3625
  %v3658 = vunpack.c.l.b16 %v3626
  %v3659 = vunpack.c.l.b16 %v3627
  %v3660 = vpack.c.b16 %v3645, %v3644
  %v3661 = vpack.c.b16 %v3647, %v3646
  %v3662 = vpack.c.b16 %v3649, %v3648
  %v3663 = vpack.c.b16 %v3651, %v3650
  %v3664 = vpack.c.b16 %v3653, %v3652
  %v3665 = vpack.c.b16 %v3655, %v3654
  %v3666 = vpack.c.b16 %v3657, %v3656
  %v3667 = vpack.c.b16 %v3659, %v3658
  %3676 = vmatprep.subr.bf16.mxu0 0
  %3677 = vmatpush1.bf16.msra.mxu0 %v3660
  %3678 = vmatprep.subr.bf16.mxu0 0
  %3679 = vmatpush1.bf16.msra.mxu0 %v3661
  %3680 = vmatprep.subr.bf16.mxu0 0
  %3681 = vmatpush1.bf16.msra.mxu0 %v3662
  %3682 = vmatprep.subr.bf16.mxu0 0
  %3683 = vmatpush1.bf16.msra.mxu0 %v3663
  %3684 = vmatprep.subr.bf16.mxu0 0
  %3685 = vmatpush1.bf16.msra.mxu0 %v3664
  %3686 = vmatprep.subr.bf16.mxu0 0
  %3687 = vmatpush1.bf16.msra.mxu0 %v3665
  %3688 = vmatprep.subr.bf16.mxu0 0
  %3689 = vmatpush1.bf16.msra.mxu0 %v3666
  %3690 = vmatprep.subr.bf16.mxu0 0
  %3691 = vmatpush1.bf16.msra.mxu0 %v3667
  %3692 = vmatprep.subr.bf16.mxu0 0
  %3693 = vmatpush1.bf16.msra.mxu0 0
  %3694 = vmatprep.subr.bf16.mxu0 0
  %3695 = vmatpush1.bf16.msra.mxu0 0
  %3696 = vmatprep.subr.bf16.mxu0 0
  %3697 = vmatpush1.bf16.msra.mxu0 0
  %3698 = vmatprep.subr.bf16.mxu0 0
  %3699 = vmatpush1.bf16.msra.mxu0 0
  %3700 = vmatprep.subr.bf16.mxu0 0
  %3701 = vmatpush1.bf16.msra.mxu0 0
  %3702 = vmatprep.subr.bf16.mxu0 0
  %3703 = vmatpush1.bf16.msra.mxu0 0
  %3704 = vmatprep.subr.bf16.mxu0 0
  %3705 = vmatpush1.bf16.msra.mxu0 0
  %3706 = vmatprep.subr.bf16.mxu0 0
  %3707 = vmatpush1.bf16.msra.mxu0 0
  %3708 = vmatprep.mubr.bf16.mxu0 0
  %3709 = vmatmul.mubr.bf16.gmra.mrb[0].mxu0 %v3611
  %v3710 = vpop.f32.mrb[0].mxu0
  %v3711 = vadd.f32 %v715, %v3710
  %v3712 = vpop.f32.mrb[0].mxu0
  %v3713 = vpop.f32.mrb[0].mxu0
  %v3714 = vpop.f32.mrb[0].mxu0
  %3715 = vdwg.mxu0
  %v3716 = vpack.c.bf16 %v3711, %v3711
  %s3717 = scalar_lea.vmem %s9, 16
  %3718 = vst [vmem:[%s3717] sm:$0xf] %v3716
  %3719 = vmax.xlane.f32.xlu0 %v3711
  %v3720 = vpop.xlane.xlu0 %3719
  %v3721 = vsub.f32 %v3711, %v3720
  %v3722 = vmul.f32 %v3721, 1.442695
  %v3723 = vpow.pop %v3722
  %3724 = vadd.xlane.f32.xlu0 %v3723
  %v3725 = vpop.xlane.xlu0 %3724
  %v3726 = vrcp.pop %v3725
  %v3727 = vpack.c.bf16 %v3723, %v3723
  %v3728 = vld [vmem:[%s1] sm:$0xf]
  %v3729 = vld [vmem:[%s1 + $0x4] sm:$0xf]
  %v3730 = vld [vmem:[%s1 + $0x8] sm:$0xf]
  %v3731 = vld [vmem:[%s1 + $0xc] sm:$0xf]
  %v3732 = vld [vmem:[%s1 + $0x10] sm:$0xf]
  %v3733 = vld [vmem:[%s1 + $0x14] sm:$0xf]
  %v3734 = vld [vmem:[%s1 + $0x18] sm:$0xf]
  %v3735 = vld [vmem:[%s1 + $0x1c] sm:$0xf]
  %v3736 = vld [vmem:[%s1 + $0x20] sm:$0xf]
  %v3737 = vld [vmem:[%s1 + $0x24] sm:$0xf]
  %v3738 = vld [vmem:[%s1 + $0x28] sm:$0xf]
  %v3739 = vld [vmem:[%s1 + $0x2c] sm:$0xf]
  %v3740 = vld [vmem:[%s1 + $0x30] sm:$0xf]
  %v3741 = vld [vmem:[%s1 + $0x34] sm:$0xf]
  %v3742 = vld [vmem:[%s1 + $0x38] sm:$0xf]
  %v3743 = vld [vmem:[%s1 + $0x3c] sm:$0xf]
  %v3760 = vunpack.c.l.b16 %v3728
  %v3761 = vunpack.c.l.b16 %v3729
  %v3762 = vunpack.c.l.b16 %v3730
  %v3763 = vunpack.c.l.b16 %v3731
  %v3764 = vunpack.c.l.b16 %v3732
  %v3765 = vunpack.c.l.b16 %v3733
  %v3766 = vunpack.c.l.b16 %v3734
  %v3767 = vunpack.c.l.b16 %v3735
  %v3768 = vunpack.c.l.b16 %v3736
  %v3769 = vunpack.c.l.b16 %v3737
  %v3770 = vunpack.c.l.b16 %v3738
  %v3771 = vunpack.c.l.b16 %v3739
  %v3772 = vunpack.c.l.b16 %v3740
  %v3773 = vunpack.c.l.b16 %v3741
  %v3774 = vunpack.c.l.b16 %v3742
  %v3775 = vunpack.c.l.b16 %v3743
  %v3776 = vpack.c.b16 %v3761, %v3760
  %v3777 = vpack.c.b16 %v3763, %v3762
  %v3778 = vpack.c.b16 %v3765, %v3764
  %v3779 = vpack.c.b16 %v3767, %v3766
  %v3780 = vpack.c.b16 %v3769, %v3768
  %v3781 = vpack.c.b16 %v3771, %v3770
  %v3782 = vpack.c.b16 %v3773, %v3772
  %v3783 = vpack.c.b16 %v3775, %v3774
  %3792 = vmatprep.subr.bf16.mxu0 0
  %3793 = vmatpush1.bf16.msra.mxu0 %v3776
  %3794 = vmatprep.subr.bf16.mxu0 0
  %3795 = vmatpush1.bf16.msra.mxu0 %v3777
  %3796 = vmatprep.subr.bf16.mxu0 0
  %3797 = vmatpush1.bf16.msra.mxu0 %v3778
  %3798 = vmatprep.subr.bf16.mxu0 0
  %3799 = vmatpush1.bf16.msra.mxu0 %v3779
  %3800 = vmatprep.subr.bf16.mxu0 0
  %3801 = vmatpush1.bf16.msra.mxu0 %v3780
  %3802 = vmatprep.subr.bf16.mxu0 0
  %3803 = vmatpush1.bf16.msra.mxu0 %v3781
  %3804 = vmatprep.subr.bf16.mxu0 0
  %3805 = vmatpush1.bf16.msra.mxu0 %v3782
  %3806 = vmatprep.subr.bf16.mxu0 0
  %3807 = vmatpush1.bf16.msra.mxu0 %v3783
  %3808 = vmatprep.subr.bf16.mxu0 0
  %3809 = vmatpush1.bf16.msra.mxu0 0
  %3810 = vmatprep.subr.bf16.mxu0 0
  %3811 = vmatpush1.bf16.msra.mxu0 0
  %3812 = vmatprep.subr.bf16.mxu0 0
  %3813 = vmatpush1.bf16.msra.mxu0 0
  %3814 = vmatprep.subr.bf16.mxu0 0
  %3815 = vmatpush1.bf16.msra.mxu0 0
  %3816 = vmatprep.subr.bf16.mxu0 0
  %3817 = vmatpush1.bf16.msra.mxu0 0
  %3818 = vmatprep.subr.bf16.mxu0 0
  %3819 = vmatpush1.bf16.msra.mxu0 0
  %3820 = vmatprep.subr.bf16.mxu0 0
  %3821 = vmatpush1.bf16.msra.mxu0 0
  %3822 = vmatprep.subr.bf16.mxu0 0
  %3823 = vmatpush1.bf16.msra.mxu0 0
  %3824 = vmatprep.mubr.bf16.mxu0 0
  %3825 = vmatmul.mubr.bf16.gmra.mrb[0].mxu0 %v3727
  %v3826 = vpop.f32.mrb[0].mxu0
  %v3827 = vadd.f32 0.0, %v3826
  %v3828 = vpop.f32.mrb[0].mxu0
  %v3829 = vpop.f32.mrb[0].mxu0
  %v3830 = vpop.f32.mrb[0].mxu0
  %3831 = vdwg.mxu0
  %v3832 = vmul.f32 %v3827, %v3726
  %v3833 = vadd.f32 %v3832, %v163
  %v3834 = vpack.c.bf16 %v3833, %v3833
  %v3835 = vld [vmem:[%s3] sm:$0xff]
  %v3836 = vld [vmem:[%s3 + $0x8] sm:$0xf]
  %v3837 = vld [vmem:[%s3 + $0xc] sm:$0xff]
  %v3838 = vld [vmem:[%s3 + $0x14] sm:$0xf]
  %v3839 = vld [vmem:[%s3 + $0x18] sm:$0xff]
  %v3840 = vld [vmem:[%s3 + $0x20] sm:$0xf]
  %v3841 = vld [vmem:[%s3 + $0x24] sm:$0xff]
  %v3842 = vld [vmem:[%s3 + $0x2c] sm:$0xf]
  %v3843 = vld [vmem:[%s3 + $0x30] sm:$0xff]
  %v3844 = vld [vmem:[%s3 + $0x38] sm:$0xf]
  %v3845 = vld [vmem:[%s3 + $0x3c] sm:$0xff]
  %v3846 = vld [vmem:[%s3 + $0x44] sm:$0xf]
  %v3847 = vld [vmem:[%s3 + $0x48] sm:$0xff]
  %v3848 = vld [vmem:[%s3 + $0x50] sm:$0xf]
  %v3849 = vld [vmem:[%s3 + $0x54] sm:$0xff]
  %v3850 = vld [vmem:[%s3 + $0x5c] sm:$0xf]
  %v3851 = vld [vmem:[%s3 + $0x60] sm:$0xff]
  %v3852 = vld [vmem:[%s3 + $0x68] sm:$0xf]
  %v3853 = vld [vmem:[%s3 + $0x6c] sm:$0xff]
  %v3854 = vld [vmem:[%s3 + $0x74] sm:$0xf]
  %v3855 = vld [vmem:[%s3 + $0x78] sm:$0xff]
  %v3856 = vld [vmem:[%s3 + $0x80] sm:$0xf]
  %v3857 = vld [vmem:[%s3 + $0x84] sm:$0xff]
  %v3858 = vld [vmem:[%s3 + $0x8c] sm:$0xf]
  %v3859 = vld [vmem:[%s3 + $0x90] sm:$0xff]
  %v3860 = vld [vmem:[%s3 + $0x98] sm:$0xf]
  %v3861 = vld [vmem:[%s3 + $0x9c] sm:$0xff]
  %v3862 = vld [vmem:[%s3 + $0xa4] sm:$0xf]
  %v3863 = vld [vmem:[%s3 + $0xa8] sm:$0xff]
  %v3864 = vld [vmem:[%s3 + $0xb0] sm:$0xf]
  %v3865 = vld [vmem:[%s3 + $0xb4] sm:$0xff]
  %v3866 = vld [vmem:[%s3 + $0xbc] sm:$0xf]
  %v3899 = vunpack.c.l.b16 %v3835
  %v3900 = vunpack.c.h.b16 %v3835
  %v3901 = vunpack.c.l.b16 %v3836
  %v3902 = vunpack.c.l.b16 %v3837
  %v3903 = vunpack.c.h.b16 %v3837
  %v3904 = vunpack.c.l.b16 %v3838
  %v3905 = vunpack.c.l.b16 %v3839
  %v3906 = vunpack.c.h.b16 %v3839
  %v3907 = vunpack.c.l.b16 %v3840
  %v3908 = vunpack.c.l.b16 %v3841
  %v3909 = vunpack.c.h.b16 %v3841
  %v3910 = vunpack.c.l.b16 %v3842
  %v3911 = vunpack.c.l.b16 %v3843
  %v3912 = vunpack.c.h.b16 %v3843
  %v3913 = vunpack.c.l.b16 %v3844
  %v3914 = vunpack.c.l.b16 %v3845
  %v3915 = vunpack.c.h.b16 %v3845
  %v3916 = vunpack.c.l.b16 %v3846
  %v3917 = vunpack.c.l.b16 %v3847
  %v3918 = vunpack.c.h.b16 %v3847
  %v3919 = vunpack.c.l.b16 %v3848
  %v3920 = vunpack.c.l.b16 %v3849
  %v3921 = vunpack.c.h.b16 %v3849
  %v3922 = vunpack.c.l.b16 %v3850
  %v3923 = vunpack.c.l.b16 %v3851
  %v3924 = vunpack.c.h.b16 %v3851
  %v3925 = vunpack.c.l.b16 %v3852
  %v3926 = vunpack.c.l.b16 %v3853
  %v3927 = vunpack.c.h.b16 %v3853
  %v3928 = vunpack.c.l.b16 %v3854
  %v3929 = vunpack.c.l.b16 %v3855
  %v3930 = vunpack.c.h.b16 %v3855
  %v3931 = vunpack.c.l.b16 %v3856
  %v3932 = vunpack.c.l.b16 %v3857
  %v3933 = vunpack.c.h.b16 %v3857
  %v3934 = vunpack.c.l.b16 %v3858
  %v3935 = vunpack.c.l.b16 %v3859
  %v3936 = vunpack.c.h.b16 %v3859
  %v3937 = vunpack.c.l.b16 %v3860
  %v3938 = vunpack.c.l.b16 %v3861
  %v3939 = vunpack.c.h.b16 %v3861
  %v3940 = vunpack.c.l.b16 %v3862
  %v3941 = vunpack.c.l.b16 %v3863
  %v3942 = vunpack.c.h.b16 %v3863
  %v3943 = vunpack.c.l.b16 %v3864
  %v3944 = vunpack.c.l.b16 %v3865
  %v3945 = vunpack.c.h.b16 %v3865
  %v3946 = vunpack.c.l.b16 %v3866
  %v3947 = vpack.c.b16 %v3902, %v3899
  %v3948 = vpack.c.b16 %v3903, %v3900
  %v3949 = vpack.c.b16 %v3904, %v3901
  %v3950 = vpack.c.b16 %v3908, %v3905
  %v3951 = vpack.c.b16 %v3909, %v3906
  %v3952 = vpack.c.b16 %v3910, %v3907
  %v3953 = vpack.c.b16 %v3914, %v3911
  %v3954 = vpack.c.b16 %v3915, %v3912
  %v3955 = vpack.c.b16 %v3916, %v3913
  %v3956 = vpack.c.b16 %v3920, %v3917
  %v3957 = vpack.c.b16 %v3921, %v3918
  %v3958 = vpack.c.b16 %v3922, %v3919
  %v3959 = vpack.c.b16 %v3926, %v3923
  %v3960 = vpack.c.b16 %v3927, %v3924
  %v3961 = vpack.c.b16 %v3928, %v3925
  %v3962 = vpack.c.b16 %v3932, %v3929
  %v3963 = vpack.c.b16 %v3933, %v3930
  %v3964 = vpack.c.b16 %v3934, %v3931
  %v3965 = vpack.c.b16 %v3938, %v3935
  %v3966 = vpack.c.b16 %v3939, %v3936
  %v3967 = vpack.c.b16 %v3940, %v3937
  %v3968 = vpack.c.b16 %v3944, %v3941
  %v3969 = vpack.c.b16 %v3945, %v3942
  %v3970 = vpack.c.b16 %v3946, %v3943
  %3995 = vmatprep.subr.bf16.mxu0 %v3948
  %3996 = vmatpush1.bf16.msra.mxu0 %v3947
  %3997 = vmatprep.subr.bf16.mxu0 %v3951
  %3998 = vmatpush1.bf16.msra.mxu0 %v3950
  %3999 = vmatprep.subr.bf16.mxu0 %v3954
  %4000 = vmatpush1.bf16.msra.mxu0 %v3953
  %4001 = vmatprep.subr.bf16.mxu0 %v3957
  %4002 = vmatpush1.bf16.msra.mxu0 %v3956
  %4003 = vmatprep.subr.bf16.mxu0 %v3960
  %4004 = vmatpush1.bf16.msra.mxu0 %v3959
  %4005 = vmatprep.subr.bf16.mxu0 %v3963
  %4006 = vmatpush1.bf16.msra.mxu0 %v3962
  %4007 = vmatprep.subr.bf16.mxu0 %v3966
  %4008 = vmatpush1.bf16.msra.mxu0 %v3965
  %4009 = vmatprep.subr.bf16.mxu0 %v3969
  %4010 = vmatpush1.bf16.msra.mxu0 %v3968
  %4011 = vmatprep.subr.bf16.mxu0 0
  %4012 = vmatpush1.bf16.msra.mxu0 0
  %4013 = vmatprep.subr.bf16.mxu0 0
  %4014 = vmatpush1.bf16.msra.mxu0 0
  %4015 = vmatprep.subr.bf16.mxu0 0
  %4016 = vmatpush1.bf16.msra.mxu0 0
  %4017 = vmatprep.subr.bf16.mxu0 0
  %4018 = vmatpush1.bf16.msra.mxu0 0
  %4019 = vmatprep.subr.bf16.mxu0 0
  %4020 = vmatpush1.bf16.msra.mxu0 0
  %4021 = vmatprep.subr.bf16.mxu0 0
  %4022 = vmatpush1.bf16.msra.mxu0 0
  %4023 = vmatprep.subr.bf16.mxu0 0
  %4024 = vmatpush1.bf16.msra.mxu0 0
  %4025 = vmatprep.subr.bf16.mxu0 0
  %4026 = vmatpush1.bf16.msra.mxu0 0
  %4027 = vmatprep.mubr.bf16.mxu0 0
  %4028 = vmatmul.mubr.bf16.gmra.mrb[0].mxu0 %v3834
  %v4029 = vpop.f32.mrb[0].mxu0
  %v4030 = vadd.f32 %v203, %v4029
  %v4031 = vpop.f32.mrb[0].mxu0
  %v4032 = vadd.f32 %v207, %v4031
  %v4033 = vpop.f32.mrb[0].mxu0
  %v4034 = vpop.f32.mrb[0].mxu0
  %4035 = vdwg.mxu0
  %4036 = vmatprep.subr.bf16.mxu0 0
  %4037 = vmatpush1.bf16.msra.mxu0 %v3949
  %4038 = vmatprep.subr.bf16.mxu0 0
  %4039 = vmatpush1.bf16.msra.mxu0 %v3952
  %4040 = vmatprep.subr.bf16.mxu0 0
  %4041 = vmatpush1.bf16.msra.mxu0 %v3955
  %4042 = vmatprep.subr.bf16.mxu0 0
  %4043 = vmatpush1.bf16.msra.mxu0 %v3958
  %4044 = vmatprep.subr.bf16.mxu0 0
  %4045 = vmatpush1.bf16.msra.mxu0 %v3961
  %4046 = vmatprep.subr.bf16.mxu0 0
  %4047 = vmatpush1.bf16.msra.mxu0 %v3964
  %4048 = vmatprep.subr.bf16.mxu0 0
  %4049 = vmatpush1.bf16.msra.mxu0 %v3967
  %4050 = vmatprep.subr.bf16.mxu0 0
  %4051 = vmatpush1.bf16.msra.mxu0 %v3970
  %4052 = vmatprep.subr.bf16.mxu0 0
  %4053 = vmatpush1.bf16.msra.mxu0 0
  %4054 = vmatprep.subr.bf16.mxu0 0
  %4055 = vmatpush1.bf16.msra.mxu0 0
  %4056 = vmatprep.subr.bf16.mxu0 0
  %4057 = vmatpush1.bf16.msra.mxu0 0
  %4058 = vmatprep.subr.bf16.mxu0 0
  %4059 = vmatpush1.bf16.msra.mxu0 0
  %4060 = vmatprep.subr.bf16.mxu0 0
  %4061 = vmatpush1.bf16.msra.mxu0 0
  %4062 = vmatprep.subr.bf16.mxu0 0
  %4063 = vmatpush1.bf16.msra.mxu0 0
  %4064 = vmatprep.subr.bf16.mxu0 0
  %4065 = vmatpush1.bf16.msra.mxu0 0
  %4066 = vmatprep.subr.bf16.mxu0 0
  %4067 = vmatpush1.bf16.msra.mxu0 0
  %4068 = vmatprep.mubr.bf16.mxu0 0
  %4069 = vmatmul.mubr.bf16.gmra.mrb[0].mxu0 %v3834
  %v4070 = vpop.f32.mrb[0].mxu0
  %v4071 = vadd.f32 %v211, %v4070
  %v4072 = vpop.f32.mrb[0].mxu0
  %v4073 = vpop.f32.mrb[0].mxu0
  %v4074 = vpop.f32.mrb[0].mxu0
  %4075 = vdwg.mxu0
  %v4076 = vld [vmem:[%s4] sm:$0xff]
  %v4077 = vld [vmem:[%s4 + $0x8] sm:$0xf]
  %v4078 = vld [vmem:[%s4 + $0xc] sm:$0xff]
  %v4079 = vld [vmem:[%s4 + $0x14] sm:$0xf]
  %v4080 = vld [vmem:[%s4 + $0x18] sm:$0xff]
  %v4081 = vld [vmem:[%s4 + $0x20] sm:$0xf]
  %v4082 = vld [vmem:[%s4 + $0x24] sm:$0xff]
  %v4083 = vld [vmem:[%s4 + $0x2c] sm:$0xf]
  %v4084 = vld [vmem:[%s4 + $0x30] sm:$0xff]
  %v4085 = vld [vmem:[%s4 + $0x38] sm:$0xf]
  %v4086 = vld [vmem:[%s4 + $0x3c] sm:$0xff]
  %v4087 = vld [vmem:[%s4 + $0x44] sm:$0xf]
  %v4088 = vld [vmem:[%s4 + $0x48] sm:$0xff]
  %v4089 = vld [vmem:[%s4 + $0x50] sm:$0xf]
  %v4090 = vld [vmem:[%s4 + $0x54] sm:$0xff]
  %v4091 = vld [vmem:[%s4 + $0x5c] sm:$0xf]
  %v4092 = vld [vmem:[%s4 + $0x60] sm:$0xff]
  %v4093 = vld [vmem:[%s4 + $0x68] sm:$0xf]
  %v4094 = vld [vmem:[%s4 + $0x6c] sm:$0xff]
  %v4095 = vld [vmem:[%s4 + $0x74] sm:$0xf]
  %v4096 = vld [vmem:[%s4 + $0x78] sm:$0xff]
  %v4097 = vld [vmem:[%s4 + $0x80] sm:$0xf]
  %v4098 = vld [vmem:[%s4 + $0x84] sm:$0xff]
  %v4099 = vld [vmem:[%s4 + $0x8c] sm:$0xf]
  %v4100 = vld [vmem:[%s4 + $0x90] sm:$0xff]
  %v4101 = vld [vmem:[%s4 + $0x98] sm:$0xf]
  %v4102 = vld [vmem:[%s4 + $0x9c] sm:$0xff]
  %v4103 = vld [vmem:[%s4 + $0xa4] sm:$0xf]
  %v4104 = vld [vmem:[%s4 + $0xa8] sm:$0xff]
  %v4105 = vld [vmem:[%s4 + $0xb0] sm:$0xf]
  %v4106 = vld [vmem:[%s4 + $0xb4] sm:$0xff]
  %v4107 = vld [vmem:[%s4 + $0xbc] sm:$0xf]
  %v4140 = vunpack.c.l.b16 %v4076
  %v4141 = vunpack.c.h.b16 %v4076
  %v4142 = vunpack.c.l.b16 %v4077
  %v4143 = vunpack.c.l.b16 %v4078
  %v4144 = vunpack.c.h.b16 %v4078
  %v4145 = vunpack.c.l.b16 %v4079
  %v4146 = vunpack.c.l.b16 %v4080
  %v4147 = vunpack.c.h.b16 %v4080
  %v4148 = vunpack.c.l.b16 %v4081
  %v4149 = vunpack.c.l.b16 %v4082
  %v4150 = vunpack.c.h.b16 %v4082
  %v4151 = vunpack.c.l.b16 %v4083
  %v4152 = vunpack.c.l.b16 %v4084
  %v4153 = vunpack.c.h.b16 %v4084
  %v4154 = vunpack.c.l.b16 %v4085
  %v4155 = vunpack.c.l.b16 %v4086
  %v4156 = vunpack.c.h.b16 %v4086
  %v4157 = vunpack.c.l.b16 %v4087
  %v4158 = vunpack.c.l.b16 %v4088
  %v4159 = vunpack.c.h.b16 %v4088
  %v4160 = vunpack.c.l.b16 %v4089
  %v4161 = vunpack.c.l.b16 %v4090
  %v4162 = vunpack.c.h.b16 %v4090
  %v4163 = vunpack.c.l.b16 %v4091
  %v4164 = vunpack.c.l.b16 %v4092
  %v4165 = vunpack.c.h.b16 %v4092
  %v4166 = vunpack.c.l.b16 %v4093
  %v4167 = vunpack.c.l.b16 %v4094
  %v4168 = vunpack.c.h.b16 %v4094
  %v4169 = vunpack.c.l.b16 %v4095
  %v4170 = vunpack.c.l.b16 %v4096
  %v4171 = vunpack.c.h.b16 %v4096
  %v4172 = vunpack.c.l.b16 %v4097
  %v4173 = vunpack.c.l.b16 %v4098
  %v4174 = vunpack.c.h.b16 %v4098
  %v4175 = vunpack.c.l.b16 %v4099
  %v4176 = vunpack.c.l.b16 %v4100
  %v4177 = vunpack.c.h.b16 %v4100
  %v4178 = vunpack.c.l.b16 %v4101
  %v4179 = vunpack.c.l.b16 %v4102
  %v4180 = vunpack.c.h.b16 %v4102
  %v4181 = vunpack.c.l.b16 %v4103
  %v4182 = vunpack.c.l.b16 %v4104
  %v4183 = vunpack.c.h.b16 %v4104
  %v4184 = vunpack.c.l.b16 %v4105
  %v4185 = vunpack.c.l.b16 %v4106
  %v4186 = vunpack.c.h.b16 %v4106
  %v4187 = vunpack.c.l.b16 %v4107
  %v4188 = vpack.c.b16 %v4143, %v4140
  %v4189 = vpack.c.b16 %v4144, %v4141
  %v4190 = vpack.c.b16 %v4145, %v4142
  %v4191 = vpack.c.b16 %v4149, %v4146
  %v4192 = vpack.c.b16 %v4150, %v4147
  %v4193 = vpack.c.b16 %v4151, %v4148
  %v4194 = vpack.c.b16 %v4155, %v4152
  %v4195 = vpack.c.b16 %v4156, %v4153
  %v4196 = vpack.c.b16 %v4157, %v4154
  %v4197 = vpack.c.b16 %v4161, %v4158
  %v4198 = vpack.c.b16 %v4162, %v4159
  %v4199 = vpack.c.b16 %v4163, %v4160
  %v4200 = vpack.c.b16 %v4167, %v4164
  %v4201 = vpack.c.b16 %v4168, %v4165
  %v4202 = vpack.c.b16 %v4169, %v4166
  %v4203 = vpack.c.b16 %v4173, %v4170
  %v4204 = vpack.c.b16 %v4174, %v4171
  %v4205 = vpack.c.b16 %v4175, %v4172
  %v4206 = vpack.c.b16 %v4179, %v4176
  %v4207 = vpack.c.b16 %v4180, %v4177
  %v4208 = vpack.c.b16 %v4181, %v4178
  %v4209 = vpack.c.b16 %v4185, %v4182
  %v4210 = vpack.c.b16 %v4186, %v4183
  %v4211 = vpack.c.b16 %v4187, %v4184
  %4236 = vmatprep.subr.bf16.mxu0 %v4189
  %4237 = vmatpush1.bf16.msra.mxu0 %v4188
  %4238 = vmatprep.subr.bf16.mxu0 %v4192
  %4239 = vmatpush1.bf16.msra.mxu0 %v4191
  %4240 = vmatprep.subr.bf16.mxu0 %v4195
  %4241 = vmatpush1.bf16.msra.mxu0 %v4194
  %4242 = vmatprep.subr.bf16.mxu0 %v4198
  %4243 = vmatpush1.bf16.msra.mxu0 %v4197
  %4244 = vmatprep.subr.bf16.mxu0 %v4201
  %4245 = vmatpush1.bf16.msra.mxu0 %v4200
  %4246 = vmatprep.subr.bf16.mxu0 %v4204
  %4247 = vmatpush1.bf16.msra.mxu0 %v4203
  %4248 = vmatprep.subr.bf16.mxu0 %v4207
  %4249 = vmatpush1.bf16.msra.mxu0 %v4206
  %4250 = vmatprep.subr.bf16.mxu0 %v4210
  %4251 = vmatpush1.bf16.msra.mxu0 %v4209
  %4252 = vmatprep.subr.bf16.mxu0 0
  %4253 = vmatpush1.bf16.msra.mxu0 0
  %4254 = vmatprep.subr.bf16.mxu0 0
  %4255 = vmatpush1.bf16.msra.mxu0 0
  %4256 = vmatprep.subr.bf16.mxu0 0
  %4257 = vmatpush1.bf16.msra.mxu0 0
  %4258 = vmatprep.subr.bf16.mxu0 0
  %4259 = vmatpush1.bf16.msra.mxu0 0
  %4260 = vmatprep.subr.bf16.mxu0 0
  %4261 = vmatpush1.bf16.msra.mxu0 0
  %4262 = vmatprep.subr.bf16.mxu0 0
  %4263 = vmatpush1.bf16.msra.mxu0 0
  %4264 = vmatprep.subr.bf16.mxu0 0
  %4265 = vmatpush1.bf16.msra.mxu0 0
  %4266 = vmatprep.subr.bf16.mxu0 0
  %4267 = vmatpush1.bf16.msra.mxu0 0
  %4268 = vmatprep.mubr.bf16.mxu0 0
  %4269 = vmatmul.mubr.bf16.gmra.mrb[0].mxu0 %v3611
  %v4270 = vpop.f32.mrb[0].mxu0
  %v4271 = vadd.f32 0.0, %v4270
  %v4272 = vpop.f32.mrb[0].mxu0
  %v4273 = vadd.f32 0.0, %v4272
  %v4274 = vpop.f32.mrb[0].mxu0
  %v4275 = vpop.f32.mrb[0].mxu0
  %4276 = vdwg.mxu0
  %4277 = vmatprep.subr.bf16.mxu0 0
  %4278 = vmatpush1.bf16.msra.mxu0 %v4190
  %4279 = vmatprep.subr.bf16.mxu0 0
  %4280 = vmatpush1.bf16.msra.mxu0 %v4193
  %4281 = vmatprep.subr.bf16.mxu0 0
  %4282 = vmatpush1.bf16.msra.mxu0 %v4196
  %4283 = vmatprep.subr.bf16.mxu0 0
  %4284 = vmatpush1.bf16.msra.mxu0 %v4199
  %4285 = vmatprep.subr.bf16.mxu0 0
  %4286 = vmatpush1.bf16.msra.mxu0 %v4202
  %4287 = vmatprep.subr.bf16.mxu0 0
  %4288 = vmatpush1.bf16.msra.mxu0 %v4205
  %4289 = vmatprep.subr.bf16.mxu0 0
  %4290 = vmatpush1.bf16.msra.mxu0 %v4208
  %4291 = vmatprep.subr.bf16.mxu0 0
  %4292 = vmatpush1.bf16.msra.mxu0 %v4211
  %4293 = vmatprep.subr.bf16.mxu0 0
  %4294 = vmatpush1.bf16.msra.mxu0 0
  %4295 = vmatprep.subr.bf16.mxu0 0
  %4296 = vmatpush1.bf16.msra.mxu0 0
  %4297 = vmatprep.subr.bf16.mxu0 0
  %4298 = vmatpush1.bf16.msra.mxu0 0
  %4299 = vmatprep.subr.bf16.mxu0 0
  %4300 = vmatpush1.bf16.msra.mxu0 0
  %4301 = vmatprep.subr.bf16.mxu0 0
  %4302 = vmatpush1.bf16.msra.mxu0 0
  %4303 = vmatprep.subr.bf16.mxu0 0
  %4304 = vmatpush1.bf16.msra.mxu0 0
  %4305 = vmatprep.subr.bf16.mxu0 0
  %4306 = vmatpush1.bf16.msra.mxu0 0
  %4307 = vmatprep.subr.bf16.mxu0 0
  %4308 = vmatpush1.bf16.msra.mxu0 0
  %4309 = vmatprep.mubr.bf16.mxu0 0
  %4310 = vmatmul.mubr.bf16.gmra.mrb[0].mxu0 %v3611
  %v4311 = vpop.f32.mrb[0].mxu0
  %v4312 = vadd.f32 0.0, %v4311
  %v4313 = vpop.f32.mrb[0].mxu0
  %v4314 = vpop.f32.mrb[0].mxu0
  %v4315 = vpop.f32.mrb[0].mxu0
  %4316 = vdwg.mxu0
  %v4317 = vadd.f32 %v4030, %v4271
  %v4318 = vxor.u32 %v4317, 2147483648
  %v4319 = vmul.f32 %v4318, 1.442695
  %v4320 = vpow.pop %v4319
  %v4321 = vadd.f32 %v4320, 1.0
  %v4322 = vrcp.pop %v4321
  %v4323 = vmul.f32 1.0, %v4322
  %v4324 = vadd.f32 %v4032, %v4273
  %v4325 = vxor.u32 %v4324, 2147483648
  %v4326 = vmul.f32 %v4325, 1.442695
  %v4327 = vpow.pop %v4326
  %v4328 = vadd.f32 %v4327, 1.0
  %v4329 = vrcp.pop %v4328
  %v4330 = vmul.f32 1.0, %v4329
  %v4331 = vadd.f32 %v4312, %v684
  %v4332 = vmul.f32 %v4323, %v4331
  %v4333 = vadd.f32 %v4071, %v4332
  %v4334 = vtanh.pop %v4333
  %v4335 = vsub.f32 1.0, %v4330
  %v4336 = vmul.f32 %v4335, %v4334
  %v4337 = vmul.f32 %v4330, %v3610
  %v4338 = vadd.f32 %v4336, %v4337
  %v4339 = vpack.c.bf16 %v4338, %v4338
  %v4340 = vld [vmem:[%s7] sm:$0xf]
  %v4341 = vld [vmem:[%s7 + $0x4] sm:$0xf]
  %v4342 = vld [vmem:[%s7 + $0x8] sm:$0xf]
  %v4343 = vld [vmem:[%s7 + $0xc] sm:$0xf]
  %v4344 = vld [vmem:[%s7 + $0x10] sm:$0xf]
  %v4345 = vld [vmem:[%s7 + $0x14] sm:$0xf]
  %v4346 = vld [vmem:[%s7 + $0x18] sm:$0xf]
  %v4347 = vld [vmem:[%s7 + $0x1c] sm:$0xf]
  %v4348 = vld [vmem:[%s7 + $0x20] sm:$0xf]
  %v4349 = vld [vmem:[%s7 + $0x24] sm:$0xf]
  %v4350 = vld [vmem:[%s7 + $0x28] sm:$0xf]
  %v4351 = vld [vmem:[%s7 + $0x2c] sm:$0xf]
  %v4352 = vld [vmem:[%s7 + $0x30] sm:$0xf]
  %v4353 = vld [vmem:[%s7 + $0x34] sm:$0xf]
  %v4354 = vld [vmem:[%s7 + $0x38] sm:$0xf]
  %v4355 = vld [vmem:[%s7 + $0x3c] sm:$0xf]
  %v4372 = vunpack.c.l.b16 %v4340
  %v4373 = vunpack.c.l.b16 %v4341
  %v4374 = vunpack.c.l.b16 %v4342
  %v4375 = vunpack.c.l.b16 %v4343
  %v4376 = vunpack.c.l.b16 %v4344
  %v4377 = vunpack.c.l.b16 %v4345
  %v4378 = vunpack.c.l.b16 %v4346
  %v4379 = vunpack.c.l.b16 %v4347
  %v4380 = vunpack.c.l.b16 %v4348
  %v4381 = vunpack.c.l.b16 %v4349
  %v4382 = vunpack.c.l.b16 %v4350
  %v4383 = vunpack.c.l.b16 %v4351
  %v4384 = vunpack.c.l.b16 %v4352
  %v4385 = vunpack.c.l.b16 %v4353
  %v4386 = vunpack.c.l.b16 %v4354
  %v4387 = vunpack.c.l.b16 %v4355
  %v4388 = vpack.c.b16 %v4373, %v4372
  %v4389 = vpack.c.b16 %v4375, %v4374
  %v4390 = vpack.c.b16 %v4377, %v4376
  %v4391 = vpack.c.b16 %v4379, %v4378
  %v4392 = vpack.c.b16 %v4381, %v4380
  %v4393 = vpack.c.b16 %v4383, %v4382
  %v4394 = vpack.c.b16 %v4385, %v4384
  %v4395 = vpack.c.b16 %v4387, %v4386
  %4404 = vmatprep.subr.bf16.mxu0 0
  %4405 = vmatpush1.bf16.msra.mxu0 %v4388
  %4406 = vmatprep.subr.bf16.mxu0 0
  %4407 = vmatpush1.bf16.msra.mxu0 %v4389
  %4408 = vmatprep.subr.bf16.mxu0 0
  %4409 = vmatpush1.bf16.msra.mxu0 %v4390
  %4410 = vmatprep.subr.bf16.mxu0 0
  %4411 = vmatpush1.bf16.msra.mxu0 %v4391
  %4412 = vmatprep.subr.bf16.mxu0 0
  %4413 = vmatpush1.bf16.msra.mxu0 %v4392
  %4414 = vmatprep.subr.bf16.mxu0 0
  %4415 = vmatpush1.bf16.msra.mxu0 %v4393
  %4416 = vmatprep.subr.bf16.mxu0 0
  %4417 = vmatpush1.bf16.msra.mxu0 %v4394
  %4418 = vmatprep.subr.bf16.mxu0 0
  %4419 = vmatpush1.bf16.msra.mxu0 %v4395
  %4420 = vmatprep.subr.bf16.mxu0 0
  %4421 = vmatpush1.bf16.msra.mxu0 0
  %4422 = vmatprep.subr.bf16.mxu0 0
  %4423 = vmatpush1.bf16.msra.mxu0 0
  %4424 = vmatprep.subr.bf16.mxu0 0
  %4425 = vmatpush1.bf16.msra.mxu0 0
  %4426 = vmatprep.subr.bf16.mxu0 0
  %4427 = vmatpush1.bf16.msra.mxu0 0
  %4428 = vmatprep.subr.bf16.mxu0 0
  %4429 = vmatpush1.bf16.msra.mxu0 0
  %4430 = vmatprep.subr.bf16.mxu0 0
  %4431 = vmatpush1.bf16.msra.mxu0 0
  %4432 = vmatprep.subr.bf16.mxu0 0
  %4433 = vmatpush1.bf16.msra.mxu0 0
  %4434 = vmatprep.subr.bf16.mxu0 0
  %4435 = vmatpush1.bf16.msra.mxu0 0
  %4436 = vmatprep.mubr.bf16.mxu0 0
  %4437 = vmatmul.mubr.bf16.gmra.mrb[0].mxu0 %v4339
  %v4438 = vpop.f32.mrb[0].mxu0
  %v4439 = vadd.f32 %v715, %v4438
  %v4440 = vpop.f32.mrb[0].mxu0
  %v4441 = vpop.f32.mrb[0].mxu0
  %v4442 = vpop.f32.mrb[0].mxu0
  %4443 = vdwg.mxu0
  %v4444 = vpack.c.bf16 %v4439, %v4439
  %s4445 = scalar_lea.vmem %s9, 20
  %4446 = vst [vmem:[%s4445] sm:$0xf] %v4444
  %4447 = vmax.xlane.f32.xlu0 %v4439
  %v4448 = vpop.xlane.xlu0 %4447
  %v4449 = vsub.f32 %v4439, %v4448
  %v4450 = vmul.f32 %v4449, 1.442695
  %v4451 = vpow.pop %v4450
  %4452 = vadd.xlane.f32.xlu0 %v4451
  %v4453 = vpop.xlane.xlu0 %4452
  %v4454 = vrcp.pop %v4453
  %v4455 = vpack.c.bf16 %v4451, %v4451
  %v4456 = vld [vmem:[%s1] sm:$0xf]
  %v4457 = vld [vmem:[%s1 + $0x4] sm:$0xf]
  %v4458 = vld [vmem:[%s1 + $0x8] sm:$0xf]
  %v4459 = vld [vmem:[%s1 + $0xc] sm:$0xf]
  %v4460 = vld [vmem:[%s1 + $0x10] sm:$0xf]
  %v4461 = vld [vmem:[%s1 + $0x14] sm:$0xf]
  %v4462 = vld [vmem:[%s1 + $0x18] sm:$0xf]
  %v4463 = vld [vmem:[%s1 + $0x1c] sm:$0xf]
  %v4464 = vld [vmem:[%s1 + $0x20] sm:$0xf]
  %v4465 = vld [vmem:[%s1 + $0x24] sm:$0xf]
  %v4466 = vld [vmem:[%s1 + $0x28] sm:$0xf]
  %v4467 = vld [vmem:[%s1 + $0x2c] sm:$0xf]
  %v4468 = vld [vmem:[%s1 + $0x30] sm:$0xf]
  %v4469 = vld [vmem:[%s1 + $0x34] sm:$0xf]
  %v4470 = vld [vmem:[%s1 + $0x38] sm:$0xf]
  %v4471 = vld [vmem:[%s1 + $0x3c] sm:$0xf]
  %v4488 = vunpack.c.l.b16 %v4456
  %v4489 = vunpack.c.l.b16 %v4457
  %v4490 = vunpack.c.l.b16 %v4458
  %v4491 = vunpack.c.l.b16 %v4459
  %v4492 = vunpack.c.l.b16 %v4460
  %v4493 = vunpack.c.l.b16 %v4461
  %v4494 = vunpack.c.l.b16 %v4462
  %v4495 = vunpack.c.l.b16 %v4463
  %v4496 = vunpack.c.l.b16 %v4464
  %v4497 = vunpack.c.l.b16 %v4465
  %v4498 = vunpack.c.l.b16 %v4466
  %v4499 = vunpack.c.l.b16 %v4467
  %v4500 = vunpack.c.l.b16 %v4468
  %v4501 = vunpack.c.l.b16 %v4469
  %v4502 = vunpack.c.l.b16 %v4470
  %v4503 = vunpack.c.l.b16 %v4471
  %v4504 = vpack.c.b16 %v4489, %v4488
  %v4505 = vpack.c.b16 %v4491, %v4490
  %v4506 = vpack.c.b16 %v4493, %v4492
  %v4507 = vpack.c.b16 %v4495, %v4494
  %v4508 = vpack.c.b16 %v4497, %v4496
  %v4509 = vpack.c.b16 %v4499, %v4498
  %v4510 = vpack.c.b16 %v4501, %v4500
  %v4511 = vpack.c.b16 %v4503, %v4502
  %4520 = vmatprep.subr.bf16.mxu0 0
  %4521 = vmatpush1.bf16.msra.mxu0 %v4504
  %4522 = vmatprep.subr.bf16.mxu0 0
  %4523 = vmatpush1.bf16.msra.mxu0 %v4505
  %4524 = vmatprep.subr.bf16.mxu0 0
  %4525 = vmatpush1.bf16.msra.mxu0 %v4506
  %4526 = vmatprep.subr.bf16.mxu0 0
  %4527 = vmatpush1.bf16.msra.mxu0 %v4507
  %4528 = vmatprep.subr.bf16.mxu0 0
  %4529 = vmatpush1.bf16.msra.mxu0 %v4508
  %4530 = vmatprep.subr.bf16.mxu0 0
  %4531 = vmatpush1.bf16.msra.mxu0 %v4509
  %4532 = vmatprep.subr.bf16.mxu0 0
  %4533 = vmatpush1.bf16.msra.mxu0 %v4510
  %4534 = vmatprep.subr.bf16.mxu0 0
  %4535 = vmatpush1.bf16.msra.mxu0 %v4511
  %4536 = vmatprep.subr.bf16.mxu0 0
  %4537 = vmatpush1.bf16.msra.mxu0 0
  %4538 = vmatprep.subr.bf16.mxu0 0
  %4539 = vmatpush1.bf16.msra.mxu0 0
  %4540 = vmatprep.subr.bf16.mxu0 0
  %4541 = vmatpush1.bf16.msra.mxu0 0
  %4542 = vmatprep.subr.bf16.mxu0 0
  %4543 = vmatpush1.bf16.msra.mxu0 0
  %4544 = vmatprep.subr.bf16.mxu0 0
  %4545 = vmatpush1.bf16.msra.mxu0 0
  %4546 = vmatprep.subr.bf16.mxu0 0
  %4547 = vmatpush1.bf16.msra.mxu0 0
  %4548 = vmatprep.subr.bf16.mxu0 0
  %4549 = vmatpush1.bf16.msra.mxu0 0
  %4550 = vmatprep.subr.bf16.mxu0 0
  %4551 = vmatpush1.bf16.msra.mxu0 0
  %4552 = vmatprep.mubr.bf16.mxu0 0
  %4553 = vmatmul.mubr.bf16.gmra.mrb[0].mxu0 %v4455
  %v4554 = vpop.f32.mrb[0].mxu0
  %v4555 = vadd.f32 0.0, %v4554
  %v4556 = vpop.f32.mrb[0].mxu0
  %v4557 = vpop.f32.mrb[0].mxu0
  %v4558 = vpop.f32.mrb[0].mxu0
  %4559 = vdwg.mxu0
  %v4560 = vmul.f32 %v4555, %v4454
  %v4561 = vadd.f32 %v4560, %v163
  %v4562 = vpack.c.bf16 %v4561, %v4561
  %v4563 = vld [vmem:[%s3] sm:$0xff]
  %v4564 = vld [vmem:[%s3 + $0x8] sm:$0xf]
  %v4565 = vld [vmem:[%s3 + $0xc] sm:$0xff]
  %v4566 = vld [vmem:[%s3 + $0x14] sm:$0xf]
  %v4567 = vld [vmem:[%s3 + $0x18] sm:$0xff]
  %v4568 = vld [vmem:[%s3 + $0x20] sm:$0xf]
  %v4569 = vld [vmem:[%s3 + $0x24] sm:$0xff]
  %v4570 = vld [vmem:[%s3 + $0x2c] sm:$0xf]
  %v4571 = vld [vmem:[%s3 + $0x30] sm:$0xff]
  %v4572 = vld [vmem:[%s3 + $0x38] sm:$0xf]
  %v4573 = vld [vmem:[%s3 + $0x3c] sm:$0xff]
  %v4574 = vld [vmem:[%s3 + $0x44] sm:$0xf]
  %v4575 = vld [vmem:[%s3 + $0x48] sm:$0xff]
  %v4576 = vld [vmem:[%s3 + $0x50] sm:$0xf]
  %v4577 = vld [vmem:[%s3 + $0x54] sm:$0xff]
  %v4578 = vld [vmem:[%s3 + $0x5c] sm:$0xf]
  %v4579 = vld [vmem:[%s3 + $0x60] sm:$0xff]
  %v4580 = vld [vmem:[%s3 + $0x68] sm:$0xf]
  %v4581 = vld [vmem:[%s3 + $0x6c] sm:$0xff]
  %v4582 = vld [vmem:[%s3 + $0x74] sm:$0xf]
  %v4583 = vld [vmem:[%s3 + $0x78] sm:$0xff]
  %v4584 = vld [vmem:[%s3 + $0x80] sm:$0xf]
  %v4585 = vld [vmem:[%s3 + $0x84] sm:$0xff]
  %v4586 = vld [vmem:[%s3 + $0x8c] sm:$0xf]
  %v4587 = vld [vmem:[%s3 + $0x90] sm:$0xff]
  %v4588 = vld [vmem:[%s3 + $0x98] sm:$0xf]
  %v4589 = vld [vmem:[%s3 + $0x9c] sm:$0xff]
  %v4590 = vld [vmem:[%s3 + $0xa4] sm:$0xf]
  %v4591 = vld [vmem:[%s3 + $0xa8] sm:$0xff]
  %v4592 = vld [vmem:[%s3 + $0xb0] sm:$0xf]
  %v4593 = vld [vmem:[%s3 + $0xb4] sm:$0xff]
  %v4594 = vld [vmem:[%s3 + $0xbc] sm:$0xf]
  %v4627 = vunpack.c.l.b16 %v4563
  %v4628 = vunpack.c.h.b16 %v4563
  %v4629 = vunpack.c.l.b16 %v4564
  %v4630 = vunpack.c.l.b16 %v4565
  %v4631 = vunpack.c.h.b16 %v4565
  %v4632 = vunpack.c.l.b16 %v4566
  %v4633 = vunpack.c.l.b16 %v4567
  %v4634 = vunpack.c.h.b16 %v4567
  %v4635 = vunpack.c.l.b16 %v4568
  %v4636 = vunpack.c.l.b16 %v4569
  %v4637 = vunpack.c.h.b16 %v4569
  %v4638 = vunpack.c.l.b16 %v4570
  %v4639 = vunpack.c.l.b16 %v4571
  %v4640 = vunpack.c.h.b16 %v4571
  %v4641 = vunpack.c.l.b16 %v4572
  %v4642 = vunpack.c.l.b16 %v4573
  %v4643 = vunpack.c.h.b16 %v4573
  %v4644 = vunpack.c.l.b16 %v4574
  %v4645 = vunpack.c.l.b16 %v4575
  %v4646 = vunpack.c.h.b16 %v4575
  %v4647 = vunpack.c.l.b16 %v4576
  %v4648 = vunpack.c.l.b16 %v4577
  %v4649 = vunpack.c.h.b16 %v4577
  %v4650 = vunpack.c.l.b16 %v4578
  %v4651 = vunpack.c.l.b16 %v4579
  %v4652 = vunpack.c.h.b16 %v4579
  %v4653 = vunpack.c.l.b16 %v4580
  %v4654 = vunpack.c.l.b16 %v4581
  %v4655 = vunpack.c.h.b16 %v4581
  %v4656 = vunpack.c.l.b16 %v4582
  %v4657 = vunpack.c.l.b16 %v4583
  %v4658 = vunpack.c.h.b16 %v4583
  %v4659 = vunpack.c.l.b16 %v4584
  %v4660 = vunpack.c.l.b16 %v4585
  %v4661 = vunpack.c.h.b16 %v4585
  %v4662 = vunpack.c.l.b16 %v4586
  %v4663 = vunpack.c.l.b16 %v4587
  %v4664 = vunpack.c.h.b16 %v4587
  %v4665 = vunpack.c.l.b16 %v4588
  %v4666 = vunpack.c.l.b16 %v4589
  %v4667 = vunpack.c.h.b16 %v4589
  %v4668 = vunpack.c.l.b16 %v4590
  %v4669 = vunpack.c.l.b16 %v4591
  %v4670 = vunpack.c.h.b16 %v4591
  %v4671 = vunpack.c.l.b16 %v4592
  %v4672 = vunpack.c.l.b16 %v4593
  %v4673 = vunpack.c.h.b16 %v4593
  %v4674 = vunpack.c.l.b16 %v4594
  %v4675 = vpack.c.b16 %v4630, %v4627
  %v4676 = vpack.c.b16 %v4631, %v4628
  %v4677 = vpack.c.b16 %v4632, %v4629
  %v4678 = vpack.c.b16 %v4636, %v4633
  %v4679 = vpack.c.b16 %v4637, %v4634
  %v4680 = vpack.c.b16 %v4638, %v4635
  %v4681 = vpack.c.b16 %v4642, %v4639
  %v4682 = vpack.c.b16 %v4643, %v4640
  %v4683 = vpack.c.b16 %v4644, %v4641
  %v4684 = vpack.c.b16 %v4648, %v4645
  %v4685 = vpack.c.b16 %v4649, %v4646
  %v4686 = vpack.c.b16 %v4650, %v4647
  %v4687 = vpack.c.b16 %v4654, %v4651
  %v4688 = vpack.c.b16 %v4655, %v4652
  %v4689 = vpack.c.b16 %v4656, %v4653
  %v4690 = vpack.c.b16 %v4660, %v4657
  %v4691 = vpack.c.b16 %v4661, %v4658
  %v4692 = vpack.c.b16 %v4662, %v4659
  %v4693 = vpack.c.b16 %v4666, %v4663
  %v4694 = vpack.c.b16 %v4667, %v4664
  %v4695 = vpack.c.b16 %v4668, %v4665
  %v4696 = vpack.c.b16 %v4672, %v4669
  %v4697 = vpack.c.b16 %v4673, %v4670
  %v4698 = vpack.c.b16 %v4674, %v4671
  %4723 = vmatprep.subr.bf16.mxu0 %v4676
  %4724 = vmatpush1.bf16.msra.mxu0 %v4675
  %4725 = vmatprep.subr.bf16.mxu0 %v4679
  %4726 = vmatpush1.bf16.msra.mxu0 %v4678
  %4727 = vmatprep.subr.bf16.mxu0 %v4682
  %4728 = vmatpush1.bf16.msra.mxu0 %v4681
  %4729 = vmatprep.subr.bf16.mxu0 %v4685
  %4730 = vmatpush1.bf16.msra.mxu0 %v4684
  %4731 = vmatprep.subr.bf16.mxu0 %v4688
  %4732 = vmatpush1.bf16.msra.mxu0 %v4687
  %4733 = vmatprep.subr.bf16.mxu0 %v4691
  %4734 = vmatpush1.bf16.msra.mxu0 %v4690
  %4735 = vmatprep.subr.bf16.mxu0 %v4694
  %4736 = vmatpush1.bf16.msra.mxu0 %v4693
  %4737 = vmatprep.subr.bf16.mxu0 %v4697
  %4738 = vmatpush1.bf16.msra.mxu0 %v4696
  %4739 = vmatprep.subr.bf16.mxu0 0
  %4740 = vmatpush1.bf16.msra.mxu0 0
  %4741 = vmatprep.subr.bf16.mxu0 0
  %4742 = vmatpush1.bf16.msra.mxu0 0
  %4743 = vmatprep.subr.bf16.mxu0 0
  %4744 = vmatpush1.bf16.msra.mxu0 0
  %4745 = vmatprep.subr.bf16.mxu0 0
  %4746 = vmatpush1.bf16.msra.mxu0 0
  %4747 = vmatprep.subr.bf16.mxu0 0
  %4748 = vmatpush1.bf16.msra.mxu0 0
  %4749 = vmatprep.subr.bf16.mxu0 0
  %4750 = vmatpush1.bf16.msra.mxu0 0
  %4751 = vmatprep.subr.bf16.mxu0 0
  %4752 = vmatpush1.bf16.msra.mxu0 0
  %4753 = vmatprep.subr.bf16.mxu0 0
  %4754 = vmatpush1.bf16.msra.mxu0 0
  %4755 = vmatprep.mubr.bf16.mxu0 0
  %4756 = vmatmul.mubr.bf16.gmra.mrb[0].mxu0 %v4562
  %v4757 = vpop.f32.mrb[0].mxu0
  %v4758 = vadd.f32 %v203, %v4757
  %v4759 = vpop.f32.mrb[0].mxu0
  %v4760 = vadd.f32 %v207, %v4759
  %v4761 = vpop.f32.mrb[0].mxu0
  %v4762 = vpop.f32.mrb[0].mxu0
  %4763 = vdwg.mxu0
  %4764 = vmatprep.subr.bf16.mxu0 0
  %4765 = vmatpush1.bf16.msra.mxu0 %v4677
  %4766 = vmatprep.subr.bf16.mxu0 0
  %4767 = vmatpush1.bf16.msra.mxu0 %v4680
  %4768 = vmatprep.subr.bf16.mxu0 0
  %4769 = vmatpush1.bf16.msra.mxu0 %v4683
  %4770 = vmatprep.subr.bf16.mxu0 0
  %4771 = vmatpush1.bf16.msra.mxu0 %v4686
  %4772 = vmatprep.subr.bf16.mxu0 0
  %4773 = vmatpush1.bf16.msra.mxu0 %v4689
  %4774 = vmatprep.subr.bf16.mxu0 0
  %4775 = vmatpush1.bf16.msra.mxu0 %v4692
  %4776 = vmatprep.subr.bf16.mxu0 0
  %4777 = vmatpush1.bf16.msra.mxu0 %v4695
  %4778 = vmatprep.subr.bf16.mxu0 0
  %4779 = vmatpush1.bf16.msra.mxu0 %v4698
  %4780 = vmatprep.subr.bf16.mxu0 0
  %4781 = vmatpush1.bf16.msra.mxu0 0
  %4782 = vmatprep.subr.bf16.mxu0 0
  %4783 = vmatpush1.bf16.msra.mxu0 0
  %4784 = vmatprep.subr.bf16.mxu0 0
  %4785 = vmatpush1.bf16.msra.mxu0 0
  %4786 = vmatprep.subr.bf16.mxu0 0
  %4787 = vmatpush1.bf16.msra.mxu0 0
  %4788 = vmatprep.subr.bf16.mxu0 0
  %4789 = vmatpush1.bf16.msra.mxu0 0
  %4790 = vmatprep.subr.bf16.mxu0 0
  %4791 = vmatpush1.bf16.msra.mxu0 0
  %4792 = vmatprep.subr.bf16.mxu0 0
  %4793 = vmatpush1.bf16.msra.mxu0 0
  %4794 = vmatprep.subr.bf16.mxu0 0
  %4795 = vmatpush1.bf16.msra.mxu0 0
  %4796 = vmatprep.mubr.bf16.mxu0 0
  %4797 = vmatmul.mubr.bf16.gmra.mrb[0].mxu0 %v4562
  %v4798 = vpop.f32.mrb[0].mxu0
  %v4799 = vadd.f32 %v211, %v4798
  %v4800 = vpop.f32.mrb[0].mxu0
  %v4801 = vpop.f32.mrb[0].mxu0
  %v4802 = vpop.f32.mrb[0].mxu0
  %4803 = vdwg.mxu0
  %v4804 = vld [vmem:[%s4] sm:$0xff]
  %v4805 = vld [vmem:[%s4 + $0x8] sm:$0xf]
  %v4806 = vld [vmem:[%s4 + $0xc] sm:$0xff]
  %v4807 = vld [vmem:[%s4 + $0x14] sm:$0xf]
  %v4808 = vld [vmem:[%s4 + $0x18] sm:$0xff]
  %v4809 = vld [vmem:[%s4 + $0x20] sm:$0xf]
  %v4810 = vld [vmem:[%s4 + $0x24] sm:$0xff]
  %v4811 = vld [vmem:[%s4 + $0x2c] sm:$0xf]
  %v4812 = vld [vmem:[%s4 + $0x30] sm:$0xff]
  %v4813 = vld [vmem:[%s4 + $0x38] sm:$0xf]
  %v4814 = vld [vmem:[%s4 + $0x3c] sm:$0xff]
  %v4815 = vld [vmem:[%s4 + $0x44] sm:$0xf]
  %v4816 = vld [vmem:[%s4 + $0x48] sm:$0xff]
  %v4817 = vld [vmem:[%s4 + $0x50] sm:$0xf]
  %v4818 = vld [vmem:[%s4 + $0x54] sm:$0xff]
  %v4819 = vld [vmem:[%s4 + $0x5c] sm:$0xf]
  %v4820 = vld [vmem:[%s4 + $0x60] sm:$0xff]
  %v4821 = vld [vmem:[%s4 + $0x68] sm:$0xf]
  %v4822 = vld [vmem:[%s4 + $0x6c] sm:$0xff]
  %v4823 = vld [vmem:[%s4 + $0x74] sm:$0xf]
  %v4824 = vld [vmem:[%s4 + $0x78] sm:$0xff]
  %v4825 = vld [vmem:[%s4 + $0x80] sm:$0xf]
  %v4826 = vld [vmem:[%s4 + $0x84] sm:$0xff]
  %v4827 = vld [vmem:[%s4 + $0x8c] sm:$0xf]
  %v4828 = vld [vmem:[%s4 + $0x90] sm:$0xff]
  %v4829 = vld [vmem:[%s4 + $0x98] sm:$0xf]
  %v4830 = vld [vmem:[%s4 + $0x9c] sm:$0xff]
  %v4831 = vld [vmem:[%s4 + $0xa4] sm:$0xf]
  %v4832 = vld [vmem:[%s4 + $0xa8] sm:$0xff]
  %v4833 = vld [vmem:[%s4 + $0xb0] sm:$0xf]
  %v4834 = vld [vmem:[%s4 + $0xb4] sm:$0xff]
  %v4835 = vld [vmem:[%s4 + $0xbc] sm:$0xf]
  %v4868 = vunpack.c.l.b16 %v4804
  %v4869 = vunpack.c.h.b16 %v4804
  %v4870 = vunpack.c.l.b16 %v4805
  %v4871 = vunpack.c.l.b16 %v4806
  %v4872 = vunpack.c.h.b16 %v4806
  %v4873 = vunpack.c.l.b16 %v4807
  %v4874 = vunpack.c.l.b16 %v4808
  %v4875 = vunpack.c.h.b16 %v4808
  %v4876 = vunpack.c.l.b16 %v4809
  %v4877 = vunpack.c.l.b16 %v4810
  %v4878 = vunpack.c.h.b16 %v4810
  %v4879 = vunpack.c.l.b16 %v4811
  %v4880 = vunpack.c.l.b16 %v4812
  %v4881 = vunpack.c.h.b16 %v4812
  %v4882 = vunpack.c.l.b16 %v4813
  %v4883 = vunpack.c.l.b16 %v4814
  %v4884 = vunpack.c.h.b16 %v4814
  %v4885 = vunpack.c.l.b16 %v4815
  %v4886 = vunpack.c.l.b16 %v4816
  %v4887 = vunpack.c.h.b16 %v4816
  %v4888 = vunpack.c.l.b16 %v4817
  %v4889 = vunpack.c.l.b16 %v4818
  %v4890 = vunpack.c.h.b16 %v4818
  %v4891 = vunpack.c.l.b16 %v4819
  %v4892 = vunpack.c.l.b16 %v4820
  %v4893 = vunpack.c.h.b16 %v4820
  %v4894 = vunpack.c.l.b16 %v4821
  %v4895 = vunpack.c.l.b16 %v4822
  %v4896 = vunpack.c.h.b16 %v4822
  %v4897 = vunpack.c.l.b16 %v4823
  %v4898 = vunpack.c.l.b16 %v4824
  %v4899 = vunpack.c.h.b16 %v4824
  %v4900 = vunpack.c.l.b16 %v4825
  %v4901 = vunpack.c.l.b16 %v4826
  %v4902 = vunpack.c.h.b16 %v4826
  %v4903 = vunpack.c.l.b16 %v4827
  %v4904 = vunpack.c.l.b16 %v4828
  %v4905 = vunpack.c.h.b16 %v4828
  %v4906 = vunpack.c.l.b16 %v4829
  %v4907 = vunpack.c.l.b16 %v4830
  %v4908 = vunpack.c.h.b16 %v4830
  %v4909 = vunpack.c.l.b16 %v4831
  %v4910 = vunpack.c.l.b16 %v4832
  %v4911 = vunpack.c.h.b16 %v4832
  %v4912 = vunpack.c.l.b16 %v4833
  %v4913 = vunpack.c.l.b16 %v4834
  %v4914 = vunpack.c.h.b16 %v4834
  %v4915 = vunpack.c.l.b16 %v4835
  %v4916 = vpack.c.b16 %v4871, %v4868
  %v4917 = vpack.c.b16 %v4872, %v4869
  %v4918 = vpack.c.b16 %v4873, %v4870
  %v4919 = vpack.c.b16 %v4877, %v4874
  %v4920 = vpack.c.b16 %v4878, %v4875
  %v4921 = vpack.c.b16 %v4879, %v4876
  %v4922 = vpack.c.b16 %v4883, %v4880
  %v4923 = vpack.c.b16 %v4884, %v4881
  %v4924 = vpack.c.b16 %v4885, %v4882
  %v4925 = vpack.c.b16 %v4889, %v4886
  %v4926 = vpack.c.b16 %v4890, %v4887
  %v4927 = vpack.c.b16 %v4891, %v4888
  %v4928 = vpack.c.b16 %v4895, %v4892
  %v4929 = vpack.c.b16 %v4896, %v4893
  %v4930 = vpack.c.b16 %v4897, %v4894
  %v4931 = vpack.c.b16 %v4901, %v4898
  %v4932 = vpack.c.b16 %v4902, %v4899
  %v4933 = vpack.c.b16 %v4903, %v4900
  %v4934 = vpack.c.b16 %v4907, %v4904
  %v4935 = vpack.c.b16 %v4908, %v4905
  %v4936 = vpack.c.b16 %v4909, %v4906
  %v4937 = vpack.c.b16 %v4913, %v4910
  %v4938 = vpack.c.b16 %v4914, %v4911
  %v4939 = vpack.c.b16 %v4915, %v4912
  %4964 = vmatprep.subr.bf16.mxu0 %v4917
  %4965 = vmatpush1.bf16.msra.mxu0 %v4916
  %4966 = vmatprep.subr.bf16.mxu0 %v4920
  %4967 = vmatpush1.bf16.msra.mxu0 %v4919
  %4968 = vmatprep.subr.bf16.mxu0 %v4923
  %4969 = vmatpush1.bf16.msra.mxu0 %v4922
  %4970 = vmatprep.subr.bf16.mxu0 %v4926
  %4971 = vmatpush1.bf16.msra.mxu0 %v4925
  %4972 = vmatprep.subr.bf16.mxu0 %v4929
  %4973 = vmatpush1.bf16.msra.mxu0 %v4928
  %4974 = vmatprep.subr.bf16.mxu0 %v4932
  %4975 = vmatpush1.bf16.msra.mxu0 %v4931
  %4976 = vmatprep.subr.bf16.mxu0 %v4935
  %4977 = vmatpush1.bf16.msra.mxu0 %v4934
  %4978 = vmatprep.subr.bf16.mxu0 %v4938
  %4979 = vmatpush1.bf16.msra.mxu0 %v4937
  %4980 = vmatprep.subr.bf16.mxu0 0
  %4981 = vmatpush1.bf16.msra.mxu0 0
  %4982 = vmatprep.subr.bf16.mxu0 0
  %4983 = vmatpush1.bf16.msra.mxu0 0
  %4984 = vmatprep.subr.bf16.mxu0 0
  %4985 = vmatpush1.bf16.msra.mxu0 0
  %4986 = vmatprep.subr.bf16.mxu0 0
  %4987 = vmatpush1.bf16.msra.mxu0 0
  %4988 = vmatprep.subr.bf16.mxu0 0
  %4989 = vmatpush1.bf16.msra.mxu0 0
  %4990 = vmatprep.subr.bf16.mxu0 0
  %4991 = vmatpush1.bf16.msra.mxu0 0
  %4992 = vmatprep.subr.bf16.mxu0 0
  %4993 = vmatpush1.bf16.msra.mxu0 0
  %4994 = vmatprep.subr.bf16.mxu0 0
  %4995 = vmatpush1.bf16.msra.mxu0 0
  %4996 = vmatprep.mubr.bf16.mxu0 0
  %4997 = vmatmul.mubr.bf16.gmra.mrb[0].mxu0 %v4339
  %v4998 = vpop.f32.mrb[0].mxu0
  %v4999 = vadd.f32 0.0, %v4998
  %v5000 = vpop.f32.mrb[0].mxu0
  %v5001 = vadd.f32 0.0, %v5000
  %v5002 = vpop.f32.mrb[0].mxu0
  %v5003 = vpop.f32.mrb[0].mxu0
  %5004 = vdwg.mxu0
  %5005 = vmatprep.subr.bf16.mxu0 0
  %5006 = vmatpush1.bf16.msra.mxu0 %v4918
  %5007 = vmatprep.subr.bf16.mxu0 0
  %5008 = vmatpush1.bf16.msra.mxu0 %v4921
  %5009 = vmatprep.subr.bf16.mxu0 0
  %5010 = vmatpush1.bf16.msra.mxu0 %v4924
  %5011 = vmatprep.subr.bf16.mxu0 0
  %5012 = vmatpush1.bf16.msra.mxu0 %v4927
  %5013 = vmatprep.subr.bf16.mxu0 0
  %5014 = vmatpush1.bf16.msra.mxu0 %v4930
  %5015 = vmatprep.subr.bf16.mxu0 0
  %5016 = vmatpush1.bf16.msra.mxu0 %v4933
  %5017 = vmatprep.subr.bf16.mxu0 0
  %5018 = vmatpush1.bf16.msra.mxu0 %v4936
  %5019 = vmatprep.subr.bf16.mxu0 0
  %5020 = vmatpush1.bf16.msra.mxu0 %v4939
  %5021 = vmatprep.subr.bf16.mxu0 0
  %5022 = vmatpush1.bf16.msra.mxu0 0
  %5023 = vmatprep.subr.bf16.mxu0 0
  %5024 = vmatpush1.bf16.msra.mxu0 0
  %5025 = vmatprep.subr.bf16.mxu0 0
  %5026 = vmatpush1.bf16.msra.mxu0 0
  %5027 = vmatprep.subr.bf16.mxu0 0
  %5028 = vmatpush1.bf16.msra.mxu0 0
  %5029 = vmatprep.subr.bf16.mxu0 0
  %5030 = vmatpush1.bf16.msra.mxu0 0
  %5031 = vmatprep.subr.bf16.mxu0 0
  %5032 = vmatpush1.bf16.msra.mxu0 0
  %5033 = vmatprep.subr.bf16.mxu0 0
  %5034 = vmatpush1.bf16.msra.mxu0 0
  %5035 = vmatprep.subr.bf16.mxu0 0
  %5036 = vmatpush1.bf16.msra.mxu0 0
  %5037 = vmatprep.mubr.bf16.mxu0 0
  %5038 = vmatmul.mubr.bf16.gmra.mrb[0].mxu0 %v4339
  %v5039 = vpop.f32.mrb[0].mxu0
  %v5040 = vadd.f32 0.0, %v5039
  %v5041 = vpop.f32.mrb[0].mxu0
  %v5042 = vpop.f32.mrb[0].mxu0
  %v5043 = vpop.f32.mrb[0].mxu0
  %5044 = vdwg.mxu0
  %v5045 = vadd.f32 %v4758, %v4999
  %v5046 = vxor.u32 %v5045, 2147483648
  %v5047 = vmul.f32 %v5046, 1.442695
  %v5048 = vpow.pop %v5047
  %v5049 = vadd.f32 %v5048, 1.0
  %v5050 = vrcp.pop %v5049
  %v5051 = vmul.f32 1.0, %v5050
  %v5052 = vadd.f32 %v4760, %v5001
  %v5053 = vxor.u32 %v5052, 2147483648
  %v5054 = vmul.f32 %v5053, 1.442695
  %v5055 = vpow.pop %v5054
  %v5056 = vadd.f32 %v5055, 1.0
  %v5057 = vrcp.pop %v5056
  %v5058 = vmul.f32 1.0, %v5057
  %v5059 = vadd.f32 %v5040, %v684
  %v5060 = vmul.f32 %v5051, %v5059
  %v5061 = vadd.f32 %v4799, %v5060
  %v5062 = vtanh.pop %v5061
  %v5063 = vsub.f32 1.0, %v5058
  %v5064 = vmul.f32 %v5063, %v5062
  %v5065 = vmul.f32 %v5058, %v4338
  %v5066 = vadd.f32 %v5064, %v5065
  %v5067 = vpack.c.bf16 %v5066, %v5066
  %v5068 = vld [vmem:[%s7] sm:$0xf]
  %v5069 = vld [vmem:[%s7 + $0x4] sm:$0xf]
  %v5070 = vld [vmem:[%s7 + $0x8] sm:$0xf]
  %v5071 = vld [vmem:[%s7 + $0xc] sm:$0xf]
  %v5072 = vld [vmem:[%s7 + $0x10] sm:$0xf]
  %v5073 = vld [vmem:[%s7 + $0x14] sm:$0xf]
  %v5074 = vld [vmem:[%s7 + $0x18] sm:$0xf]
  %v5075 = vld [vmem:[%s7 + $0x1c] sm:$0xf]
  %v5076 = vld [vmem:[%s7 + $0x20] sm:$0xf]
  %v5077 = vld [vmem:[%s7 + $0x24] sm:$0xf]
  %v5078 = vld [vmem:[%s7 + $0x28] sm:$0xf]
  %v5079 = vld [vmem:[%s7 + $0x2c] sm:$0xf]
  %v5080 = vld [vmem:[%s7 + $0x30] sm:$0xf]
  %v5081 = vld [vmem:[%s7 + $0x34] sm:$0xf]
  %v5082 = vld [vmem:[%s7 + $0x38] sm:$0xf]
  %v5083 = vld [vmem:[%s7 + $0x3c] sm:$0xf]
  %v5100 = vunpack.c.l.b16 %v5068
  %v5101 = vunpack.c.l.b16 %v5069
  %v5102 = vunpack.c.l.b16 %v5070
  %v5103 = vunpack.c.l.b16 %v5071
  %v5104 = vunpack.c.l.b16 %v5072
  %v5105 = vunpack.c.l.b16 %v5073
  %v5106 = vunpack.c.l.b16 %v5074
  %v5107 = vunpack.c.l.b16 %v5075
  %v5108 = vunpack.c.l.b16 %v5076
  %v5109 = vunpack.c.l.b16 %v5077
  %v5110 = vunpack.c.l.b16 %v5078
  %v5111 = vunpack.c.l.b16 %v5079
  %v5112 = vunpack.c.l.b16 %v5080
  %v5113 = vunpack.c.l.b16 %v5081
  %v5114 = vunpack.c.l.b16 %v5082
  %v5115 = vunpack.c.l.b16 %v5083
  %v5116 = vpack.c.b16 %v5101, %v5100
  %v5117 = vpack.c.b16 %v5103, %v5102
  %v5118 = vpack.c.b16 %v5105, %v5104
  %v5119 = vpack.c.b16 %v5107, %v5106
  %v5120 = vpack.c.b16 %v5109, %v5108
  %v5121 = vpack.c.b16 %v5111, %v5110
  %v5122 = vpack.c.b16 %v5113, %v5112
  %v5123 = vpack.c.b16 %v5115, %v5114
  %5132 = vmatprep.subr.bf16.mxu0 0
  %5133 = vmatpush1.bf16.msra.mxu0 %v5116
  %5134 = vmatprep.subr.bf16.mxu0 0
  %5135 = vmatpush1.bf16.msra.mxu0 %v5117
  %5136 = vmatprep.subr.bf16.mxu0 0
  %5137 = vmatpush1.bf16.msra.mxu0 %v5118
  %5138 = vmatprep.subr.bf16.mxu0 0
  %5139 = vmatpush1.bf16.msra.mxu0 %v5119
  %5140 = vmatprep.subr.bf16.mxu0 0
  %5141 = vmatpush1.bf16.msra.mxu0 %v5120
  %5142 = vmatprep.subr.bf16.mxu0 0
  %5143 = vmatpush1.bf16.msra.mxu0 %v5121
  %5144 = vmatprep.subr.bf16.mxu0 0
  %5145 = vmatpush1.bf16.msra.mxu0 %v5122
  %5146 = vmatprep.subr.bf16.mxu0 0
  %5147 = vmatpush1.bf16.msra.mxu0 %v5123
  %5148 = vmatprep.subr.bf16.mxu0 0
  %5149 = vmatpush1.bf16.msra.mxu0 0
  %5150 = vmatprep.subr.bf16.mxu0 0
  %5151 = vmatpush1.bf16.msra.mxu0 0
  %5152 = vmatprep.subr.bf16.mxu0 0
  %5153 = vmatpush1.bf16.msra.mxu0 0
  %5154 = vmatprep.subr.bf16.mxu0 0
  %5155 = vmatpush1.bf16.msra.mxu0 0
  %5156 = vmatprep.subr.bf16.mxu0 0
  %5157 = vmatpush1.bf16.msra.mxu0 0
  %5158 = vmatprep.subr.bf16.mxu0 0
  %5159 = vmatpush1.bf16.msra.mxu0 0
  %5160 = vmatprep.subr.bf16.mxu0 0
  %5161 = vmatpush1.bf16.msra.mxu0 0
  %5162 = vmatprep.subr.bf16.mxu0 0
  %5163 = vmatpush1.bf16.msra.mxu0 0
  %5164 = vmatprep.mubr.bf16.mxu0 0
  %5165 = vmatmul.mubr.bf16.gmra.mrb[0].mxu0 %v5067
  %v5166 = vpop.f32.mrb[0].mxu0
  %v5167 = vadd.f32 %v715, %v5166
  %v5168 = vpop.f32.mrb[0].mxu0
  %v5169 = vpop.f32.mrb[0].mxu0
  %v5170 = vpop.f32.mrb[0].mxu0
  %5171 = vdwg.mxu0
  %v5172 = vpack.c.bf16 %v5167, %v5167
  %s5173 = scalar_lea.vmem %s9, 24
  %5174 = vst [vmem:[%s5173] sm:$0xf] %v5172
  %5175 = vmax.xlane.f32.xlu0 %v5167
  %v5176 = vpop.xlane.xlu0 %5175
  %v5177 = vsub.f32 %v5167, %v5176
  %v5178 = vmul.f32 %v5177, 1.442695
  %v5179 = vpow.pop %v5178
  %5180 = vadd.xlane.f32.xlu0 %v5179
  %v5181 = vpop.xlane.xlu0 %5180
  %v5182 = vrcp.pop %v5181
  %v5183 = vpack.c.bf16 %v5179, %v5179
  %v5184 = vld [vmem:[%s1] sm:$0xf]
  %v5185 = vld [vmem:[%s1 + $0x4] sm:$0xf]
  %v5186 = vld [vmem:[%s1 + $0x8] sm:$0xf]
  %v5187 = vld [vmem:[%s1 + $0xc] sm:$0xf]
  %v5188 = vld [vmem:[%s1 + $0x10] sm:$0xf]
  %v5189 = vld [vmem:[%s1 + $0x14] sm:$0xf]
  %v5190 = vld [vmem:[%s1 + $0x18] sm:$0xf]
  %v5191 = vld [vmem:[%s1 + $0x1c] sm:$0xf]
  %v5192 = vld [vmem:[%s1 + $0x20] sm:$0xf]
  %v5193 = vld [vmem:[%s1 + $0x24] sm:$0xf]
  %v5194 = vld [vmem:[%s1 + $0x28] sm:$0xf]
  %v5195 = vld [vmem:[%s1 + $0x2c] sm:$0xf]
  %v5196 = vld [vmem:[%s1 + $0x30] sm:$0xf]
  %v5197 = vld [vmem:[%s1 + $0x34] sm:$0xf]
  %v5198 = vld [vmem:[%s1 + $0x38] sm:$0xf]
  %v5199 = vld [vmem:[%s1 + $0x3c] sm:$0xf]
  %v5216 = vunpack.c.l.b16 %v5184
  %v5217 = vunpack.c.l.b16 %v5185
  %v5218 = vunpack.c.l.b16 %v5186
  %v5219 = vunpack.c.l.b16 %v5187
  %v5220 = vunpack.c.l.b16 %v5188
  %v5221 = vunpack.c.l.b16 %v5189
  %v5222 = vunpack.c.l.b16 %v5190
  %v5223 = vunpack.c.l.b16 %v5191
  %v5224 = vunpack.c.l.b16 %v5192
  %v5225 = vunpack.c.l.b16 %v5193
  %v5226 = vunpack.c.l.b16 %v5194
  %v5227 = vunpack.c.l.b16 %v5195
  %v5228 = vunpack.c.l.b16 %v5196
  %v5229 = vunpack.c.l.b16 %v5197
  %v5230 = vunpack.c.l.b16 %v5198
  %v5231 = vunpack.c.l.b16 %v5199
  %v5232 = vpack.c.b16 %v5217, %v5216
  %v5233 = vpack.c.b16 %v5219, %v5218
  %v5234 = vpack.c.b16 %v5221, %v5220
  %v5235 = vpack.c.b16 %v5223, %v5222
  %v5236 = vpack.c.b16 %v5225, %v5224
  %v5237 = vpack.c.b16 %v5227, %v5226
  %v5238 = vpack.c.b16 %v5229, %v5228
  %v5239 = vpack.c.b16 %v5231, %v5230
  %5248 = vmatprep.subr.bf16.mxu0 0
  %5249 = vmatpush1.bf16.msra.mxu0 %v5232
  %5250 = vmatprep.subr.bf16.mxu0 0
  %5251 = vmatpush1.bf16.msra.mxu0 %v5233
  %5252 = vmatprep.subr.bf16.mxu0 0
  %5253 = vmatpush1.bf16.msra.mxu0 %v5234
  %5254 = vmatprep.subr.bf16.mxu0 0
  %5255 = vmatpush1.bf16.msra.mxu0 %v5235
  %5256 = vmatprep.subr.bf16.mxu0 0
  %5257 = vmatpush1.bf16.msra.mxu0 %v5236
  %5258 = vmatprep.subr.bf16.mxu0 0
  %5259 = vmatpush1.bf16.msra.mxu0 %v5237
  %5260 = vmatprep.subr.bf16.mxu0 0
  %5261 = vmatpush1.bf16.msra.mxu0 %v5238
  %5262 = vmatprep.subr.bf16.mxu0 0
  %5263 = vmatpush1.bf16.msra.mxu0 %v5239
  %5264 = vmatprep.subr.bf16.mxu0 0
  %5265 = vmatpush1.bf16.msra.mxu0 0
  %5266 = vmatprep.subr.bf16.mxu0 0
  %5267 = vmatpush1.bf16.msra.mxu0 0
  %5268 = vmatprep.subr.bf16.mxu0 0
  %5269 = vmatpush1.bf16.msra.mxu0 0
  %5270 = vmatprep.subr.bf16.mxu0 0
  %5271 = vmatpush1.bf16.msra.mxu0 0
  %5272 = vmatprep.subr.bf16.mxu0 0
  %5273 = vmatpush1.bf16.msra.mxu0 0
  %5274 = vmatprep.subr.bf16.mxu0 0
  %5275 = vmatpush1.bf16.msra.mxu0 0
  %5276 = vmatprep.subr.bf16.mxu0 0
  %5277 = vmatpush1.bf16.msra.mxu0 0
  %5278 = vmatprep.subr.bf16.mxu0 0
  %5279 = vmatpush1.bf16.msra.mxu0 0
  %5280 = vmatprep.mubr.bf16.mxu0 0
  %5281 = vmatmul.mubr.bf16.gmra.mrb[0].mxu0 %v5183
  %v5282 = vpop.f32.mrb[0].mxu0
  %v5283 = vadd.f32 0.0, %v5282
  %v5284 = vpop.f32.mrb[0].mxu0
  %v5285 = vpop.f32.mrb[0].mxu0
  %v5286 = vpop.f32.mrb[0].mxu0
  %5287 = vdwg.mxu0
  %v5288 = vmul.f32 %v5283, %v5182
  %v5289 = vadd.f32 %v5288, %v163
  %v5290 = vpack.c.bf16 %v5289, %v5289
  %v5291 = vld [vmem:[%s3] sm:$0xff]
  %v5292 = vld [vmem:[%s3 + $0x8] sm:$0xf]
  %v5293 = vld [vmem:[%s3 + $0xc] sm:$0xff]
  %v5294 = vld [vmem:[%s3 + $0x14] sm:$0xf]
  %v5295 = vld [vmem:[%s3 + $0x18] sm:$0xff]
  %v5296 = vld [vmem:[%s3 + $0x20] sm:$0xf]
  %v5297 = vld [vmem:[%s3 + $0x24] sm:$0xff]
  %v5298 = vld [vmem:[%s3 + $0x2c] sm:$0xf]
  %v5299 = vld [vmem:[%s3 + $0x30] sm:$0xff]
  %v5300 = vld [vmem:[%s3 + $0x38] sm:$0xf]
  %v5301 = vld [vmem:[%s3 + $0x3c] sm:$0xff]
  %v5302 = vld [vmem:[%s3 + $0x44] sm:$0xf]
  %v5303 = vld [vmem:[%s3 + $0x48] sm:$0xff]
  %v5304 = vld [vmem:[%s3 + $0x50] sm:$0xf]
  %v5305 = vld [vmem:[%s3 + $0x54] sm:$0xff]
  %v5306 = vld [vmem:[%s3 + $0x5c] sm:$0xf]
  %v5307 = vld [vmem:[%s3 + $0x60] sm:$0xff]
  %v5308 = vld [vmem:[%s3 + $0x68] sm:$0xf]
  %v5309 = vld [vmem:[%s3 + $0x6c] sm:$0xff]
  %v5310 = vld [vmem:[%s3 + $0x74] sm:$0xf]
  %v5311 = vld [vmem:[%s3 + $0x78] sm:$0xff]
  %v5312 = vld [vmem:[%s3 + $0x80] sm:$0xf]
  %v5313 = vld [vmem:[%s3 + $0x84] sm:$0xff]
  %v5314 = vld [vmem:[%s3 + $0x8c] sm:$0xf]
  %v5315 = vld [vmem:[%s3 + $0x90] sm:$0xff]
  %v5316 = vld [vmem:[%s3 + $0x98] sm:$0xf]
  %v5317 = vld [vmem:[%s3 + $0x9c] sm:$0xff]
  %v5318 = vld [vmem:[%s3 + $0xa4] sm:$0xf]
  %v5319 = vld [vmem:[%s3 + $0xa8] sm:$0xff]
  %v5320 = vld [vmem:[%s3 + $0xb0] sm:$0xf]
  %v5321 = vld [vmem:[%s3 + $0xb4] sm:$0xff]
  %v5322 = vld [vmem:[%s3 + $0xbc] sm:$0xf]
  %v5355 = vunpack.c.l.b16 %v5291
  %v5356 = vunpack.c.h.b16 %v5291
  %v5357 = vunpack.c.l.b16 %v5292
  %v5358 = vunpack.c.l.b16 %v5293
  %v5359 = vunpack.c.h.b16 %v5293
  %v5360 = vunpack.c.l.b16 %v5294
  %v5361 = vunpack.c.l.b16 %v5295
  %v5362 = vunpack.c.h.b16 %v5295
  %v5363 = vunpack.c.l.b16 %v5296
  %v5364 = vunpack.c.l.b16 %v5297
  %v5365 = vunpack.c.h.b16 %v5297
  %v5366 = vunpack.c.l.b16 %v5298
  %v5367 = vunpack.c.l.b16 %v5299
  %v5368 = vunpack.c.h.b16 %v5299
  %v5369 = vunpack.c.l.b16 %v5300
  %v5370 = vunpack.c.l.b16 %v5301
  %v5371 = vunpack.c.h.b16 %v5301
  %v5372 = vunpack.c.l.b16 %v5302
  %v5373 = vunpack.c.l.b16 %v5303
  %v5374 = vunpack.c.h.b16 %v5303
  %v5375 = vunpack.c.l.b16 %v5304
  %v5376 = vunpack.c.l.b16 %v5305
  %v5377 = vunpack.c.h.b16 %v5305
  %v5378 = vunpack.c.l.b16 %v5306
  %v5379 = vunpack.c.l.b16 %v5307
  %v5380 = vunpack.c.h.b16 %v5307
  %v5381 = vunpack.c.l.b16 %v5308
  %v5382 = vunpack.c.l.b16 %v5309
  %v5383 = vunpack.c.h.b16 %v5309
  %v5384 = vunpack.c.l.b16 %v5310
  %v5385 = vunpack.c.l.b16 %v5311
  %v5386 = vunpack.c.h.b16 %v5311
  %v5387 = vunpack.c.l.b16 %v5312
  %v5388 = vunpack.c.l.b16 %v5313
  %v5389 = vunpack.c.h.b16 %v5313
  %v5390 = vunpack.c.l.b16 %v5314
  %v5391 = vunpack.c.l.b16 %v5315
  %v5392 = vunpack.c.h.b16 %v5315
  %v5393 = vunpack.c.l.b16 %v5316
  %v5394 = vunpack.c.l.b16 %v5317
  %v5395 = vunpack.c.h.b16 %v5317
  %v5396 = vunpack.c.l.b16 %v5318
  %v5397 = vunpack.c.l.b16 %v5319
  %v5398 = vunpack.c.h.b16 %v5319
  %v5399 = vunpack.c.l.b16 %v5320
  %v5400 = vunpack.c.l.b16 %v5321
  %v5401 = vunpack.c.h.b16 %v5321
  %v5402 = vunpack.c.l.b16 %v5322
  %v5403 = vpack.c.b16 %v5358, %v5355
  %v5404 = vpack.c.b16 %v5359, %v5356
  %v5405 = vpack.c.b16 %v5360, %v5357
  %v5406 = vpack.c.b16 %v5364, %v5361
  %v5407 = vpack.c.b16 %v5365, %v5362
  %v5408 = vpack.c.b16 %v5366, %v5363
  %v5409 = vpack.c.b16 %v5370, %v5367
  %v5410 = vpack.c.b16 %v5371, %v5368
  %v5411 = vpack.c.b16 %v5372, %v5369
  %v5412 = vpack.c.b16 %v5376, %v5373
  %v5413 = vpack.c.b16 %v5377, %v5374
  %v5414 = vpack.c.b16 %v5378, %v5375
  %v5415 = vpack.c.b16 %v5382, %v5379
  %v5416 = vpack.c.b16 %v5383, %v5380
  %v5417 = vpack.c.b16 %v5384, %v5381
  %v5418 = vpack.c.b16 %v5388, %v5385
  %v5419 = vpack.c.b16 %v5389, %v5386
  %v5420 = vpack.c.b16 %v5390, %v5387
  %v5421 = vpack.c.b16 %v5394, %v5391
  %v5422 = vpack.c.b16 %v5395, %v5392
  %v5423 = vpack.c.b16 %v5396, %v5393
  %v5424 = vpack.c.b16 %v5400, %v5397
  %v5425 = vpack.c.b16 %v5401, %v5398
  %v5426 = vpack.c.b16 %v5402, %v5399
  %5451 = vmatprep.subr.bf16.mxu0 %v5404
  %5452 = vmatpush1.bf16.msra.mxu0 %v5403
  %5453 = vmatprep.subr.bf16.mxu0 %v5407
  %5454 = vmatpush1.bf16.msra.mxu0 %v5406
  %5455 = vmatprep.subr.bf16.mxu0 %v5410
  %5456 = vmatpush1.bf16.msra.mxu0 %v5409
  %5457 = vmatprep.subr.bf16.mxu0 %v5413
  %5458 = vmatpush1.bf16.msra.mxu0 %v5412
  %5459 = vmatprep.subr.bf16.mxu0 %v5416
  %5460 = vmatpush1.bf16.msra.mxu0 %v5415
  %5461 = vmatprep.subr.bf16.mxu0 %v5419
  %5462 = vmatpush1.bf16.msra.mxu0 %v5418
  %5463 = vmatprep.subr.bf16.mxu0 %v5422
  %5464 = vmatpush1.bf16.msra.mxu0 %v5421
  %5465 = vmatprep.subr.bf16.mxu0 %v5425
  %5466 = vmatpush1.bf16.msra.mxu0 %v5424
  %5467 = vmatprep.subr.bf16.mxu0 0
  %5468 = vmatpush1.bf16.msra.mxu0 0
  %5469 = vmatprep.subr.bf16.mxu0 0
  %5470 = vmatpush1.bf16.msra.mxu0 0
  %5471 = vmatprep.subr.bf16.mxu0 0
  %5472 = vmatpush1.bf16.msra.mxu0 0
  %5473 = vmatprep.subr.bf16.mxu0 0
  %5474 = vmatpush1.bf16.msra.mxu0 0
  %5475 = vmatprep.subr.bf16.mxu0 0
  %5476 = vmatpush1.bf16.msra.mxu0 0
  %5477 = vmatprep.subr.bf16.mxu0 0
  %5478 = vmatpush1.bf16.msra.mxu0 0
  %5479 = vmatprep.subr.bf16.mxu0 0
  %5480 = vmatpush1.bf16.msra.mxu0 0
  %5481 = vmatprep.subr.bf16.mxu0 0
  %5482 = vmatpush1.bf16.msra.mxu0 0
  %5483 = vmatprep.mubr.bf16.mxu0 0
  %5484 = vmatmul.mubr.bf16.gmra.mrb[0].mxu0 %v5290
  %v5485 = vpop.f32.mrb[0].mxu0
  %v5486 = vadd.f32 %v203, %v5485
  %v5487 = vpop.f32.mrb[0].mxu0
  %v5488 = vadd.f32 %v207, %v5487
  %v5489 = vpop.f32.mrb[0].mxu0
  %v5490 = vpop.f32.mrb[0].mxu0
  %5491 = vdwg.mxu0
  %5492 = vmatprep.subr.bf16.mxu0 0
  %5493 = vmatpush1.bf16.msra.mxu0 %v5405
  %5494 = vmatprep.subr.bf16.mxu0 0
  %5495 = vmatpush1.bf16.msra.mxu0 %v5408
  %5496 = vmatprep.subr.bf16.mxu0 0
  %5497 = vmatpush1.bf16.msra.mxu0 %v5411
  %5498 = vmatprep.subr.bf16.mxu0 0
  %5499 = vmatpush1.bf16.msra.mxu0 %v5414
  %5500 = vmatprep.subr.bf16.mxu0 0
  %5501 = vmatpush1.bf16.msra.mxu0 %v5417
  %5502 = vmatprep.subr.bf16.mxu0 0
  %5503 = vmatpush1.bf16.msra.mxu0 %v5420
  %5504 = vmatprep.subr.bf16.mxu0 0
  %5505 = vmatpush1.bf16.msra.mxu0 %v5423
  %5506 = vmatprep.subr.bf16.mxu0 0
  %5507 = vmatpush1.bf16.msra.mxu0 %v5426
  %5508 = vmatprep.subr.bf16.mxu0 0
  %5509 = vmatpush1.bf16.msra.mxu0 0
  %5510 = vmatprep.subr.bf16.mxu0 0
  %5511 = vmatpush1.bf16.msra.mxu0 0
  %5512 = vmatprep.subr.bf16.mxu0 0
  %5513 = vmatpush1.bf16.msra.mxu0 0
  %5514 = vmatprep.subr.bf16.mxu0 0
  %5515 = vmatpush1.bf16.msra.mxu0 0
  %5516 = vmatprep.subr.bf16.mxu0 0
  %5517 = vmatpush1.bf16.msra.mxu0 0
  %5518 = vmatprep.subr.bf16.mxu0 0
  %5519 = vmatpush1.bf16.msra.mxu0 0
  %5520 = vmatprep.subr.bf16.mxu0 0
  %5521 = vmatpush1.bf16.msra.mxu0 0
  %5522 = vmatprep.subr.bf16.mxu0 0
  %5523 = vmatpush1.bf16.msra.mxu0 0
  %5524 = vmatprep.mubr.bf16.mxu0 0
  %5525 = vmatmul.mubr.bf16.gmra.mrb[0].mxu0 %v5290
  %v5526 = vpop.f32.mrb[0].mxu0
  %v5527 = vadd.f32 %v211, %v5526
  %v5528 = vpop.f32.mrb[0].mxu0
  %v5529 = vpop.f32.mrb[0].mxu0
  %v5530 = vpop.f32.mrb[0].mxu0
  %5531 = vdwg.mxu0
  %v5532 = vld [vmem:[%s4] sm:$0xff]
  %v5533 = vld [vmem:[%s4 + $0x8] sm:$0xf]
  %v5534 = vld [vmem:[%s4 + $0xc] sm:$0xff]
  %v5535 = vld [vmem:[%s4 + $0x14] sm:$0xf]
  %v5536 = vld [vmem:[%s4 + $0x18] sm:$0xff]
  %v5537 = vld [vmem:[%s4 + $0x20] sm:$0xf]
  %v5538 = vld [vmem:[%s4 + $0x24] sm:$0xff]
  %v5539 = vld [vmem:[%s4 + $0x2c] sm:$0xf]
  %v5540 = vld [vmem:[%s4 + $0x30] sm:$0xff]
  %v5541 = vld [vmem:[%s4 + $0x38] sm:$0xf]
  %v5542 = vld [vmem:[%s4 + $0x3c] sm:$0xff]
  %v5543 = vld [vmem:[%s4 + $0x44] sm:$0xf]
  %v5544 = vld [vmem:[%s4 + $0x48] sm:$0xff]
  %v5545 = vld [vmem:[%s4 + $0x50] sm:$0xf]
  %v5546 = vld [vmem:[%s4 + $0x54] sm:$0xff]
  %v5547 = vld [vmem:[%s4 + $0x5c] sm:$0xf]
  %v5548 = vld [vmem:[%s4 + $0x60] sm:$0xff]
  %v5549 = vld [vmem:[%s4 + $0x68] sm:$0xf]
  %v5550 = vld [vmem:[%s4 + $0x6c] sm:$0xff]
  %v5551 = vld [vmem:[%s4 + $0x74] sm:$0xf]
  %v5552 = vld [vmem:[%s4 + $0x78] sm:$0xff]
  %v5553 = vld [vmem:[%s4 + $0x80] sm:$0xf]
  %v5554 = vld [vmem:[%s4 + $0x84] sm:$0xff]
  %v5555 = vld [vmem:[%s4 + $0x8c] sm:$0xf]
  %v5556 = vld [vmem:[%s4 + $0x90] sm:$0xff]
  %v5557 = vld [vmem:[%s4 + $0x98] sm:$0xf]
  %v5558 = vld [vmem:[%s4 + $0x9c] sm:$0xff]
  %v5559 = vld [vmem:[%s4 + $0xa4] sm:$0xf]
  %v5560 = vld [vmem:[%s4 + $0xa8] sm:$0xff]
  %v5561 = vld [vmem:[%s4 + $0xb0] sm:$0xf]
  %v5562 = vld [vmem:[%s4 + $0xb4] sm:$0xff]
  %v5563 = vld [vmem:[%s4 + $0xbc] sm:$0xf]
  %v5596 = vunpack.c.l.b16 %v5532
  %v5597 = vunpack.c.h.b16 %v5532
  %v5598 = vunpack.c.l.b16 %v5533
  %v5599 = vunpack.c.l.b16 %v5534
  %v5600 = vunpack.c.h.b16 %v5534
  %v5601 = vunpack.c.l.b16 %v5535
  %v5602 = vunpack.c.l.b16 %v5536
  %v5603 = vunpack.c.h.b16 %v5536
  %v5604 = vunpack.c.l.b16 %v5537
  %v5605 = vunpack.c.l.b16 %v5538
  %v5606 = vunpack.c.h.b16 %v5538
  %v5607 = vunpack.c.l.b16 %v5539
  %v5608 = vunpack.c.l.b16 %v5540
  %v5609 = vunpack.c.h.b16 %v5540
  %v5610 = vunpack.c.l.b16 %v5541
  %v5611 = vunpack.c.l.b16 %v5542
  %v5612 = vunpack.c.h.b16 %v5542
  %v5613 = vunpack.c.l.b16 %v5543
  %v5614 = vunpack.c.l.b16 %v5544
  %v5615 = vunpack.c.h.b16 %v5544
  %v5616 = vunpack.c.l.b16 %v5545
  %v5617 = vunpack.c.l.b16 %v5546
  %v5618 = vunpack.c.h.b16 %v5546
  %v5619 = vunpack.c.l.b16 %v5547
  %v5620 = vunpack.c.l.b16 %v5548
  %v5621 = vunpack.c.h.b16 %v5548
  %v5622 = vunpack.c.l.b16 %v5549
  %v5623 = vunpack.c.l.b16 %v5550
  %v5624 = vunpack.c.h.b16 %v5550
  %v5625 = vunpack.c.l.b16 %v5551
  %v5626 = vunpack.c.l.b16 %v5552
  %v5627 = vunpack.c.h.b16 %v5552
  %v5628 = vunpack.c.l.b16 %v5553
  %v5629 = vunpack.c.l.b16 %v5554
  %v5630 = vunpack.c.h.b16 %v5554
  %v5631 = vunpack.c.l.b16 %v5555
  %v5632 = vunpack.c.l.b16 %v5556
  %v5633 = vunpack.c.h.b16 %v5556
  %v5634 = vunpack.c.l.b16 %v5557
  %v5635 = vunpack.c.l.b16 %v5558
  %v5636 = vunpack.c.h.b16 %v5558
  %v5637 = vunpack.c.l.b16 %v5559
  %v5638 = vunpack.c.l.b16 %v5560
  %v5639 = vunpack.c.h.b16 %v5560
  %v5640 = vunpack.c.l.b16 %v5561
  %v5641 = vunpack.c.l.b16 %v5562
  %v5642 = vunpack.c.h.b16 %v5562
  %v5643 = vunpack.c.l.b16 %v5563
  %v5644 = vpack.c.b16 %v5599, %v5596
  %v5645 = vpack.c.b16 %v5600, %v5597
  %v5646 = vpack.c.b16 %v5601, %v5598
  %v5647 = vpack.c.b16 %v5605, %v5602
  %v5648 = vpack.c.b16 %v5606, %v5603
  %v5649 = vpack.c.b16 %v5607, %v5604
  %v5650 = vpack.c.b16 %v5611, %v5608
  %v5651 = vpack.c.b16 %v5612, %v5609
  %v5652 = vpack.c.b16 %v5613, %v5610
  %v5653 = vpack.c.b16 %v5617, %v5614
  %v5654 = vpack.c.b16 %v5618, %v5615
  %v5655 = vpack.c.b16 %v5619, %v5616
  %v5656 = vpack.c.b16 %v5623, %v5620
  %v5657 = vpack.c.b16 %v5624, %v5621
  %v5658 = vpack.c.b16 %v5625, %v5622
  %v5659 = vpack.c.b16 %v5629, %v5626
  %v5660 = vpack.c.b16 %v5630, %v5627
  %v5661 = vpack.c.b16 %v5631, %v5628
  %v5662 = vpack.c.b16 %v5635, %v5632
  %v5663 = vpack.c.b16 %v5636, %v5633
  %v5664 = vpack.c.b16 %v5637, %v5634
  %v5665 = vpack.c.b16 %v5641, %v5638
  %v5666 = vpack.c.b16 %v5642, %v5639
  %v5667 = vpack.c.b16 %v5643, %v5640
  %5692 = vmatprep.subr.bf16.mxu0 %v5645
  %5693 = vmatpush1.bf16.msra.mxu0 %v5644
  %5694 = vmatprep.subr.bf16.mxu0 %v5648
  %5695 = vmatpush1.bf16.msra.mxu0 %v5647
  %5696 = vmatprep.subr.bf16.mxu0 %v5651
  %5697 = vmatpush1.bf16.msra.mxu0 %v5650
  %5698 = vmatprep.subr.bf16.mxu0 %v5654
  %5699 = vmatpush1.bf16.msra.mxu0 %v5653
  %5700 = vmatprep.subr.bf16.mxu0 %v5657
  %5701 = vmatpush1.bf16.msra.mxu0 %v5656
  %5702 = vmatprep.subr.bf16.mxu0 %v5660
  %5703 = vmatpush1.bf16.msra.mxu0 %v5659
  %5704 = vmatprep.subr.bf16.mxu0 %v5663
  %5705 = vmatpush1.bf16.msra.mxu0 %v5662
  %5706 = vmatprep.subr.bf16.mxu0 %v5666
  %5707 = vmatpush1.bf16.msra.mxu0 %v5665
  %5708 = vmatprep.subr.bf16.mxu0 0
  %5709 = vmatpush1.bf16.msra.mxu0 0
  %5710 = vmatprep.subr.bf16.mxu0 0
  %5711 = vmatpush1.bf16.msra.mxu0 0
  %5712 = vmatprep.subr.bf16.mxu0 0
  %5713 = vmatpush1.bf16.msra.mxu0 0
  %5714 = vmatprep.subr.bf16.mxu0 0
  %5715 = vmatpush1.bf16.msra.mxu0 0
  %5716 = vmatprep.subr.bf16.mxu0 0
  %5717 = vmatpush1.bf16.msra.mxu0 0
  %5718 = vmatprep.subr.bf16.mxu0 0
  %5719 = vmatpush1.bf16.msra.mxu0 0
  %5720 = vmatprep.subr.bf16.mxu0 0
  %5721 = vmatpush1.bf16.msra.mxu0 0
  %5722 = vmatprep.subr.bf16.mxu0 0
  %5723 = vmatpush1.bf16.msra.mxu0 0
  %5724 = vmatprep.mubr.bf16.mxu0 0
  %5725 = vmatmul.mubr.bf16.gmra.mrb[0].mxu0 %v5067
  %v5726 = vpop.f32.mrb[0].mxu0
  %v5727 = vadd.f32 0.0, %v5726
  %v5728 = vpop.f32.mrb[0].mxu0
  %v5729 = vadd.f32 0.0, %v5728
  %v5730 = vpop.f32.mrb[0].mxu0
  %v5731 = vpop.f32.mrb[0].mxu0
  %5732 = vdwg.mxu0
  %5733 = vmatprep.subr.bf16.mxu0 0
  %5734 = vmatpush1.bf16.msra.mxu0 %v5646
  %5735 = vmatprep.subr.bf16.mxu0 0
  %5736 = vmatpush1.bf16.msra.mxu0 %v5649
  %5737 = vmatprep.subr.bf16.mxu0 0
  %5738 = vmatpush1.bf16.msra.mxu0 %v5652
  %5739 = vmatprep.subr.bf16.mxu0 0
  %5740 = vmatpush1.bf16.msra.mxu0 %v5655
  %5741 = vmatprep.subr.bf16.mxu0 0
  %5742 = vmatpush1.bf16.msra.mxu0 %v5658
  %5743 = vmatprep.subr.bf16.mxu0 0
  %5744 = vmatpush1.bf16.msra.mxu0 %v5661
  %5745 = vmatprep.subr.bf16.mxu0 0
  %5746 = vmatpush1.bf16.msra.mxu0 %v5664
  %5747 = vmatprep.subr.bf16.mxu0 0
  %5748 = vmatpush1.bf16.msra.mxu0 %v5667
  %5749 = vmatprep.subr.bf16.mxu0 0
  %5750 = vmatpush1.bf16.msra.mxu0 0
  %5751 = vmatprep.subr.bf16.mxu0 0
  %5752 = vmatpush1.bf16.msra.mxu0 0
  %5753 = vmatprep.subr.bf16.mxu0 0
  %5754 = vmatpush1.bf16.msra.mxu0 0
  %5755 = vmatprep.subr.bf16.mxu0 0
  %5756 = vmatpush1.bf16.msra.mxu0 0
  %5757 = vmatprep.subr.bf16.mxu0 0
  %5758 = vmatpush1.bf16.msra.mxu0 0
  %5759 = vmatprep.subr.bf16.mxu0 0
  %5760 = vmatpush1.bf16.msra.mxu0 0
  %5761 = vmatprep.subr.bf16.mxu0 0
  %5762 = vmatpush1.bf16.msra.mxu0 0
  %5763 = vmatprep.subr.bf16.mxu0 0
  %5764 = vmatpush1.bf16.msra.mxu0 0
  %5765 = vmatprep.mubr.bf16.mxu0 0
  %5766 = vmatmul.mubr.bf16.gmra.mrb[0].mxu0 %v5067
  %v5767 = vpop.f32.mrb[0].mxu0
  %v5768 = vadd.f32 0.0, %v5767
  %v5769 = vpop.f32.mrb[0].mxu0
  %v5770 = vpop.f32.mrb[0].mxu0
  %v5771 = vpop.f32.mrb[0].mxu0
  %5772 = vdwg.mxu0
  %v5773 = vadd.f32 %v5486, %v5727
  %v5774 = vxor.u32 %v5773, 2147483648
  %v5775 = vmul.f32 %v5774, 1.442695
  %v5776 = vpow.pop %v5775
  %v5777 = vadd.f32 %v5776, 1.0
  %v5778 = vrcp.pop %v5777
  %v5779 = vmul.f32 1.0, %v5778
  %v5780 = vadd.f32 %v5488, %v5729
  %v5781 = vxor.u32 %v5780, 2147483648
  %v5782 = vmul.f32 %v5781, 1.442695
  %v5783 = vpow.pop %v5782
  %v5784 = vadd.f32 %v5783, 1.0
  %v5785 = vrcp.pop %v5784
  %v5786 = vmul.f32 1.0, %v5785
  %v5787 = vadd.f32 %v5768, %v684
  %v5788 = vmul.f32 %v5779, %v5787
  %v5789 = vadd.f32 %v5527, %v5788
  %v5790 = vtanh.pop %v5789
  %v5791 = vsub.f32 1.0, %v5786
  %v5792 = vmul.f32 %v5791, %v5790
  %v5793 = vmul.f32 %v5786, %v5066
  %v5794 = vadd.f32 %v5792, %v5793
  %v5795 = vpack.c.bf16 %v5794, %v5794
  %v5796 = vld [vmem:[%s7] sm:$0xf]
  %v5797 = vld [vmem:[%s7 + $0x4] sm:$0xf]
  %v5798 = vld [vmem:[%s7 + $0x8] sm:$0xf]
  %v5799 = vld [vmem:[%s7 + $0xc] sm:$0xf]
  %v5800 = vld [vmem:[%s7 + $0x10] sm:$0xf]
  %v5801 = vld [vmem:[%s7 + $0x14] sm:$0xf]
  %v5802 = vld [vmem:[%s7 + $0x18] sm:$0xf]
  %v5803 = vld [vmem:[%s7 + $0x1c] sm:$0xf]
  %v5804 = vld [vmem:[%s7 + $0x20] sm:$0xf]
  %v5805 = vld [vmem:[%s7 + $0x24] sm:$0xf]
  %v5806 = vld [vmem:[%s7 + $0x28] sm:$0xf]
  %v5807 = vld [vmem:[%s7 + $0x2c] sm:$0xf]
  %v5808 = vld [vmem:[%s7 + $0x30] sm:$0xf]
  %v5809 = vld [vmem:[%s7 + $0x34] sm:$0xf]
  %v5810 = vld [vmem:[%s7 + $0x38] sm:$0xf]
  %v5811 = vld [vmem:[%s7 + $0x3c] sm:$0xf]
  %v5828 = vunpack.c.l.b16 %v5796
  %v5829 = vunpack.c.l.b16 %v5797
  %v5830 = vunpack.c.l.b16 %v5798
  %v5831 = vunpack.c.l.b16 %v5799
  %v5832 = vunpack.c.l.b16 %v5800
  %v5833 = vunpack.c.l.b16 %v5801
  %v5834 = vunpack.c.l.b16 %v5802
  %v5835 = vunpack.c.l.b16 %v5803
  %v5836 = vunpack.c.l.b16 %v5804
  %v5837 = vunpack.c.l.b16 %v5805
  %v5838 = vunpack.c.l.b16 %v5806
  %v5839 = vunpack.c.l.b16 %v5807
  %v5840 = vunpack.c.l.b16 %v5808
  %v5841 = vunpack.c.l.b16 %v5809
  %v5842 = vunpack.c.l.b16 %v5810
  %v5843 = vunpack.c.l.b16 %v5811
  %v5844 = vpack.c.b16 %v5829, %v5828
  %v5845 = vpack.c.b16 %v5831, %v5830
  %v5846 = vpack.c.b16 %v5833, %v5832
  %v5847 = vpack.c.b16 %v5835, %v5834
  %v5848 = vpack.c.b16 %v5837, %v5836
  %v5849 = vpack.c.b16 %v5839, %v5838
  %v5850 = vpack.c.b16 %v5841, %v5840
  %v5851 = vpack.c.b16 %v5843, %v5842
  %5860 = vmatprep.subr.bf16.mxu0 0
  %5861 = vmatpush1.bf16.msra.mxu0 %v5844
  %5862 = vmatprep.subr.bf16.mxu0 0
  %5863 = vmatpush1.bf16.msra.mxu0 %v5845
  %5864 = vmatprep.subr.bf16.mxu0 0
  %5865 = vmatpush1.bf16.msra.mxu0 %v5846
  %5866 = vmatprep.subr.bf16.mxu0 0
  %5867 = vmatpush1.bf16.msra.mxu0 %v5847
  %5868 = vmatprep.subr.bf16.mxu0 0
  %5869 = vmatpush1.bf16.msra.mxu0 %v5848
  %5870 = vmatprep.subr.bf16.mxu0 0
  %5871 = vmatpush1.bf16.msra.mxu0 %v5849
  %5872 = vmatprep.subr.bf16.mxu0 0
  %5873 = vmatpush1.bf16.msra.mxu0 %v5850
  %5874 = vmatprep.subr.bf16.mxu0 0
  %5875 = vmatpush1.bf16.msra.mxu0 %v5851
  %5876 = vmatprep.subr.bf16.mxu0 0
  %5877 = vmatpush1.bf16.msra.mxu0 0
  %5878 = vmatprep.subr.bf16.mxu0 0
  %5879 = vmatpush1.bf16.msra.mxu0 0
  %5880 = vmatprep.subr.bf16.mxu0 0
  %5881 = vmatpush1.bf16.msra.mxu0 0
  %5882 = vmatprep.subr.bf16.mxu0 0
  %5883 = vmatpush1.bf16.msra.mxu0 0
  %5884 = vmatprep.subr.bf16.mxu0 0
  %5885 = vmatpush1.bf16.msra.mxu0 0
  %5886 = vmatprep.subr.bf16.mxu0 0
  %5887 = vmatpush1.bf16.msra.mxu0 0
  %5888 = vmatprep.subr.bf16.mxu0 0
  %5889 = vmatpush1.bf16.msra.mxu0 0
  %5890 = vmatprep.subr.bf16.mxu0 0
  %5891 = vmatpush1.bf16.msra.mxu0 0
  %5892 = vmatprep.mubr.bf16.mxu0 0
  %5893 = vmatmul.mubr.bf16.gmra.mrb[0].mxu0 %v5795
  %v5894 = vpop.f32.mrb[0].mxu0
  %v5895 = vadd.f32 %v715, %v5894
  %v5896 = vpop.f32.mrb[0].mxu0
  %v5897 = vpop.f32.mrb[0].mxu0
  %v5898 = vpop.f32.mrb[0].mxu0
  %5899 = vdwg.mxu0
  %v5900 = vpack.c.bf16 %v5895, %v5895
  %s5901 = scalar_lea.vmem %s9, 28
  %5902 = vst [vmem:[%s5901] sm:$0xf] %v5900
  %5903 = vmax.xlane.f32.xlu0 %v5895
  %v5904 = vpop.xlane.xlu0 %5903
  %v5905 = vsub.f32 %v5895, %v5904
  %v5906 = vmul.f32 %v5905, 1.442695
  %v5907 = vpow.pop %v5906
  %5908 = vadd.xlane.f32.xlu0 %v5907
  %v5909 = vpop.xlane.xlu0 %5908
  %v5910 = vrcp.pop %v5909
  %v5911 = vpack.c.bf16 %v5907, %v5907
  %5912 = vst [vmem:[#allocation2] sm:$0xff] %v5794
  %5913 = vst [vmem:[#allocation3] sm:$0xf] %v5911
  %vm5914 = vcmask 7168
  %5915 = vst.msk [vmem:[#allocation4] sm:$0xff] %vm5914, %v5910
  // Predicated region
  $region42: #{rnn_decoder.1} parent=0 // pred_check
    _
  $region43: #{rnn_decoder.1} parent=0 // pred_check_branch
    %5917 = sbr.rel (0) target = $region45
  $region44: #{rnn_decoder.1} parent=0 // pred_region
    _
  $region45: #{rnn_decoder.1} parent=0 // pred_fallthru
    _
  // Predicated region
  $region46: #{rnn_decoder.1} parent=0 // pred_check
    _
  $region47: #{rnn_decoder.1} parent=0 // pred_check_branch
    %5919 = sbr.rel (0) target = $region49
  $region48: #{rnn_decoder.1} parent=0 // pred_region
    _
  $region49: #{rnn_decoder.1} parent=0 // pred_fallthru
    _

</llo_original>
